<compile_context>
chip_gen: v7x
topology: tpu7x:2x2x1
jax: 0.10.0
libtpu: 0.0.40
codegen_flags: <defaults>
</compile_context>

<pallas_src>
import numpy as np
import jax
import jax.numpy as jnp
from jax import lax
from jax.experimental import pallas as pl
from jax.experimental.pallas import tpu as pltpu

F32_EPS = float(np.finfo(np.float32).eps)   # torch.finfo(torch.float).eps
LEAKY_SLOPE = 0.2
BN_EPS = 1e-5
BN_SCALE = float(1.0 / np.sqrt(1.0 + BN_EPS))
CPAD = 896                                   # 769 padded up to 7*128 lanes


# ----------------------------------------------------------------------------
# ERB filter bank (numpy, deterministic) -- mirrors EquivalentRectangularBandwidth
# (get_bands returns `cos_filts`, shape (nfreqs, total_erb_bands))
# ----------------------------------------------------------------------------
def erb_filter_bank(nfreqs=769, total_erb_bands=128, low_freq=20.0, max_freq=24000.0):
    EarQ, minBW = 9.265, 24.7

    def freq2erb(f):
        return EarQ * np.log(1.0 + f / (minBW * EarQ))

    def erb2freq(e):
        return (np.exp(e / EarQ) - 1.0) * minBW * EarQ

    freqs = np.linspace(0, max_freq, nfreqs)
    erb_lims = np.linspace(freq2erb(low_freq), freq2erb(max_freq), total_erb_bands + 2)
    cutoffs = erb2freq(erb_lims)
    cos_filts = np.zeros([nfreqs, total_erb_bands])
    for i in range(total_erb_bands):
        lo, hi = cutoffs[i], cutoffs[i + 2]
        li = int(np.min(np.where(freqs > lo)[0]))
        hi_i = int(np.max(np.where(freqs < hi)[0]))
        avg = (freq2erb(lo) + freq2erb(hi)) / 2.0
        rnge = freq2erb(hi) - freq2erb(lo)
        cos_filts[li:hi_i + 1, i] = np.cos(
            (freq2erb(freqs[li:hi_i + 1]) - avg) / rnge * np.pi)
    return cos_filts  # (769, 128)


# ----------------------------------------------------------------------------
# Kernel 1: causal Conv1d as K matmuls over tap-stacked rows (M = B*T),
#           bias folded into the accumulator init, optional LeakyReLU,
#           optional fused decoder dual-mask / gating epilogue.
# ----------------------------------------------------------------------------
def _make_conv_kernel(K, apply_act, fuse_mask):
    def compute(taps_ref, w_ref, b_ref):
        # accumulator starts from the (broadcast) bias -> no extra zeros+add pass
        acc = b_ref[...] + jnp.dot(taps_ref[0], w_ref[0],
                                   preferred_element_type=jnp.float32)
        for k in range(1, K):              # K is 1 or 3: static unrolled taps
            acc = acc + jnp.dot(taps_ref[k], w_ref[k],
                                preferred_element_type=jnp.float32)
        if apply_act:
            acc = jnp.where(acc >= 0, acc, LEAKY_SLOPE * acc)
        return acc

    if fuse_mask:
        def kernel(taps_ref, w_ref, b_ref, x0_ref, mp_ref, o_ref):
            acc = compute(taps_ref, w_ref, b_ref)       # de_out conv output
            x0 = x0_ref[...]                             # original spectrum x
            m = acc + x0
            a = jax.nn.sigmoid(mp_ref[0] * m + mp_ref[1])     # mask1: 1x1 Conv2d + Sigmoid
            t = jnp.tanh(mp_ref[2] * m + mp_ref[3])           # mask2: 1x1 Conv2d + Tanh
            g = jax.nn.sigmoid(mp_ref[4] * (a * t) + mp_ref[5])  # maskconv + gate
            o_ref[...] = acc * g + x0                    # out_full + residual x_list[0]
    else:
        def kernel(taps_ref, w_ref, b_ref, o_ref):
            o_ref[...] = compute(taps_ref, w_ref, b_ref)
    return kernel


def _pick_row_tile(M, cap=1024):
    # At toy sizes the whole M fits in one block; for long sequences tile the
    # row dim so double-buffered blocks stay under VMEM (v7x has half the
    # VMEM of v5e/v6e).
    if M <= cap:
        return M
    t = cap - (cap % 8)
    while t >= 8:
        if M % t == 0:
            return t
        t -= 8
    return M


def causal_conv1d(x, wk, b2, *, apply_act=True, residual=None,
                  mask_x0=None, mask_params=None):
    """x / residual: (B, T, Cin) f32. wk: (K, Cin, Cout) bf16 (prepared).
    b2: (1, Cout) f32. Returns (B, T, Cout) f32.
    If mask_x0/mask_params are given, the decoder dual-mask gating epilogue is
    fused into this kernel (mask_x0: (B, T, Cout) f32)."""
    B, T, Cin = x.shape
    K, _, Cout = wk.shape
    if residual is not None:
        x = x + residual                              # skip add fused into the
    # causal left pad + tap stacking ("im2col"): one small XLA fusion; gives
    # the kernel K dense (B*T, Cin) operands so the MXU M dim is B*T, not T.
    xp = jnp.pad(x, ((0, 0), (K - 1, 0), (0, 0)))
    taps = jnp.stack([xp[:, k:k + T, :] for k in range(K)], axis=0)   # (K,B,T,Cin)
    M = B * T
    taps = taps.reshape(K, M, Cin).astype(jnp.bfloat16)

    tile_m = _pick_row_tile(M)
    grid = (M // tile_m,)
    in_specs = [
        pl.BlockSpec((K, tile_m, Cin), lambda i: (0, i, 0)),
        pl.BlockSpec((K, Cin, Cout), lambda i: (0, 0, 0)),
        pl.BlockSpec((1, Cout), lambda i: (0, 0)),
    ]
    args = [taps, wk, b2]
    fuse_mask = mask_x0 is not None
    if fuse_mask:
        in_specs.append(pl.BlockSpec((tile_m, Cout), lambda i: (i, 0)))
        in_specs.append(pl.BlockSpec(memory_space=pltpu.MemorySpace.SMEM))
        args += [mask_x0.reshape(M, Cout).astype(jnp.float32), mask_params]

    out = pl.pallas_call(
        _make_conv_kernel(K, apply_act, fuse_mask),
        out_shape=jax.ShapeDtypeStruct((M, Cout), jnp.float32),
        grid=grid,
        in_specs=in_specs,
        out_specs=pl.BlockSpec((tile_m, Cout), lambda i: (i, 0)),
        compiler_params=pltpu.CompilerParams(dimension_semantics=("parallel",)),
    )(*args)
    return out.reshape(B, T, Cout)


# ----------------------------------------------------------------------------
# Kernel 2: fused 2-layer causal GRU (PyTorch gate order r,z,n) + BN scales
#           + the decoder's first skip add (+ e4).
# State / gates live as a single lane-dense (1, P) row with P = B*H (=128):
# weights are gate-separate and batch-block-diagonal, so the recurrence has
# no cross-lane slicing and every per-step store is a full 128-lane row.
# The input-side matmuls gi = x @ W_ih + b_ih are hoisted out of the loop.
# ----------------------------------------------------------------------------
def _make_gru2_kernel(out_scale):
    def kernel(x_ref, wih_ref, whh_ref, bih_ref, bhh_ref, o_ref,
               gr_ref, gz_ref, gn_ref, h1_ref):
        T, P = x_ref.shape

        def hoist_gi(layer, inp):
            # whole-sequence input-side matmuls (M = T), off the serial path
            gr_ref[...] = jnp.dot(inp, wih_ref[layer, 0],
                                  preferred_element_type=jnp.float32) + bih_ref[layer, 0]
            gz_ref[...] = jnp.dot(inp, wih_ref[layer, 1],
                                  preferred_element_type=jnp.float32) + bih_ref[layer, 1]
            gn_ref[...] = jnp.dot(inp, wih_ref[layer, 2],
                                  preferred_element_type=jnp.float32) + bih_ref[layer, 2]

        def run_layer(layer, write_out):
            def step(t, h):                                  # h: (1, P)
                ghr = jnp.dot(h, whh_ref[layer, 0],
                              preferred_element_type=jnp.float32) + bhh_ref[layer, 0]
                ghz = jnp.dot(h, whh_ref[layer, 1],
                              preferred_element_type=jnp.float32) + bhh_ref[layer, 1]
                ghn = jnp.dot(h, whh_ref[layer, 2],
                              preferred_element_type=jnp.float32) + bhh_ref[layer, 2]
                r = jax.nn.sigmoid(gr_ref[pl.ds(t, 1), :] + ghr)
                z = jax.nn.sigmoid(gz_ref[pl.ds(t, 1), :] + ghz)
                n = jnp.tanh(gn_ref[pl.ds(t, 1), :] + r * ghn)
                h_new = (1.0 - z) * n + z * h
                write_out(t, h_new)
                return h_new

            h0 = jnp.zeros((1, P), jnp.float32)
            lax.fori_loop(0, T, step, h0)

        # ---- layer 1 (rnn_list1) ; norm1 folded into the stored output ----
        hoist_gi(0, x_ref[...])

        def write1(t, h_new):
            h1_ref[pl.ds(t, 1), :] = h_new * out_scale

        run_layer(0, write1)

        # ---- layer 2 (rnn_list2) ; norm2 + decoder `+ e4` residual fused ----
        hoist_gi(1, h1_ref[...])

        def write2(t, h_new):
            o_ref[pl.ds(t, 1), :] = h_new * out_scale + x_ref[pl.ds(t, 1), :]

        run_layer(1, write2)
    return kernel


def gru_stack(x_bth, gru_prep):
    """x_bth: (B, T, H) f32. Runs both GRU layers + eval-BN scales and adds the
    e4 residual. Returns (B, T, H) f32."""
    B, T, H = x_bth.shape
    P = B * H
    x_packed = jnp.transpose(x_bth, (1, 0, 2)).reshape(T, P)     # (T, B*H) lane-dense
    wih, whh, bih, bhh = gru_prep                                # (2,3,P,P) x2, (2,3,1,P) x2
    out = pl.pallas_call(
        _make_gru2_kernel(BN_SCALE),
        out_shape=jax.ShapeDtypeStruct((T, P), jnp.float32),
        grid=(1,),
        in_specs=[
            pl.BlockSpec((T, P), lambda i: (0, 0)),
            pl.BlockSpec((2, 3, P, P), lambda i: (0, 0, 0, 0)),
            pl.BlockSpec((2, 3, P, P), lambda i: (0, 0, 0, 0)),
            pl.BlockSpec((2, 3, 1, P), lambda i: (0, 0, 0, 0)),
            pl.BlockSpec((2, 3, 1, P), lambda i: (0, 0, 0, 0)),
        ],
        out_specs=pl.BlockSpec((T, P), lambda i: (0, 0)),
        scratch_shapes=[pltpu.VMEM((T, P), jnp.float32)] * 4,   # gi_r, gi_z, gi_n, h1
        compiler_params=pltpu.CompilerParams(dimension_semantics=("arbitrary",)),
    )(x_packed, wih, whh, bih, bhh)
    return jnp.transpose(out.reshape(T, B, H), (1, 0, 2))


# ----------------------------------------------------------------------------
# Parameters: deterministic synthetic init in PyTorch layouts, then a one-time
# prep pass into kernel-ready layouts (transposed/padded/bf16/block-diag).
# ----------------------------------------------------------------------------
def init_params(key, dec_dim=64):
    keys = iter(jax.random.split(key, 64))

    def nrm(shape, scale=0.05):
        return scale * jax.random.normal(next(keys), shape, dtype=jnp.float32)

    erb = jnp.asarray(erb_filter_bank(), dtype=jnp.float32)      # (769, 128)

    enc_io = [(128, 128), (128, 128), (128, 64), (64, 64)]        # (Cin, Cout)
    enc = [(nrm((co, ci, 3)), nrm((co,))) for (ci, co) in enc_io]

    dec_io = [(dec_dim, 64), (64, 128), (128, 128)]
    dec = [(nrm((co, ci, 3)), nrm((co,))) for (ci, co) in dec_io]
    dec_out = (nrm((769, 128, 3)), nrm((769,)))

    H = dec_dim

    def gru_params():
        return (nrm((3 * H, H)), nrm((3 * H, H)), nrm((3 * H,)), nrm((3 * H,)))

    return {
        "erb": erb,
        "enc": enc,
        "dec": dec,
        "dec_out": dec_out,
        "gru1": gru_params(),
        "gru2": gru_params(),
        "mask": nrm((6,), scale=0.5),   # [w_sig, b_sig, w_tanh, b_tanh, w_gate, b_gate]
    }


def prepare_params(params, batch_size):
    """One-time conversion of PyTorch-layout weights into kernel-ready layouts."""
    def conv_prep(w, b, cin_pad=None, cout_pad=None):
        Cout, Cin, K = w.shape
        wk = jnp.transpose(w, (2, 1, 0))                 # (K, Cin, Cout)
        bb = b
        if cin_pad is not None and cin_pad > Cin:        # lane-pad input channels
            wk = jnp.pad(wk, ((0, 0), (0, cin_pad - Cin), (0, 0)))
        if cout_pad is not None and cout_pad > Cout:     # lane-pad output channels
            wk = jnp.pad(wk, ((0, 0), (0, 0), (0, cout_pad - Cout)))
            bb = jnp.pad(bb, (0, cout_pad - Cout))
        return wk.astype(jnp.bfloat16), bb.reshape(1, -1).astype(jnp.float32)

    L = params["erb"]                                     # (769, 128)
    erb_w = jnp.transpose(L)[:, :, None]                  # (128, 769, 1) torch conv layout
    erb_b = jnp.full((L.shape[1],), F32_EPS, jnp.float32)  # "+ torch_eps"
    erb_wk, erb_b2 = conv_prep(erb_w, erb_b, cin_pad=CPAD)

    enc = [conv_prep(w, b) for (w, b) in params["enc"]]
    dec = [conv_prep(w, b) for (w, b) in params["dec"]]
    dec_out_wk, dec_out_b2 = conv_prep(*params["dec_out"], cout_pad=CPAD)

    # GRU: gate-separate, batch-block-diagonal packed weights (P = B*H lanes).
    B = batch_size
    H = params["gru1"][0].shape[1]
    P = B * H
    eyeB = jnp.eye(B, dtype=jnp.float32)

    def pack_layer(w_ih, w_hh, b_ih, b_hh):
        wi, wh, bi, bh = [], [], [], []
        for g in range(3):                    # PyTorch gate order: r, z, n
            wi.append(jnp.kron(eyeB, w_ih[g * H:(g + 1) * H, :].T))   # (P, P)
            wh.append(jnp.kron(eyeB, w_hh[g * H:(g + 1) * H, :].T))
            bi.append(jnp.tile(b_ih[g * H:(g + 1) * H], B).reshape(1, P))
            bh.append(jnp.tile(b_hh[g * H:(g + 1) * H], B).reshape(1, P))
        return jnp.stack(wi), jnp.stack(wh), jnp.stack(bi), jnp.stack(bh)

    l1 = pack_layer(*params["gru1"])
    l2 = pack_layer(*params["gru2"])
    gru = tuple(jnp.stack([a, b]) for a, b in zip(l1, l2))  # each leading dim 2 (layers)

    return {
        "erb_w": erb_wk, "erb_b": erb_b2,
        "enc": enc, "dec": dec,
        "dec_out_w": dec_out_wk, "dec_out_b": dec_out_b2,
        "gru": gru,
        "mask": params["mask"].astype(jnp.float32),
    }


# ----------------------------------------------------------------------------
# Generator forward
# ----------------------------------------------------------------------------
def generator_forward(x_nct, prep):
    B, F_in, T = x_nct.shape
    cpad = prep["erb_w"].shape[1]                         # 896 (static)
    x_btc = jnp.transpose(x_nct, (0, 2, 1))               # (B, T, 769) channel-last
    x_pad = jnp.pad(x_btc, ((0, 0), (0, 0), (0, cpad - F_in)))   # (B, T, 896)

    # ---- Encoder ----
    h = causal_conv1d(x_pad, prep["erb_w"], prep["erb_b"], apply_act=False)  # ERB proj + eps
    e1 = causal_conv1d(h, *prep["enc"][0], apply_act=True)    # (B,T,128)
    e2 = causal_conv1d(e1, *prep["enc"][1], apply_act=True)   # (B,T,128)
    e3 = causal_conv1d(e2, *prep["enc"][2], apply_act=True)   # (B,T,64)
    e4 = causal_conv1d(e3, *prep["enc"][3], apply_act=True)   # (B,T,64)

    # ---- GroupRNN (split_group=1, 2x causal GRU) + first decoder skip (+e4) ----
    # TODO(synk): NormSwitch('BN','1D',·) is not defined in the source; modeled as
    # BatchNorm1d in eval mode with default running stats => constant scale BN_SCALE.
    g = gru_stack(e4, prep["gru"])                            # (B,T,64), already + e4

    # ---- Decoder (skip adds folded into conv input build; mask fused in dec_out) ----
    d1 = causal_conv1d(g, *prep["dec"][0], apply_act=True)                    # 64 -> 64
    d2 = causal_conv1d(d1, *prep["dec"][1], apply_act=True, residual=e3)      # 64 -> 128
    d3 = causal_conv1d(d2, *prep["dec"][2], apply_act=True, residual=e2)      # 128 -> 128
    out = causal_conv1d(d3, prep["dec_out_w"], prep["dec_out_b"],
                        apply_act=False, residual=e1,
                        mask_x0=x_pad, mask_params=prep["mask"])              # 128 -> 896
    return jnp.transpose(out[:, :, :F_in], (0, 2, 1))         # back to (B, 769, T)


if __name__ == "__main__":
    key = jax.random.PRNGKey(0)
    pkey, xkey = jax.random.split(key)

    B, F, T = 2, 769, 8                                   # F=769 is fixed by the model
    raw_params = init_params(pkey, dec_dim=64)
    prep = prepare_params(raw_params, batch_size=B)

    x = jax.random.normal(xkey, (B, F, T), dtype=jnp.float32)

    fwd = jax.jit(generator_forward)
    y = fwd(x, prep)
    jax.block_until_ready(y)
    assert y.shape == (B, F, T) and y.dtype == jnp.float32
    assert bool(jnp.all(jnp.isfinite(y)))
    print("KERNEL_OK")
</pallas_src>

<mosaic_0001>
module attributes {stable_mosaic.version = 11 : i64} {
  func.func @kernel(%arg0: i32, %arg1: memref<1x16x896xbf16, #tpu.memory_space<vmem>>, %arg2: memref<1x896x128xbf16, #tpu.memory_space<vmem>>, %arg3: memref<1x128xf32, #tpu.memory_space<vmem>>, %arg4: memref<16x128xf32, #tpu.memory_space<vmem>>) attributes {dimension_semantics = [#tpu.dimension_semantics<parallel>], iteration_bounds = array<i64: 1>, scalar_prefetch = 0 : i64, scratch_operands = 0 : i64, tpu.core_type = #tpu.core_type<tc>, window_params = [{transform_indices = @transform_0, window_bounds = array<i64: 1, 16, 896>}, {pipeline_mode = #tpu.pipeline_mode<synchronous>, transform_indices = @transform_1, window_bounds = array<i64: 1, 896, 128>}, {pipeline_mode = #tpu.pipeline_mode<synchronous>, transform_indices = @transform_2, window_bounds = array<i64: 1, 128>}, {transform_indices = @transform_3, window_bounds = array<i64: 16, 128>}]} {
    %c0 = arith.constant 0 : index
    %c0_0 = arith.constant 0 : index
    %0 = vector.load %arg3[%c0, %c0_0] : memref<1x128xf32, #tpu.memory_space<vmem>>, vector<1x128xf32>
    %c0_1 = arith.constant 0 : index
    %c0_2 = arith.constant 0 : index
    %c0_3 = arith.constant 0 : index
    %1 = vector.load %arg1[%c0_1, %c0_2, %c0_3] : memref<1x16x896xbf16, #tpu.memory_space<vmem>>, vector<1x16x896xbf16>
    %2 = vector.shape_cast %1 : vector<1x16x896xbf16> to vector<16x896xbf16>
    %c0_4 = arith.constant 0 : index
    %c0_5 = arith.constant 0 : index
    %c0_6 = arith.constant 0 : index
    %3 = vector.load %arg2[%c0_4, %c0_5, %c0_6] : memref<1x896x128xbf16, #tpu.memory_space<vmem>>, vector<1x896x128xbf16>
    %4 = vector.shape_cast %3 : vector<1x896x128xbf16> to vector<896x128xbf16>
    %cst = arith.constant dense<0.000000e+00> : vector<16x128xf32>
    %5 = tpu.matmul %2, %4, %cst {dimension_numbers = #tpu.dot_dimension_numbers<[1], [0], [0], [1], [0, 0, 1, 1], [], []>} : vector<16x896xbf16>, vector<896x128xbf16>, vector<16x128xf32> -> vector<16x128xf32>
    %6 = vector.broadcast %0 : vector<1x128xf32> to vector<16x128xf32>
    %7 = arith.addf %6, %5 : vector<16x128xf32>
    %c0_7 = arith.constant 0 : index
    %c0_8 = arith.constant 0 : index
    %8 = vector.load %arg4[%c0_7, %c0_8] : memref<16x128xf32, #tpu.memory_space<vmem>>, vector<16x128xf32>
    tpu.vector_store %arg4[%c0_7, %c0_8], %7 {strides = array<i32>} : memref<16x128xf32, #tpu.memory_space<vmem>>, vector<16x128xf32>,
    return
  }
  func.func @transform_0(%arg0: i32) -> (i32, i32, i32) {
    %c0_i32 = arith.constant 0 : i32
    %c0_i32_0 = arith.constant 0 : i32
    %c0_i32_1 = arith.constant 0 : i32
    return %c0_i32, %arg0, %c0_i32_0 : i32, i32, i32
  }
  func.func @transform_1(%arg0: i32) -> (i32, i32, i32) {
    %c0_i32 = arith.constant 0 : i32
    %c0_i32_0 = arith.constant 0 : i32
    %c0_i32_1 = arith.constant 0 : i32
    %c0_i32_2 = arith.constant 0 : i32
    return %c0_i32, %c0_i32_0, %c0_i32_1 : i32, i32, i32
  }
  func.func @transform_2(%arg0: i32) -> (i32, i32) {
    %c0_i32 = arith.constant 0 : i32
    %c0_i32_0 = arith.constant 0 : i32
    %c0_i32_1 = arith.constant 0 : i32
    return %c0_i32, %c0_i32_0 : i32, i32
  }
  func.func @transform_3(%arg0: i32) -> (i32, i32) {
    %c0_i32 = arith.constant 0 : i32
    %c0_i32_0 = arith.constant 0 : i32
    return %arg0, %c0_i32 : i32, i32
  }
}

module attributes {stable_mosaic.version = 11 : i64} {
  func.func @kernel(%arg0: i32, %arg1: memref<3x16x128xbf16, #tpu.memory_space<vmem>>, %arg2: memref<3x128x128xbf16, #tpu.memory_space<vmem>>, %arg3: memref<1x128xf32, #tpu.memory_space<vmem>>, %arg4: memref<16x128xf32, #tpu.memory_space<vmem>>) attributes {dimension_semantics = [#tpu.dimension_semantics<parallel>], iteration_bounds = array<i64: 1>, scalar_prefetch = 0 : i64, scratch_operands = 0 : i64, tpu.core_type = #tpu.core_type<tc>, window_params = [{transform_indices = @transform_0, window_bounds = array<i64: 3, 16, 128>}, {pipeline_mode = #tpu.pipeline_mode<synchronous>, transform_indices = @transform_1, window_bounds = array<i64: 3, 128, 128>}, {pipeline_mode = #tpu.pipeline_mode<synchronous>, transform_indices = @transform_2, window_bounds = array<i64: 1, 128>}, {transform_indices = @transform_3, window_bounds = array<i64: 16, 128>}]} {
    %c0 = arith.constant 0 : index
    %c0_0 = arith.constant 0 : index
    %0 = vector.load %arg3[%c0, %c0_0] : memref<1x128xf32, #tpu.memory_space<vmem>>, vector<1x128xf32>
    %c0_1 = arith.constant 0 : index
    %c0_2 = arith.constant 0 : index
    %c0_3 = arith.constant 0 : index
    %1 = vector.load %arg1[%c0_1, %c0_2, %c0_3] : memref<3x16x128xbf16, #tpu.memory_space<vmem>>, vector<1x16x128xbf16>
    %2 = vector.shape_cast %1 : vector<1x16x128xbf16> to vector<16x128xbf16>
    %c0_4 = arith.constant 0 : index
    %c0_5 = arith.constant 0 : index
    %c0_6 = arith.constant 0 : index
    %3 = vector.load %arg2[%c0_4, %c0_5, %c0_6] : memref<3x128x128xbf16, #tpu.memory_space<vmem>>, vector<1x128x128xbf16>
    %4 = vector.shape_cast %3 : vector<1x128x128xbf16> to vector<128x128xbf16>
    %cst = arith.constant dense<0.000000e+00> : vector<16x128xf32>
    %5 = tpu.matmul %2, %4, %cst {dimension_numbers = #tpu.dot_dimension_numbers<[1], [0], [0], [1], [0, 0, 1, 1], [], []>} : vector<16x128xbf16>, vector<128x128xbf16>, vector<16x128xf32> -> vector<16x128xf32>
    %6 = vector.broadcast %0 : vector<1x128xf32> to vector<16x128xf32>
    %7 = arith.addf %6, %5 : vector<16x128xf32>
    %c1 = arith.constant 1 : index
    %c0_7 = arith.constant 0 : index
    %c0_8 = arith.constant 0 : index
    %8 = vector.load %arg1[%c1, %c0_7, %c0_8] : memref<3x16x128xbf16, #tpu.memory_space<vmem>>, vector<1x16x128xbf16>
    %9 = vector.shape_cast %8 : vector<1x16x128xbf16> to vector<16x128xbf16>
    %c1_9 = arith.constant 1 : index
    %c0_10 = arith.constant 0 : index
    %c0_11 = arith.constant 0 : index
    %10 = vector.load %arg2[%c1_9, %c0_10, %c0_11] : memref<3x128x128xbf16, #tpu.memory_space<vmem>>, vector<1x128x128xbf16>
    %11 = vector.shape_cast %10 : vector<1x128x128xbf16> to vector<128x128xbf16>
    %cst_12 = arith.constant dense<0.000000e+00> : vector<16x128xf32>
    %12 = tpu.matmul %9, %11, %cst_12 {dimension_numbers = #tpu.dot_dimension_numbers<[1], [0], [0], [1], [0, 0, 1, 1], [], []>} : vector<16x128xbf16>, vector<128x128xbf16>, vector<16x128xf32> -> vector<16x128xf32>
    %13 = arith.addf %7, %12 : vector<16x128xf32>
    %c2 = arith.constant 2 : index
    %c0_13 = arith.constant 0 : index
    %c0_14 = arith.constant 0 : index
    %14 = vector.load %arg1[%c2, %c0_13, %c0_14] : memref<3x16x128xbf16, #tpu.memory_space<vmem>>, vector<1x16x128xbf16>
    %15 = vector.shape_cast %14 : vector<1x16x128xbf16> to vector<16x128xbf16>
    %c2_15 = arith.constant 2 : index
    %c0_16 = arith.constant 0 : index
    %c0_17 = arith.constant 0 : index
    %16 = vector.load %arg2[%c2_15, %c0_16, %c0_17] : memref<3x128x128xbf16, #tpu.memory_space<vmem>>, vector<1x128x128xbf16>
    %17 = vector.shape_cast %16 : vector<1x128x128xbf16> to vector<128x128xbf16>
    %cst_18 = arith.constant dense<0.000000e+00> : vector<16x128xf32>
    %18 = tpu.matmul %15, %17, %cst_18 {dimension_numbers = #tpu.dot_dimension_numbers<[1], [0], [0], [1], [0, 0, 1, 1], [], []>} : vector<16x128xbf16>, vector<128x128xbf16>, vector<16x128xf32> -> vector<16x128xf32>
    %19 = arith.addf %13, %18 : vector<16x128xf32>
    %cst_19 = arith.constant 0.000000e+00 : f32
    %20 = vector.broadcast %cst_19 : f32 to vector<16x128xf32>
    %21 = arith.cmpf oge, %19, %20 : vector<16x128xf32>
    %cst_20 = arith.constant 2.000000e-01 : f32
    %22 = vector.broadcast %cst_20 : f32 to vector<16x128xf32>
    %23 = arith.mulf %22, %19 : vector<16x128xf32>
    %24 = arith.select %21, %19, %23 : vector<16x128xi1>, vector<16x128xf32>
    %c0_21 = arith.constant 0 : index
    %c0_22 = arith.constant 0 : index
    %25 = vector.load %arg4[%c0_21, %c0_22] : memref<16x128xf32, #tpu.memory_space<vmem>>, vector<16x128xf32>
    tpu.vector_store %arg4[%c0_21, %c0_22], %24 {strides = array<i32>} : memref<16x128xf32, #tpu.memory_space<vmem>>, vector<16x128xf32>,
    return
  }
  func.func @transform_0(%arg0: i32) -> (i32, i32, i32) {
    %c0_i32 = arith.constant 0 : i32
    %c0_i32_0 = arith.constant 0 : i32
    %c0_i32_1 = arith.constant 0 : i32
    return %c0_i32, %arg0, %c0_i32_0 : i32, i32, i32
  }
  func.func @transform_1(%arg0: i32) -> (i32, i32, i32) {
    %c0_i32 = arith.constant 0 : i32
    %c0_i32_0 = arith.constant 0 : i32
    %c0_i32_1 = arith.constant 0 : i32
    %c0_i32_2 = arith.constant 0 : i32
    return %c0_i32, %c0_i32_0, %c0_i32_1 : i32, i32, i32
  }
  func.func @transform_2(%arg0: i32) -> (i32, i32) {
    %c0_i32 = arith.constant 0 : i32
    %c0_i32_0 = arith.constant 0 : i32
    %c0_i32_1 = arith.constant 0 : i32
    return %c0_i32, %c0_i32_0 : i32, i32
  }
  func.func @transform_3(%arg0: i32) -> (i32, i32) {
    %c0_i32 = arith.constant 0 : i32
    %c0_i32_0 = arith.constant 0 : i32
    return %arg0, %c0_i32 : i32, i32
  }
}

module attributes {stable_mosaic.version = 11 : i64} {
  func.func @kernel(%arg0: i32, %arg1: memref<3x16x128xbf16, #tpu.memory_space<vmem>>, %arg2: memref<3x128x64xbf16, #tpu.memory_space<vmem>>, %arg3: memref<1x64xf32, #tpu.memory_space<vmem>>, %arg4: memref<16x64xf32, #tpu.memory_space<vmem>>) attributes {dimension_semantics = [#tpu.dimension_semantics<parallel>], iteration_bounds = array<i64: 1>, scalar_prefetch = 0 : i64, scratch_operands = 0 : i64, tpu.core_type = #tpu.core_type<tc>, window_params = [{transform_indices = @transform_0, window_bounds = array<i64: 3, 16, 128>}, {pipeline_mode = #tpu.pipeline_mode<synchronous>, transform_indices = @transform_1, window_bounds = array<i64: 3, 128, 64>}, {pipeline_mode = #tpu.pipeline_mode<synchronous>, transform_indices = @transform_2, window_bounds = array<i64: 1, 64>}, {transform_indices = @transform_3, window_bounds = array<i64: 16, 64>}]} {
    %c0 = arith.constant 0 : index
    %c0_0 = arith.constant 0 : index
    %0 = vector.load %arg3[%c0, %c0_0] : memref<1x64xf32, #tpu.memory_space<vmem>>, vector<1x64xf32>
    %c0_1 = arith.constant 0 : index
    %c0_2 = arith.constant 0 : index
    %c0_3 = arith.constant 0 : index
    %1 = vector.load %arg1[%c0_1, %c0_2, %c0_3] : memref<3x16x128xbf16, #tpu.memory_space<vmem>>, vector<1x16x128xbf16>
    %2 = vector.shape_cast %1 : vector<1x16x128xbf16> to vector<16x128xbf16>
    %c0_4 = arith.constant 0 : index
    %c0_5 = arith.constant 0 : index
    %c0_6 = arith.constant 0 : index
    %3 = vector.load %arg2[%c0_4, %c0_5, %c0_6] : memref<3x128x64xbf16, #tpu.memory_space<vmem>>, vector<1x128x64xbf16>
    %4 = vector.shape_cast %3 : vector<1x128x64xbf16> to vector<128x64xbf16>
    %cst = arith.constant dense<0.000000e+00> : vector<16x64xf32>
    %5 = tpu.matmul %2, %4, %cst {dimension_numbers = #tpu.dot_dimension_numbers<[1], [0], [0], [1], [0, 0, 1, 1], [], []>} : vector<16x128xbf16>, vector<128x64xbf16>, vector<16x64xf32> -> vector<16x64xf32>
    %6 = vector.broadcast %0 : vector<1x64xf32> to vector<16x64xf32>
    %7 = arith.addf %6, %5 : vector<16x64xf32>
    %c1 = arith.constant 1 : index
    %c0_7 = arith.constant 0 : index
    %c0_8 = arith.constant 0 : index
    %8 = vector.load %arg1[%c1, %c0_7, %c0_8] : memref<3x16x128xbf16, #tpu.memory_space<vmem>>, vector<1x16x128xbf16>
    %9 = vector.shape_cast %8 : vector<1x16x128xbf16> to vector<16x128xbf16>
    %c1_9 = arith.constant 1 : index
    %c0_10 = arith.constant 0 : index
    %c0_11 = arith.constant 0 : index
    %10 = vector.load %arg2[%c1_9, %c0_10, %c0_11] : memref<3x128x64xbf16, #tpu.memory_space<vmem>>, vector<1x128x64xbf16>
    %11 = vector.shape_cast %10 : vector<1x128x64xbf16> to vector<128x64xbf16>
    %cst_12 = arith.constant dense<0.000000e+00> : vector<16x64xf32>
    %12 = tpu.matmul %9, %11, %cst_12 {dimension_numbers = #tpu.dot_dimension_numbers<[1], [0], [0], [1], [0, 0, 1, 1], [], []>} : vector<16x128xbf16>, vector<128x64xbf16>, vector<16x64xf32> -> vector<16x64xf32>
    %13 = arith.addf %7, %12 : vector<16x64xf32>
    %c2 = arith.constant 2 : index
    %c0_13 = arith.constant 0 : index
    %c0_14 = arith.constant 0 : index
    %14 = vector.load %arg1[%c2, %c0_13, %c0_14] : memref<3x16x128xbf16, #tpu.memory_space<vmem>>, vector<1x16x128xbf16>
    %15 = vector.shape_cast %14 : vector<1x16x128xbf16> to vector<16x128xbf16>
    %c2_15 = arith.constant 2 : index
    %c0_16 = arith.constant 0 : index
    %c0_17 = arith.constant 0 : index
    %16 = vector.load %arg2[%c2_15, %c0_16, %c0_17] : memref<3x128x64xbf16, #tpu.memory_space<vmem>>, vector<1x128x64xbf16>
    %17 = vector.shape_cast %16 : vector<1x128x64xbf16> to vector<128x64xbf16>
    %cst_18 = arith.constant dense<0.000000e+00> : vector<16x64xf32>
    %18 = tpu.matmul %15, %17, %cst_18 {dimension_numbers = #tpu.dot_dimension_numbers<[1], [0], [0], [1], [0, 0, 1, 1], [], []>} : vector<16x128xbf16>, vector<128x64xbf16>, vector<16x64xf32> -> vector<16x64xf32>
    %19 = arith.addf %13, %18 : vector<16x64xf32>
    %cst_19 = arith.constant 0.000000e+00 : f32
    %20 = vector.broadcast %cst_19 : f32 to vector<16x64xf32>
    %21 = arith.cmpf oge, %19, %20 : vector<16x64xf32>
    %cst_20 = arith.constant 2.000000e-01 : f32
    %22 = vector.broadcast %cst_20 : f32 to vector<16x64xf32>
    %23 = arith.mulf %22, %19 : vector<16x64xf32>
    %24 = arith.select %21, %19, %23 : vector<16x64xi1>, vector<16x64xf32>
    %c0_21 = arith.constant 0 : index
    %c0_22 = arith.constant 0 : index
    %25 = vector.load %arg4[%c0_21, %c0_22] : memref<16x64xf32, #tpu.memory_space<vmem>>, vector<16x64xf32>
    tpu.vector_store %arg4[%c0_21, %c0_22], %24 {strides = array<i32>} : memref<16x64xf32, #tpu.memory_space<vmem>>, vector<16x64xf32>,
    return
  }
  func.func @transform_0(%arg0: i32) -> (i32, i32, i32) {
    %c0_i32 = arith.constant 0 : i32
    %c0_i32_0 = arith.constant 0 : i32
    %c0_i32_1 = arith.constant 0 : i32
    return %c0_i32, %arg0, %c0_i32_0 : i32, i32, i32
  }
  func.func @transform_1(%arg0: i32) -> (i32, i32, i32) {
    %c0_i32 = arith.constant 0 : i32
    %c0_i32_0 = arith.constant 0 : i32
    %c0_i32_1 = arith.constant 0 : i32
    %c0_i32_2 = arith.constant 0 : i32
    return %c0_i32, %c0_i32_0, %c0_i32_1 : i32, i32, i32
  }
  func.func @transform_2(%arg0: i32) -> (i32, i32) {
    %c0_i32 = arith.constant 0 : i32
    %c0_i32_0 = arith.constant 0 : i32
    %c0_i32_1 = arith.constant 0 : i32
    return %c0_i32, %c0_i32_0 : i32, i32
  }
  func.func @transform_3(%arg0: i32) -> (i32, i32) {
    %c0_i32 = arith.constant 0 : i32
    %c0_i32_0 = arith.constant 0 : i32
    return %arg0, %c0_i32 : i32, i32
  }
}

module attributes {stable_mosaic.version = 11 : i64} {
  func.func @kernel(%arg0: i32, %arg1: memref<3x16x64xbf16, #tpu.memory_space<vmem>>, %arg2: memref<3x64x64xbf16, #tpu.memory_space<vmem>>, %arg3: memref<1x64xf32, #tpu.memory_space<vmem>>, %arg4: memref<16x64xf32, #tpu.memory_space<vmem>>) attributes {dimension_semantics = [#tpu.dimension_semantics<parallel>], iteration_bounds = array<i64: 1>, scalar_prefetch = 0 : i64, scratch_operands = 0 : i64, tpu.core_type = #tpu.core_type<tc>, window_params = [{transform_indices = @transform_0, window_bounds = array<i64: 3, 16, 64>}, {pipeline_mode = #tpu.pipeline_mode<synchronous>, transform_indices = @transform_1, window_bounds = array<i64: 3, 64, 64>}, {pipeline_mode = #tpu.pipeline_mode<synchronous>, transform_indices = @transform_2, window_bounds = array<i64: 1, 64>}, {transform_indices = @transform_3, window_bounds = array<i64: 16, 64>}]} {
    %c0 = arith.constant 0 : index
    %c0_0 = arith.constant 0 : index
    %0 = vector.load %arg3[%c0, %c0_0] : memref<1x64xf32, #tpu.memory_space<vmem>>, vector<1x64xf32>
    %c0_1 = arith.constant 0 : index
    %c0_2 = arith.constant 0 : index
    %c0_3 = arith.constant 0 : index
    %1 = vector.load %arg1[%c0_1, %c0_2, %c0_3] : memref<3x16x64xbf16, #tpu.memory_space<vmem>>, vector<1x16x64xbf16>
    %2 = vector.shape_cast %1 : vector<1x16x64xbf16> to vector<16x64xbf16>
    %c0_4 = arith.constant 0 : index
    %c0_5 = arith.constant 0 : index
    %c0_6 = arith.constant 0 : index
    %3 = vector.load %arg2[%c0_4, %c0_5, %c0_6] : memref<3x64x64xbf16, #tpu.memory_space<vmem>>, vector<1x64x64xbf16>
    %4 = vector.shape_cast %3 : vector<1x64x64xbf16> to vector<64x64xbf16>
    %cst = arith.constant dense<0.000000e+00> : vector<16x64xf32>
    %5 = tpu.matmul %2, %4, %cst {dimension_numbers = #tpu.dot_dimension_numbers<[1], [0], [0], [1], [0, 0, 1, 1], [], []>} : vector<16x64xbf16>, vector<64x64xbf16>, vector<16x64xf32> -> vector<16x64xf32>
    %6 = vector.broadcast %0 : vector<1x64xf32> to vector<16x64xf32>
    %7 = arith.addf %6, %5 : vector<16x64xf32>
    %c1 = arith.constant 1 : index
    %c0_7 = arith.constant 0 : index
    %c0_8 = arith.constant 0 : index
    %8 = vector.load %arg1[%c1, %c0_7, %c0_8] : memref<3x16x64xbf16, #tpu.memory_space<vmem>>, vector<1x16x64xbf16>
    %9 = vector.shape_cast %8 : vector<1x16x64xbf16> to vector<16x64xbf16>
    %c1_9 = arith.constant 1 : index
    %c0_10 = arith.constant 0 : index
    %c0_11 = arith.constant 0 : index
    %10 = vector.load %arg2[%c1_9, %c0_10, %c0_11] : memref<3x64x64xbf16, #tpu.memory_space<vmem>>, vector<1x64x64xbf16>
    %11 = vector.shape_cast %10 : vector<1x64x64xbf16> to vector<64x64xbf16>
    %cst_12 = arith.constant dense<0.000000e+00> : vector<16x64xf32>
    %12 = tpu.matmul %9, %11, %cst_12 {dimension_numbers = #tpu.dot_dimension_numbers<[1], [0], [0], [1], [0, 0, 1, 1], [], []>} : vector<16x64xbf16>, vector<64x64xbf16>, vector<16x64xf32> -> vector<16x64xf32>
    %13 = arith.addf %7, %12 : vector<16x64xf32>
    %c2 = arith.constant 2 : index
    %c0_13 = arith.constant 0 : index
    %c0_14 = arith.constant 0 : index
    %14 = vector.load %arg1[%c2, %c0_13, %c0_14] : memref<3x16x64xbf16, #tpu.memory_space<vmem>>, vector<1x16x64xbf16>
    %15 = vector.shape_cast %14 : vector<1x16x64xbf16> to vector<16x64xbf16>
    %c2_15 = arith.constant 2 : index
    %c0_16 = arith.constant 0 : index
    %c0_17 = arith.constant 0 : index
    %16 = vector.load %arg2[%c2_15, %c0_16, %c0_17] : memref<3x64x64xbf16, #tpu.memory_space<vmem>>, vector<1x64x64xbf16>
    %17 = vector.shape_cast %16 : vector<1x64x64xbf16> to vector<64x64xbf16>
    %cst_18 = arith.constant dense<0.000000e+00> : vector<16x64xf32>
    %18 = tpu.matmul %15, %17, %cst_18 {dimension_numbers = #tpu.dot_dimension_numbers<[1], [0], [0], [1], [0, 0, 1, 1], [], []>} : vector<16x64xbf16>, vector<64x64xbf16>, vector<16x64xf32> -> vector<16x64xf32>
    %19 = arith.addf %13, %18 : vector<16x64xf32>
    %cst_19 = arith.constant 0.000000e+00 : f32
    %20 = vector.broadcast %cst_19 : f32 to vector<16x64xf32>
    %21 = arith.cmpf oge, %19, %20 : vector<16x64xf32>
    %cst_20 = arith.constant 2.000000e-01 : f32
    %22 = vector.broadcast %cst_20 : f32 to vector<16x64xf32>
    %23 = arith.mulf %22, %19 : vector<16x64xf32>
    %24 = arith.select %21, %19, %23 : vector<16x64xi1>, vector<16x64xf32>
    %c0_21 = arith.constant 0 : index
    %c0_22 = arith.constant 0 : index
    %25 = vector.load %arg4[%c0_21, %c0_22] : memref<16x64xf32, #tpu.memory_space<vmem>>, vector<16x64xf32>
    tpu.vector_store %arg4[%c0_21, %c0_22], %24 {strides = array<i32>} : memref<16x64xf32, #tpu.memory_space<vmem>>, vector<16x64xf32>,
    return
  }
  func.func @transform_0(%arg0: i32) -> (i32, i32, i32) {
    %c0_i32 = arith.constant 0 : i32
    %c0_i32_0 = arith.constant 0 : i32
    %c0_i32_1 = arith.constant 0 : i32
    return %c0_i32, %arg0, %c0_i32_0 : i32, i32, i32
  }
  func.func @transform_1(%arg0: i32) -> (i32, i32, i32) {
    %c0_i32 = arith.constant 0 : i32
    %c0_i32_0 = arith.constant 0 : i32
    %c0_i32_1 = arith.constant 0 : i32
    %c0_i32_2 = arith.constant 0 : i32
    return %c0_i32, %c0_i32_0, %c0_i32_1 : i32, i32, i32
  }
  func.func @transform_2(%arg0: i32) -> (i32, i32) {
    %c0_i32 = arith.constant 0 : i32
    %c0_i32_0 = arith.constant 0 : i32
    %c0_i32_1 = arith.constant 0 : i32
    return %c0_i32, %c0_i32_0 : i32, i32
  }
  func.func @transform_3(%arg0: i32) -> (i32, i32) {
    %c0_i32 = arith.constant 0 : i32
    %c0_i32_0 = arith.constant 0 : i32
    return %arg0, %c0_i32 : i32, i32
  }
}

module attributes {stable_mosaic.version = 11 : i64} {
  func.func @kernel(%arg0: i32, %arg1: memref<8x128xf32, #tpu.memory_space<vmem>>, %arg2: memref<2x3x128x128xf32, #tpu.memory_space<vmem>>, %arg3: memref<2x3x128x128xf32, #tpu.memory_space<vmem>>, %arg4: memref<2x3x1x128xf32, #tpu.memory_space<vmem>>, %arg5: memref<2x3x1x128xf32, #tpu.memory_space<vmem>>, %arg6: memref<8x128xf32, #tpu.memory_space<vmem>>, %arg7: memref<8x128xf32, #tpu.memory_space<vmem>>, %arg8: memref<8x128xf32, #tpu.memory_space<vmem>>, %arg9: memref<8x128xf32, #tpu.memory_space<vmem>>, %arg10: memref<8x128xf32, #tpu.memory_space<vmem>>) attributes {dimension_semantics = [#tpu.dimension_semantics<arbitrary>], iteration_bounds = array<i64: 1>, scalar_prefetch = 0 : i64, scratch_operands = 4 : i64, tpu.core_type = #tpu.core_type<tc>, window_params = [{pipeline_mode = #tpu.pipeline_mode<synchronous>, transform_indices = @transform_0, window_bounds = array<i64: 8, 128>}, {pipeline_mode = #tpu.pipeline_mode<synchronous>, transform_indices = @transform_1, window_bounds = array<i64: 2, 3, 128, 128>}, {pipeline_mode = #tpu.pipeline_mode<synchronous>, transform_indices = @transform_2, window_bounds = array<i64: 2, 3, 128, 128>}, {pipeline_mode = #tpu.pipeline_mode<synchronous>, transform_indices = @transform_3, window_bounds = array<i64: 2, 3, 1, 128>}, {pipeline_mode = #tpu.pipeline_mode<synchronous>, transform_indices = @transform_4, window_bounds = array<i64: 2, 3, 1, 128>}, {pipeline_mode = #tpu.pipeline_mode<synchronous>, transform_indices = @transform_5, window_bounds = array<i64: 8, 128>}]} {
    %c0 = arith.constant 0 : index
    %c0_0 = arith.constant 0 : index
    %0 = vector.load %arg1[%c0, %c0_0] : memref<8x128xf32, #tpu.memory_space<vmem>>, vector<8x128xf32>
    %c0_1 = arith.constant 0 : index
    %c0_2 = arith.constant 0 : index
    %c0_3 = arith.constant 0 : index
    %c0_4 = arith.constant 0 : index
    %1 = vector.load %arg2[%c0_1, %c0_2, %c0_3, %c0_4] : memref<2x3x128x128xf32, #tpu.memory_space<vmem>>, vector<1x1x128x128xf32>
    %2 = vector.shape_cast %1 : vector<1x1x128x128xf32> to vector<128x128xf32>
    %cst = arith.constant dense<0.000000e+00> : vector<8x128xf32>
    %3 = tpu.matmul %0, %2, %cst {dimension_numbers = #tpu.dot_dimension_numbers<[1], [0], [0], [1], [0, 0, 1, 1], [], []>} : vector<8x128xf32>, vector<128x128xf32>, vector<8x128xf32> -> vector<8x128xf32>
    %c0_5 = arith.constant 0 : index
    %c0_6 = arith.constant 0 : index
    %c0_7 = arith.constant 0 : index
    %c0_8 = arith.constant 0 : index
    %4 = vector.load %arg4[%c0_5, %c0_6, %c0_7, %c0_8] : memref<2x3x1x128xf32, #tpu.memory_space<vmem>>, vector<1x1x1x128xf32>
    %5 = vector.shape_cast %4 : vector<1x1x1x128xf32> to vector<1x128xf32>
    %6 = vector.broadcast %5 : vector<1x128xf32> to vector<8x128xf32>
    %7 = arith.addf %3, %6 : vector<8x128xf32>
    %c0_9 = arith.constant 0 : index
    %c0_10 = arith.constant 0 : index
    %8 = vector.load %arg7[%c0_9, %c0_10] : memref<8x128xf32, #tpu.memory_space<vmem>>, vector<8x128xf32>
    tpu.vector_store %arg7[%c0_9, %c0_10], %7 {strides = array<i32>} : memref<8x128xf32, #tpu.memory_space<vmem>>, vector<8x128xf32>,
    %c0_11 = arith.constant 0 : index
    %c1 = arith.constant 1 : index
    %c0_12 = arith.constant 0 : index
    %c0_13 = arith.constant 0 : index
    %9 = vector.load %arg2[%c0_11, %c1, %c0_12, %c0_13] : memref<2x3x128x128xf32, #tpu.memory_space<vmem>>, vector<1x1x128x128xf32>
    %10 = vector.shape_cast %9 : vector<1x1x128x128xf32> to vector<128x128xf32>
    %cst_14 = arith.constant dense<0.000000e+00> : vector<8x128xf32>
    %11 = tpu.matmul %0, %10, %cst_14 {dimension_numbers = #tpu.dot_dimension_numbers<[1], [0], [0], [1], [0, 0, 1, 1], [], []>} : vector<8x128xf32>, vector<128x128xf32>, vector<8x128xf32> -> vector<8x128xf32>
    %c0_15 = arith.constant 0 : index
    %c1_16 = arith.constant 1 : index
    %c0_17 = arith.constant 0 : index
    %c0_18 = arith.constant 0 : index
    %12 = vector.load %arg4[%c0_15, %c1_16, %c0_17, %c0_18] : memref<2x3x1x128xf32, #tpu.memory_space<vmem>>, vector<1x1x1x128xf32>
    %13 = vector.shape_cast %12 : vector<1x1x1x128xf32> to vector<1x128xf32>
    %14 = vector.broadcast %13 : vector<1x128xf32> to vector<8x128xf32>
    %15 = arith.addf %11, %14 : vector<8x128xf32>
    %c0_19 = arith.constant 0 : index
    %c0_20 = arith.constant 0 : index
    %16 = vector.load %arg8[%c0_19, %c0_20] : memref<8x128xf32, #tpu.memory_space<vmem>>, vector<8x128xf32>
    tpu.vector_store %arg8[%c0_19, %c0_20], %15 {strides = array<i32>} : memref<8x128xf32, #tpu.memory_space<vmem>>, vector<8x128xf32>,
    %c0_21 = arith.constant 0 : index
    %c2 = arith.constant 2 : index
    %c0_22 = arith.constant 0 : index
    %c0_23 = arith.constant 0 : index
    %17 = vector.load %arg2[%c0_21, %c2, %c0_22, %c0_23] : memref<2x3x128x128xf32, #tpu.memory_space<vmem>>, vector<1x1x128x128xf32>
    %18 = vector.shape_cast %17 : vector<1x1x128x128xf32> to vector<128x128xf32>
    %cst_24 = arith.constant dense<0.000000e+00> : vector<8x128xf32>
    %19 = tpu.matmul %0, %18, %cst_24 {dimension_numbers = #tpu.dot_dimension_numbers<[1], [0], [0], [1], [0, 0, 1, 1], [], []>} : vector<8x128xf32>, vector<128x128xf32>, vector<8x128xf32> -> vector<8x128xf32>
    %c0_25 = arith.constant 0 : index
    %c2_26 = arith.constant 2 : index
    %c0_27 = arith.constant 0 : index
    %c0_28 = arith.constant 0 : index
    %20 = vector.load %arg4[%c0_25, %c2_26, %c0_27, %c0_28] : memref<2x3x1x128xf32, #tpu.memory_space<vmem>>, vector<1x1x1x128xf32>
    %21 = vector.shape_cast %20 : vector<1x1x1x128xf32> to vector<1x128xf32>
    %22 = vector.broadcast %21 : vector<1x128xf32> to vector<8x128xf32>
    %23 = arith.addf %19, %22 : vector<8x128xf32>
    %c0_29 = arith.constant 0 : index
    %c0_30 = arith.constant 0 : index
    %24 = vector.load %arg9[%c0_29, %c0_30] : memref<8x128xf32, #tpu.memory_space<vmem>>, vector<8x128xf32>
    tpu.vector_store %arg9[%c0_29, %c0_30], %23 {strides = array<i32>} : memref<8x128xf32, #tpu.memory_space<vmem>>, vector<8x128xf32>,
    %cst_31 = arith.constant 0.000000e+00 : f32
    %25 = vector.broadcast %cst_31 : f32 to vector<1x128xf32>
    %c0_i32 = arith.constant 0 : i32
    %c8_i32 = arith.constant 8 : i32
    %26 = arith.addi %c0_i32, %c8_i32 : i32
    %c1_i32 = arith.constant 1 : i32
    %27 = scf.for %arg11 = %c0_i32 to %26 step %c1_i32 iter_args(%arg12 = %25) -> (vector<1x128xf32>)  : i32 {
      %c0_73 = arith.constant 0 : index
      %c0_74 = arith.constant 0 : index
      %c0_75 = arith.constant 0 : index
      %c0_76 = arith.constant 0 : index
      %56 = vector.load %arg3[%c0_73, %c0_74, %c0_75, %c0_76] : memref<2x3x128x128xf32, #tpu.memory_space<vmem>>, vector<1x1x128x128xf32>
      %57 = vector.shape_cast %56 : vector<1x1x128x128xf32> to vector<128x128xf32>
      %cst_77 = arith.constant dense<0.000000e+00> : vector<1x128xf32>
      %58 = tpu.matmul %arg12, %57, %cst_77 {dimension_numbers = #tpu.dot_dimension_numbers<[1], [0], [0], [1], [0, 0, 1, 1], [], []>} : vector<1x128xf32>, vector<128x128xf32>, vector<1x128xf32> -> vector<1x128xf32>
      %c0_78 = arith.constant 0 : index
      %c0_79 = arith.constant 0 : index
      %c0_80 = arith.constant 0 : index
      %c0_81 = arith.constant 0 : index
      %59 = vector.load %arg5[%c0_78, %c0_79, %c0_80, %c0_81] : memref<2x3x1x128xf32, #tpu.memory_space<vmem>>, vector<1x1x1x128xf32>
      %60 = vector.shape_cast %59 : vector<1x1x1x128xf32> to vector<1x128xf32>
      %61 = arith.addf %58, %60 : vector<1x128xf32>
      %c0_82 = arith.constant 0 : index
      %c1_83 = arith.constant 1 : index
      %c0_84 = arith.constant 0 : index
      %c0_85 = arith.constant 0 : index
      %62 = vector.load %arg3[%c0_82, %c1_83, %c0_84, %c0_85] : memref<2x3x128x128xf32, #tpu.memory_space<vmem>>, vector<1x1x128x128xf32>
      %63 = vector.shape_cast %62 : vector<1x1x128x128xf32> to vector<128x128xf32>
      %cst_86 = arith.constant dense<0.000000e+00> : vector<1x128xf32>
      %64 = tpu.matmul %arg12, %63, %cst_86 {dimension_numbers = #tpu.dot_dimension_numbers<[1], [0], [0], [1], [0, 0, 1, 1], [], []>} : vector<1x128xf32>, vector<128x128xf32>, vector<1x128xf32> -> vector<1x128xf32>
      %c0_87 = arith.constant 0 : index
      %c1_88 = arith.constant 1 : index
      %c0_89 = arith.constant 0 : index
      %c0_90 = arith.constant 0 : index
      %65 = vector.load %arg5[%c0_87, %c1_88, %c0_89, %c0_90] : memref<2x3x1x128xf32, #tpu.memory_space<vmem>>, vector<1x1x1x128xf32>
      %66 = vector.shape_cast %65 : vector<1x1x1x128xf32> to vector<1x128xf32>
      %67 = arith.addf %64, %66 : vector<1x128xf32>
      %c0_91 = arith.constant 0 : index
      %c2_92 = arith.constant 2 : index
      %c0_93 = arith.constant 0 : index
      %c0_94 = arith.constant 0 : index
      %68 = vector.load %arg3[%c0_91, %c2_92, %c0_93, %c0_94] : memref<2x3x128x128xf32, #tpu.memory_space<vmem>>, vector<1x1x128x128xf32>
      %69 = vector.shape_cast %68 : vector<1x1x128x128xf32> to vector<128x128xf32>
      %cst_95 = arith.constant dense<0.000000e+00> : vector<1x128xf32>
      %70 = tpu.matmul %arg12, %69, %cst_95 {dimension_numbers = #tpu.dot_dimension_numbers<[1], [0], [0], [1], [0, 0, 1, 1], [], []>} : vector<1x128xf32>, vector<128x128xf32>, vector<1x128xf32> -> vector<1x128xf32>
      %c0_96 = arith.constant 0 : index
      %c2_97 = arith.constant 2 : index
      %c0_98 = arith.constant 0 : index
      %c0_99 = arith.constant 0 : index
      %71 = vector.load %arg5[%c0_96, %c2_97, %c0_98, %c0_99] : memref<2x3x1x128xf32, #tpu.memory_space<vmem>>, vector<1x1x1x128xf32>
      %72 = vector.shape_cast %71 : vector<1x1x1x128xf32> to vector<1x128xf32>
      %73 = arith.addf %70, %72 : vector<1x128xf32>
      %74 = arith.index_cast %arg11 : i32 to index
      %c0_100 = arith.constant 0 : index
      %75 = vector.load %arg7[%74, %c0_100] : memref<8x128xf32, #tpu.memory_space<vmem>>, vector<1x128xf32>
      %76 = arith.addf %75, %61 : vector<1x128xf32>
      %77 = arith.negf %76 : vector<1x128xf32>
      %78 = math.exp %77 : vector<1x128xf32>
      %cst_101 = arith.constant 1.000000e+00 : f32
      %79 = vector.broadcast %cst_101 : f32 to vector<1x128xf32>
      %80 = arith.addf %79, %78 : vector<1x128xf32>
      %81 = arith.divf %79, %80 : vector<1x128xf32>
      %82 = arith.index_cast %arg11 : i32 to index
      %c0_102 = arith.constant 0 : index
      %83 = vector.load %arg8[%82, %c0_102] : memref<8x128xf32, #tpu.memory_space<vmem>>, vector<1x128xf32>
      %84 = arith.addf %83, %67 : vector<1x128xf32>
      %85 = arith.negf %84 : vector<1x128xf32>
      %86 = math.exp %85 : vector<1x128xf32>
      %cst_103 = arith.constant 1.000000e+00 : f32
      %87 = vector.broadcast %cst_103 : f32 to vector<1x128xf32>
      %88 = arith.addf %87, %86 : vector<1x128xf32>
      %89 = arith.divf %87, %88 : vector<1x128xf32>
      %90 = arith.index_cast %arg11 : i32 to index
      %c0_104 = arith.constant 0 : index
      %91 = vector.load %arg9[%90, %c0_104] : memref<8x128xf32, #tpu.memory_space<vmem>>, vector<1x128xf32>
      %92 = arith.mulf %81, %73 : vector<1x128xf32>
      %93 = arith.addf %91, %92 : vector<1x128xf32>
      %94 = math.tanh %93 : vector<1x128xf32>
      %cst_105 = arith.constant 1.000000e+00 : f32
      %95 = vector.broadcast %cst_105 : f32 to vector<1x128xf32>
      %96 = arith.subf %95, %89 : vector<1x128xf32>
      %97 = arith.mulf %96, %94 : vector<1x128xf32>
      %98 = arith.mulf %89, %arg12 : vector<1x128xf32>
      %99 = arith.addf %97, %98 : vector<1x128xf32>
      %cst_106 = arith.constant 0.999994993 : f32
      %100 = vector.broadcast %cst_106 : f32 to vector<1x128xf32>
      %101 = arith.mulf %99, %100 : vector<1x128xf32>
      %102 = arith.index_cast %arg11 : i32 to index
      %c0_107 = arith.constant 0 : index
      %103 = vector.load %arg10[%102, %c0_107] : memref<8x128xf32, #tpu.memory_space<vmem>>, vector<1x128xf32>
      tpu.vector_store %arg10[%102, %c0_107], %101 {strides = array<i32>} : memref<8x128xf32, #tpu.memory_space<vmem>>, vector<1x128xf32>,
      scf.yield %99 : vector<1x128xf32>
    }
    %c8_i32_32 = arith.constant 8 : i32
    %c0_33 = arith.constant 0 : index
    %c0_34 = arith.constant 0 : index
    %28 = vector.load %arg10[%c0_33, %c0_34] : memref<8x128xf32, #tpu.memory_space<vmem>>, vector<8x128xf32>
    %c1_35 = arith.constant 1 : index
    %c0_36 = arith.constant 0 : index
    %c0_37 = arith.constant 0 : index
    %c0_38 = arith.constant 0 : index
    %29 = vector.load %arg2[%c1_35, %c0_36, %c0_37, %c0_38] : memref<2x3x128x128xf32, #tpu.memory_space<vmem>>, vector<1x1x128x128xf32>
    %30 = vector.shape_cast %29 : vector<1x1x128x128xf32> to vector<128x128xf32>
    %cst_39 = arith.constant dense<0.000000e+00> : vector<8x128xf32>
    %31 = tpu.matmul %28, %30, %cst_39 {dimension_numbers = #tpu.dot_dimension_numbers<[1], [0], [0], [1], [0, 0, 1, 1], [], []>} : vector<8x128xf32>, vector<128x128xf32>, vector<8x128xf32> -> vector<8x128xf32>
    %c1_40 = arith.constant 1 : index
    %c0_41 = arith.constant 0 : index
    %c0_42 = arith.constant 0 : index
    %c0_43 = arith.constant 0 : index
    %32 = vector.load %arg4[%c1_40, %c0_41, %c0_42, %c0_43] : memref<2x3x1x128xf32, #tpu.memory_space<vmem>>, vector<1x1x1x128xf32>
    %33 = vector.shape_cast %32 : vector<1x1x1x128xf32> to vector<1x128xf32>
    %34 = vector.broadcast %33 : vector<1x128xf32> to vector<8x128xf32>
    %35 = arith.addf %31, %34 : vector<8x128xf32>
    %c0_44 = arith.constant 0 : index
    %c0_45 = arith.constant 0 : index
    %36 = vector.load %arg7[%c0_44, %c0_45] : memref<8x128xf32, #tpu.memory_space<vmem>>, vector<8x128xf32>
    tpu.vector_store %arg7[%c0_44, %c0_45], %35 {strides = array<i32>} : memref<8x128xf32, #tpu.memory_space<vmem>>, vector<8x128xf32>,
    %c1_46 = arith.constant 1 : index
    %c1_47 = arith.constant 1 : index
    %c0_48 = arith.constant 0 : index
    %c0_49 = arith.constant 0 : index
    %37 = vector.load %arg2[%c1_46, %c1_47, %c0_48, %c0_49] : memref<2x3x128x128xf32, #tpu.memory_space<vmem>>, vector<1x1x128x128xf32>
    %38 = vector.shape_cast %37 : vector<1x1x128x128xf32> to vector<128x128xf32>
    %cst_50 = arith.constant dense<0.000000e+00> : vector<8x128xf32>
    %39 = tpu.matmul %28, %38, %cst_50 {dimension_numbers = #tpu.dot_dimension_numbers<[1], [0], [0], [1], [0, 0, 1, 1], [], []>} : vector<8x128xf32>, vector<128x128xf32>, vector<8x128xf32> -> vector<8x128xf32>
    %c1_51 = arith.constant 1 : index
    %c1_52 = arith.constant 1 : index
    %c0_53 = arith.constant 0 : index
    %c0_54 = arith.constant 0 : index
    %40 = vector.load %arg4[%c1_51, %c1_52, %c0_53, %c0_54] : memref<2x3x1x128xf32, #tpu.memory_space<vmem>>, vector<1x1x1x128xf32>
    %41 = vector.shape_cast %40 : vector<1x1x1x128xf32> to vector<1x128xf32>
    %42 = vector.broadcast %41 : vector<1x128xf32> to vector<8x128xf32>
    %43 = arith.addf %39, %42 : vector<8x128xf32>
    %c0_55 = arith.constant 0 : index
    %c0_56 = arith.constant 0 : index
    %44 = vector.load %arg8[%c0_55, %c0_56] : memref<8x128xf32, #tpu.memory_space<vmem>>, vector<8x128xf32>
    tpu.vector_store %arg8[%c0_55, %c0_56], %43 {strides = array<i32>} : memref<8x128xf32, #tpu.memory_space<vmem>>, vector<8x128xf32>,
    %c1_57 = arith.constant 1 : index
    %c2_58 = arith.constant 2 : index
    %c0_59 = arith.constant 0 : index
    %c0_60 = arith.constant 0 : index
    %45 = vector.load %arg2[%c1_57, %c2_58, %c0_59, %c0_60] : memref<2x3x128x128xf32, #tpu.memory_space<vmem>>, vector<1x1x128x128xf32>
    %46 = vector.shape_cast %45 : vector<1x1x128x128xf32> to vector<128x128xf32>
    %cst_61 = arith.constant dense<0.000000e+00> : vector<8x128xf32>
    %47 = tpu.matmul %28, %46, %cst_61 {dimension_numbers = #tpu.dot_dimension_numbers<[1], [0], [0], [1], [0, 0, 1, 1], [], []>} : vector<8x128xf32>, vector<128x128xf32>, vector<8x128xf32> -> vector<8x128xf32>
    %c1_62 = arith.constant 1 : index
    %c2_63 = arith.constant 2 : index
    %c0_64 = arith.constant 0 : index
    %c0_65 = arith.constant 0 : index
    %48 = vector.load %arg4[%c1_62, %c2_63, %c0_64, %c0_65] : memref<2x3x1x128xf32, #tpu.memory_space<vmem>>, vector<1x1x1x128xf32>
    %49 = vector.shape_cast %48 : vector<1x1x1x128xf32> to vector<1x128xf32>
    %50 = vector.broadcast %49 : vector<1x128xf32> to vector<8x128xf32>
    %51 = arith.addf %47, %50 : vector<8x128xf32>
    %c0_66 = arith.constant 0 : index
    %c0_67 = arith.constant 0 : index
    %52 = vector.load %arg9[%c0_66, %c0_67] : memref<8x128xf32, #tpu.memory_space<vmem>>, vector<8x128xf32>
    tpu.vector_store %arg9[%c0_66, %c0_67], %51 {strides = array<i32>} : memref<8x128xf32, #tpu.memory_space<vmem>>, vector<8x128xf32>,
    %cst_68 = arith.constant 0.000000e+00 : f32
    %53 = vector.broadcast %cst_68 : f32 to vector<1x128xf32>
    %c0_i32_69 = arith.constant 0 : i32
    %c8_i32_70 = arith.constant 8 : i32
    %54 = arith.addi %c0_i32_69, %c8_i32_70 : i32
    %c1_i32_71 = arith.constant 1 : i32
    %55 = scf.for %arg11 = %c0_i32_69 to %54 step %c1_i32_71 iter_args(%arg12 = %53) -> (vector<1x128xf32>)  : i32 {
      %c1_73 = arith.constant 1 : index
      %c0_74 = arith.constant 0 : index
      %c0_75 = arith.constant 0 : index
      %c0_76 = arith.constant 0 : index
      %56 = vector.load %arg3[%c1_73, %c0_74, %c0_75, %c0_76] : memref<2x3x128x128xf32, #tpu.memory_space<vmem>>, vector<1x1x128x128xf32>
      %57 = vector.shape_cast %56 : vector<1x1x128x128xf32> to vector<128x128xf32>
      %cst_77 = arith.constant dense<0.000000e+00> : vector<1x128xf32>
      %58 = tpu.matmul %arg12, %57, %cst_77 {dimension_numbers = #tpu.dot_dimension_numbers<[1], [0], [0], [1], [0, 0, 1, 1], [], []>} : vector<1x128xf32>, vector<128x128xf32>, vector<1x128xf32> -> vector<1x128xf32>
      %c1_78 = arith.constant 1 : index
      %c0_79 = arith.constant 0 : index
      %c0_80 = arith.constant 0 : index
      %c0_81 = arith.constant 0 : index
      %59 = vector.load %arg5[%c1_78, %c0_79, %c0_80, %c0_81] : memref<2x3x1x128xf32, #tpu.memory_space<vmem>>, vector<1x1x1x128xf32>
      %60 = vector.shape_cast %59 : vector<1x1x1x128xf32> to vector<1x128xf32>
      %61 = arith.addf %58, %60 : vector<1x128xf32>
      %c1_82 = arith.constant 1 : index
      %c1_83 = arith.constant 1 : index
      %c0_84 = arith.constant 0 : index
      %c0_85 = arith.constant 0 : index
      %62 = vector.load %arg3[%c1_82, %c1_83, %c0_84, %c0_85] : memref<2x3x128x128xf32, #tpu.memory_space<vmem>>, vector<1x1x128x128xf32>
      %63 = vector.shape_cast %62 : vector<1x1x128x128xf32> to vector<128x128xf32>
      %cst_86 = arith.constant dense<0.000000e+00> : vector<1x128xf32>
      %64 = tpu.matmul %arg12, %63, %cst_86 {dimension_numbers = #tpu.dot_dimension_numbers<[1], [0], [0], [1], [0, 0, 1, 1], [], []>} : vector<1x128xf32>, vector<128x128xf32>, vector<1x128xf32> -> vector<1x128xf32>
      %c1_87 = arith.constant 1 : index
      %c1_88 = arith.constant 1 : index
      %c0_89 = arith.constant 0 : index
      %c0_90 = arith.constant 0 : index
      %65 = vector.load %arg5[%c1_87, %c1_88, %c0_89, %c0_90] : memref<2x3x1x128xf32, #tpu.memory_space<vmem>>, vector<1x1x1x128xf32>
      %66 = vector.shape_cast %65 : vector<1x1x1x128xf32> to vector<1x128xf32>
      %67 = arith.addf %64, %66 : vector<1x128xf32>
      %c1_91 = arith.constant 1 : index
      %c2_92 = arith.constant 2 : index
      %c0_93 = arith.constant 0 : index
      %c0_94 = arith.constant 0 : index
      %68 = vector.load %arg3[%c1_91, %c2_92, %c0_93, %c0_94] : memref<2x3x128x128xf32, #tpu.memory_space<vmem>>, vector<1x1x128x128xf32>
      %69 = vector.shape_cast %68 : vector<1x1x128x128xf32> to vector<128x128xf32>
      %cst_95 = arith.constant dense<0.000000e+00> : vector<1x128xf32>
      %70 = tpu.matmul %arg12, %69, %cst_95 {dimension_numbers = #tpu.dot_dimension_numbers<[1], [0], [0], [1], [0, 0, 1, 1], [], []>} : vector<1x128xf32>, vector<128x128xf32>, vector<1x128xf32> -> vector<1x128xf32>
      %c1_96 = arith.constant 1 : index
      %c2_97 = arith.constant 2 : index
      %c0_98 = arith.constant 0 : index
      %c0_99 = arith.constant 0 : index
      %71 = vector.load %arg5[%c1_96, %c2_97, %c0_98, %c0_99] : memref<2x3x1x128xf32, #tpu.memory_space<vmem>>, vector<1x1x1x128xf32>
      %72 = vector.shape_cast %71 : vector<1x1x1x128xf32> to vector<1x128xf32>
      %73 = arith.addf %70, %72 : vector<1x128xf32>
      %74 = arith.index_cast %arg11 : i32 to index
      %c0_100 = arith.constant 0 : index
      %75 = vector.load %arg7[%74, %c0_100] : memref<8x128xf32, #tpu.memory_space<vmem>>, vector<1x128xf32>
      %76 = arith.addf %75, %61 : vector<1x128xf32>
      %77 = arith.negf %76 : vector<1x128xf32>
      %78 = math.exp %77 : vector<1x128xf32>
      %cst_101 = arith.constant 1.000000e+00 : f32
      %79 = vector.broadcast %cst_101 : f32 to vector<1x128xf32>
      %80 = arith.addf %79, %78 : vector<1x128xf32>
      %81 = arith.divf %79, %80 : vector<1x128xf32>
      %82 = arith.index_cast %arg11 : i32 to index
      %c0_102 = arith.constant 0 : index
      %83 = vector.load %arg8[%82, %c0_102] : memref<8x128xf32, #tpu.memory_space<vmem>>, vector<1x128xf32>
      %84 = arith.addf %83, %67 : vector<1x128xf32>
      %85 = arith.negf %84 : vector<1x128xf32>
      %86 = math.exp %85 : vector<1x128xf32>
      %cst_103 = arith.constant 1.000000e+00 : f32
      %87 = vector.broadcast %cst_103 : f32 to vector<1x128xf32>
      %88 = arith.addf %87, %86 : vector<1x128xf32>
      %89 = arith.divf %87, %88 : vector<1x128xf32>
      %90 = arith.index_cast %arg11 : i32 to index
      %c0_104 = arith.constant 0 : index
      %91 = vector.load %arg9[%90, %c0_104] : memref<8x128xf32, #tpu.memory_space<vmem>>, vector<1x128xf32>
      %92 = arith.mulf %81, %73 : vector<1x128xf32>
      %93 = arith.addf %91, %92 : vector<1x128xf32>
      %94 = math.tanh %93 : vector<1x128xf32>
      %cst_105 = arith.constant 1.000000e+00 : f32
      %95 = vector.broadcast %cst_105 : f32 to vector<1x128xf32>
      %96 = arith.subf %95, %89 : vector<1x128xf32>
      %97 = arith.mulf %96, %94 : vector<1x128xf32>
      %98 = arith.mulf %89, %arg12 : vector<1x128xf32>
      %99 = arith.addf %97, %98 : vector<1x128xf32>
      %cst_106 = arith.constant 0.999994993 : f32
      %100 = vector.broadcast %cst_106 : f32 to vector<1x128xf32>
      %101 = arith.mulf %99, %100 : vector<1x128xf32>
      %102 = arith.index_cast %arg11 : i32 to index
      %c0_107 = arith.constant 0 : index
      %103 = vector.load %arg1[%102, %c0_107] : memref<8x128xf32, #tpu.memory_space<vmem>>, vector<1x128xf32>
      %104 = arith.addf %101, %103 : vector<1x128xf32>
      %105 = arith.index_cast %arg11 : i32 to index
      %c0_108 = arith.constant 0 : index
      %106 = vector.load %arg6[%105, %c0_108] : memref<8x128xf32, #tpu.memory_space<vmem>>, vector<1x128xf32>
      tpu.vector_store %arg6[%105, %c0_108], %104 {strides = array<i32>} : memref<8x128xf32, #tpu.memory_space<vmem>>, vector<1x128xf32>,
      scf.yield %99 : vector<1x128xf32>
    }
    %c8_i32_72 = arith.constant 8 : i32
    return
  }
  func.func @transform_0(%arg0: i32) -> (i32, i32) {
    %c0_i32 = arith.constant 0 : i32
    %c0_i32_0 = arith.constant 0 : i32
    %c0_i32_1 = arith.constant 0 : i32
    return %c0_i32, %c0_i32_0 : i32, i32
  }
  func.func @transform_1(%arg0: i32) -> (i32, i32, i32, i32) {
    %c0_i32 = arith.constant 0 : i32
    %c0_i32_0 = arith.constant 0 : i32
    %c0_i32_1 = arith.constant 0 : i32
    %c0_i32_2 = arith.constant 0 : i32
    %c0_i32_3 = arith.constant 0 : i32
    return %c0_i32, %c0_i32_0, %c0_i32_1, %c0_i32_2 : i32, i32, i32, i32
  }
  func.func @transform_2(%arg0: i32) -> (i32, i32, i32, i32) {
    %c0_i32 = arith.constant 0 : i32
    %c0_i32_0 = arith.constant 0 : i32
    %c0_i32_1 = arith.constant 0 : i32
    %c0_i32_2 = arith.constant 0 : i32
    %c0_i32_3 = arith.constant 0 : i32
    return %c0_i32, %c0_i32_0, %c0_i32_1, %c0_i32_2 : i32, i32, i32, i32
  }
  func.func @transform_3(%arg0: i32) -> (i32, i32, i32, i32) {
    %c0_i32 = arith.constant 0 : i32
    %c0_i32_0 = arith.constant 0 : i32
    %c0_i32_1 = arith.constant 0 : i32
    %c0_i32_2 = arith.constant 0 : i32
    %c0_i32_3 = arith.constant 0 : i32
    return %c0_i32, %c0_i32_0, %c0_i32_1, %c0_i32_2 : i32, i32, i32, i32
  }
  func.func @transform_4(%arg0: i32) -> (i32, i32, i32, i32) {
    %c0_i32 = arith.constant 0 : i32
    %c0_i32_0 = arith.constant 0 : i32
    %c0_i32_1 = arith.constant 0 : i32
    %c0_i32_2 = arith.constant 0 : i32
    %c0_i32_3 = arith.constant 0 : i32
    return %c0_i32, %c0_i32_0, %c0_i32_1, %c0_i32_2 : i32, i32, i32, i32
  }
  func.func @transform_5(%arg0: i32) -> (i32, i32) {
    %c0_i32 = arith.constant 0 : i32
    %c0_i32_0 = arith.constant 0 : i32
    %c0_i32_1 = arith.constant 0 : i32
    return %c0_i32, %c0_i32_0 : i32, i32
  }
}

module attributes {stable_mosaic.version = 11 : i64} {
  func.func @kernel(%arg0: i32, %arg1: memref<3x16x64xbf16, #tpu.memory_space<vmem>>, %arg2: memref<3x64x128xbf16, #tpu.memory_space<vmem>>, %arg3: memref<1x128xf32, #tpu.memory_space<vmem>>, %arg4: memref<16x128xf32, #tpu.memory_space<vmem>>) attributes {dimension_semantics = [#tpu.dimension_semantics<parallel>], iteration_bounds = array<i64: 1>, scalar_prefetch = 0 : i64, scratch_operands = 0 : i64, tpu.core_type = #tpu.core_type<tc>, window_params = [{transform_indices = @transform_0, window_bounds = array<i64: 3, 16, 64>}, {pipeline_mode = #tpu.pipeline_mode<synchronous>, transform_indices = @transform_1, window_bounds = array<i64: 3, 64, 128>}, {pipeline_mode = #tpu.pipeline_mode<synchronous>, transform_indices = @transform_2, window_bounds = array<i64: 1, 128>}, {transform_indices = @transform_3, window_bounds = array<i64: 16, 128>}]} {
    %c0 = arith.constant 0 : index
    %c0_0 = arith.constant 0 : index
    %0 = vector.load %arg3[%c0, %c0_0] : memref<1x128xf32, #tpu.memory_space<vmem>>, vector<1x128xf32>
    %c0_1 = arith.constant 0 : index
    %c0_2 = arith.constant 0 : index
    %c0_3 = arith.constant 0 : index
    %1 = vector.load %arg1[%c0_1, %c0_2, %c0_3] : memref<3x16x64xbf16, #tpu.memory_space<vmem>>, vector<1x16x64xbf16>
    %2 = vector.shape_cast %1 : vector<1x16x64xbf16> to vector<16x64xbf16>
    %c0_4 = arith.constant 0 : index
    %c0_5 = arith.constant 0 : index
    %c0_6 = arith.constant 0 : index
    %3 = vector.load %arg2[%c0_4, %c0_5, %c0_6] : memref<3x64x128xbf16, #tpu.memory_space<vmem>>, vector<1x64x128xbf16>
    %4 = vector.shape_cast %3 : vector<1x64x128xbf16> to vector<64x128xbf16>
    %cst = arith.constant dense<0.000000e+00> : vector<16x128xf32>
    %5 = tpu.matmul %2, %4, %cst {dimension_numbers = #tpu.dot_dimension_numbers<[1], [0], [0], [1], [0, 0, 1, 1], [], []>} : vector<16x64xbf16>, vector<64x128xbf16>, vector<16x128xf32> -> vector<16x128xf32>
    %6 = vector.broadcast %0 : vector<1x128xf32> to vector<16x128xf32>
    %7 = arith.addf %6, %5 : vector<16x128xf32>
    %c1 = arith.constant 1 : index
    %c0_7 = arith.constant 0 : index
    %c0_8 = arith.constant 0 : index
    %8 = vector.load %arg1[%c1, %c0_7, %c0_8] : memref<3x16x64xbf16, #tpu.memory_space<vmem>>, vector<1x16x64xbf16>
    %9 = vector.shape_cast %8 : vector<1x16x64xbf16> to vector<16x64xbf16>
    %c1_9 = arith.constant 1 : index
    %c0_10 = arith.constant 0 : index
    %c0_11 = arith.constant 0 : index
    %10 = vector.load %arg2[%c1_9, %c0_10, %c0_11] : memref<3x64x128xbf16, #tpu.memory_space<vmem>>, vector<1x64x128xbf16>
    %11 = vector.shape_cast %10 : vector<1x64x128xbf16> to vector<64x128xbf16>
    %cst_12 = arith.constant dense<0.000000e+00> : vector<16x128xf32>
    %12 = tpu.matmul %9, %11, %cst_12 {dimension_numbers = #tpu.dot_dimension_numbers<[1], [0], [0], [1], [0, 0, 1, 1], [], []>} : vector<16x64xbf16>, vector<64x128xbf16>, vector<16x128xf32> -> vector<16x128xf32>
    %13 = arith.addf %7, %12 : vector<16x128xf32>
    %c2 = arith.constant 2 : index
    %c0_13 = arith.constant 0 : index
    %c0_14 = arith.constant 0 : index
    %14 = vector.load %arg1[%c2, %c0_13, %c0_14] : memref<3x16x64xbf16, #tpu.memory_space<vmem>>, vector<1x16x64xbf16>
    %15 = vector.shape_cast %14 : vector<1x16x64xbf16> to vector<16x64xbf16>
    %c2_15 = arith.constant 2 : index
    %c0_16 = arith.constant 0 : index
    %c0_17 = arith.constant 0 : index
    %16 = vector.load %arg2[%c2_15, %c0_16, %c0_17] : memref<3x64x128xbf16, #tpu.memory_space<vmem>>, vector<1x64x128xbf16>
    %17 = vector.shape_cast %16 : vector<1x64x128xbf16> to vector<64x128xbf16>
    %cst_18 = arith.constant dense<0.000000e+00> : vector<16x128xf32>
    %18 = tpu.matmul %15, %17, %cst_18 {dimension_numbers = #tpu.dot_dimension_numbers<[1], [0], [0], [1], [0, 0, 1, 1], [], []>} : vector<16x64xbf16>, vector<64x128xbf16>, vector<16x128xf32> -> vector<16x128xf32>
    %19 = arith.addf %13, %18 : vector<16x128xf32>
    %cst_19 = arith.constant 0.000000e+00 : f32
    %20 = vector.broadcast %cst_19 : f32 to vector<16x128xf32>
    %21 = arith.cmpf oge, %19, %20 : vector<16x128xf32>
    %cst_20 = arith.constant 2.000000e-01 : f32
    %22 = vector.broadcast %cst_20 : f32 to vector<16x128xf32>
    %23 = arith.mulf %22, %19 : vector<16x128xf32>
    %24 = arith.select %21, %19, %23 : vector<16x128xi1>, vector<16x128xf32>
    %c0_21 = arith.constant 0 : index
    %c0_22 = arith.constant 0 : index
    %25 = vector.load %arg4[%c0_21, %c0_22] : memref<16x128xf32, #tpu.memory_space<vmem>>, vector<16x128xf32>
    tpu.vector_store %arg4[%c0_21, %c0_22], %24 {strides = array<i32>} : memref<16x128xf32, #tpu.memory_space<vmem>>, vector<16x128xf32>,
    return
  }
  func.func @transform_0(%arg0: i32) -> (i32, i32, i32) {
    %c0_i32 = arith.constant 0 : i32
    %c0_i32_0 = arith.constant 0 : i32
    %c0_i32_1 = arith.constant 0 : i32
    return %c0_i32, %arg0, %c0_i32_0 : i32, i32, i32
  }
  func.func @transform_1(%arg0: i32) -> (i32, i32, i32) {
    %c0_i32 = arith.constant 0 : i32
    %c0_i32_0 = arith.constant 0 : i32
    %c0_i32_1 = arith.constant 0 : i32
    %c0_i32_2 = arith.constant 0 : i32
    return %c0_i32, %c0_i32_0, %c0_i32_1 : i32, i32, i32
  }
  func.func @transform_2(%arg0: i32) -> (i32, i32) {
    %c0_i32 = arith.constant 0 : i32
    %c0_i32_0 = arith.constant 0 : i32
    %c0_i32_1 = arith.constant 0 : i32
    return %c0_i32, %c0_i32_0 : i32, i32
  }
  func.func @transform_3(%arg0: i32) -> (i32, i32) {
    %c0_i32 = arith.constant 0 : i32
    %c0_i32_0 = arith.constant 0 : i32
    return %arg0, %c0_i32 : i32, i32
  }
}

module attributes {stable_mosaic.version = 11 : i64} {
  func.func @kernel(%arg0: i32, %arg1: memref<3x16x128xbf16, #tpu.memory_space<vmem>>, %arg2: memref<3x128x896xbf16, #tpu.memory_space<vmem>>, %arg3: memref<1x896xf32, #tpu.memory_space<vmem>>, %arg4: memref<16x896xf32, #tpu.memory_space<vmem>>, %arg5: memref<6xf32, #tpu.memory_space<smem>>, %arg6: memref<16x896xf32, #tpu.memory_space<vmem>>) attributes {dimension_semantics = [#tpu.dimension_semantics<parallel>], iteration_bounds = array<i64: 1>, scalar_prefetch = 0 : i64, scratch_operands = 0 : i64, tpu.core_type = #tpu.core_type<tc>, window_params = [{transform_indices = @transform_0, window_bounds = array<i64: 3, 16, 128>}, {pipeline_mode = #tpu.pipeline_mode<synchronous>, transform_indices = @transform_1, window_bounds = array<i64: 3, 128, 896>}, {pipeline_mode = #tpu.pipeline_mode<synchronous>, transform_indices = @transform_2, window_bounds = array<i64: 1, 896>}, {transform_indices = @transform_3, window_bounds = array<i64: 16, 896>}, {transform_indices = @transform_4, window_bounds = array<i64: 6>}, {transform_indices = @transform_5, window_bounds = array<i64: 16, 896>}]} {
    %c0 = arith.constant 0 : index
    %c0_0 = arith.constant 0 : index
    %0 = vector.load %arg3[%c0, %c0_0] : memref<1x896xf32, #tpu.memory_space<vmem>>, vector<1x896xf32>
    %c0_1 = arith.constant 0 : index
    %c0_2 = arith.constant 0 : index
    %c0_3 = arith.constant 0 : index
    %1 = vector.load %arg1[%c0_1, %c0_2, %c0_3] : memref<3x16x128xbf16, #tpu.memory_space<vmem>>, vector<1x16x128xbf16>
    %2 = vector.shape_cast %1 : vector<1x16x128xbf16> to vector<16x128xbf16>
    %c0_4 = arith.constant 0 : index
    %c0_5 = arith.constant 0 : index
    %c0_6 = arith.constant 0 : index
    %3 = vector.load %arg2[%c0_4, %c0_5, %c0_6] : memref<3x128x896xbf16, #tpu.memory_space<vmem>>, vector<1x128x896xbf16>
    %4 = vector.shape_cast %3 : vector<1x128x896xbf16> to vector<128x896xbf16>
    %cst = arith.constant dense<0.000000e+00> : vector<16x896xf32>
    %5 = tpu.matmul %2, %4, %cst {dimension_numbers = #tpu.dot_dimension_numbers<[1], [0], [0], [1], [0, 0, 1, 1], [], []>} : vector<16x128xbf16>, vector<128x896xbf16>, vector<16x896xf32> -> vector<16x896xf32>
    %6 = vector.broadcast %0 : vector<1x896xf32> to vector<16x896xf32>
    %7 = arith.addf %6, %5 : vector<16x896xf32>
    %c1 = arith.constant 1 : index
    %c0_7 = arith.constant 0 : index
    %c0_8 = arith.constant 0 : index
    %8 = vector.load %arg1[%c1, %c0_7, %c0_8] : memref<3x16x128xbf16, #tpu.memory_space<vmem>>, vector<1x16x128xbf16>
    %9 = vector.shape_cast %8 : vector<1x16x128xbf16> to vector<16x128xbf16>
    %c1_9 = arith.constant 1 : index
    %c0_10 = arith.constant 0 : index
    %c0_11 = arith.constant 0 : index
    %10 = vector.load %arg2[%c1_9, %c0_10, %c0_11] : memref<3x128x896xbf16, #tpu.memory_space<vmem>>, vector<1x128x896xbf16>
    %11 = vector.shape_cast %10 : vector<1x128x896xbf16> to vector<128x896xbf16>
    %cst_12 = arith.constant dense<0.000000e+00> : vector<16x896xf32>
    %12 = tpu.matmul %9, %11, %cst_12 {dimension_numbers = #tpu.dot_dimension_numbers<[1], [0], [0], [1], [0, 0, 1, 1], [], []>} : vector<16x128xbf16>, vector<128x896xbf16>, vector<16x896xf32> -> vector<16x896xf32>
    %13 = arith.addf %7, %12 : vector<16x896xf32>
    %c2 = arith.constant 2 : index
    %c0_13 = arith.constant 0 : index
    %c0_14 = arith.constant 0 : index
    %14 = vector.load %arg1[%c2, %c0_13, %c0_14] : memref<3x16x128xbf16, #tpu.memory_space<vmem>>, vector<1x16x128xbf16>
    %15 = vector.shape_cast %14 : vector<1x16x128xbf16> to vector<16x128xbf16>
    %c2_15 = arith.constant 2 : index
    %c0_16 = arith.constant 0 : index
    %c0_17 = arith.constant 0 : index
    %16 = vector.load %arg2[%c2_15, %c0_16, %c0_17] : memref<3x128x896xbf16, #tpu.memory_space<vmem>>, vector<1x128x896xbf16>
    %17 = vector.shape_cast %16 : vector<1x128x896xbf16> to vector<128x896xbf16>
    %cst_18 = arith.constant dense<0.000000e+00> : vector<16x896xf32>
    %18 = tpu.matmul %15, %17, %cst_18 {dimension_numbers = #tpu.dot_dimension_numbers<[1], [0], [0], [1], [0, 0, 1, 1], [], []>} : vector<16x128xbf16>, vector<128x896xbf16>, vector<16x896xf32> -> vector<16x896xf32>
    %19 = arith.addf %13, %18 : vector<16x896xf32>
    %c0_19 = arith.constant 0 : index
    %c0_20 = arith.constant 0 : index
    %20 = vector.load %arg4[%c0_19, %c0_20] : memref<16x896xf32, #tpu.memory_space<vmem>>, vector<16x896xf32>
    %21 = arith.addf %19, %20 : vector<16x896xf32>
    %c0_21 = arith.constant 0 : index
    %22 = memref.load %arg5[%c0_21] : memref<6xf32, #tpu.memory_space<smem>>
    %23 = vector.broadcast %22 : f32 to vector<16x896xf32>
    %24 = arith.mulf %23, %21 : vector<16x896xf32>
    %c1_22 = arith.constant 1 : index
    %25 = memref.load %arg5[%c1_22] : memref<6xf32, #tpu.memory_space<smem>>
    %26 = vector.broadcast %25 : f32 to vector<16x896xf32>
    %27 = arith.addf %24, %26 : vector<16x896xf32>
    %28 = arith.negf %27 : vector<16x896xf32>
    %29 = math.exp %28 : vector<16x896xf32>
    %cst_23 = arith.constant 1.000000e+00 : f32
    %30 = vector.broadcast %cst_23 : f32 to vector<16x896xf32>
    %31 = arith.addf %30, %29 : vector<16x896xf32>
    %32 = arith.divf %30, %31 : vector<16x896xf32>
    %c2_24 = arith.constant 2 : index
    %33 = memref.load %arg5[%c2_24] : memref<6xf32, #tpu.memory_space<smem>>
    %34 = vector.broadcast %33 : f32 to vector<16x896xf32>
    %35 = arith.mulf %34, %21 : vector<16x896xf32>
    %c3 = arith.constant 3 : index
    %36 = memref.load %arg5[%c3] : memref<6xf32, #tpu.memory_space<smem>>
    %37 = vector.broadcast %36 : f32 to vector<16x896xf32>
    %38 = arith.addf %35, %37 : vector<16x896xf32>
    %39 = math.tanh %38 : vector<16x896xf32>
    %c4 = arith.constant 4 : index
    %40 = memref.load %arg5[%c4] : memref<6xf32, #tpu.memory_space<smem>>
    %41 = arith.mulf %32, %39 : vector<16x896xf32>
    %42 = vector.broadcast %40 : f32 to vector<16x896xf32>
    %43 = arith.mulf %42, %41 : vector<16x896xf32>
    %c5 = arith.constant 5 : index
    %44 = memref.load %arg5[%c5] : memref<6xf32, #tpu.memory_space<smem>>
    %45 = vector.broadcast %44 : f32 to vector<16x896xf32>
    %46 = arith.addf %43, %45 : vector<16x896xf32>
    %47 = arith.negf %46 : vector<16x896xf32>
    %48 = math.exp %47 : vector<16x896xf32>
    %cst_25 = arith.constant 1.000000e+00 : f32
    %49 = vector.broadcast %cst_25 : f32 to vector<16x896xf32>
    %50 = arith.addf %49, %48 : vector<16x896xf32>
    %51 = arith.divf %49, %50 : vector<16x896xf32>
    %52 = arith.mulf %19, %51 : vector<16x896xf32>
    %53 = arith.addf %52, %20 : vector<16x896xf32>
    %c0_26 = arith.constant 0 : index
    %c0_27 = arith.constant 0 : index
    %54 = vector.load %arg6[%c0_26, %c0_27] : memref<16x896xf32, #tpu.memory_space<vmem>>, vector<16x896xf32>
    tpu.vector_store %arg6[%c0_26, %c0_27], %53 {strides = array<i32>} : memref<16x896xf32, #tpu.memory_space<vmem>>, vector<16x896xf32>,
    return
  }
  func.func @transform_0(%arg0: i32) -> (i32, i32, i32) {
    %c0_i32 = arith.constant 0 : i32
    %c0_i32_0 = arith.constant 0 : i32
    %c0_i32_1 = arith.constant 0 : i32
    return %c0_i32, %arg0, %c0_i32_0 : i32, i32, i32
  }
  func.func @transform_1(%arg0: i32) -> (i32, i32, i32) {
    %c0_i32 = arith.constant 0 : i32
    %c0_i32_0 = arith.constant 0 : i32
    %c0_i32_1 = arith.constant 0 : i32
    %c0_i32_2 = arith.constant 0 : i32
    return %c0_i32, %c0_i32_0, %c0_i32_1 : i32, i32, i32
  }
  func.func @transform_2(%arg0: i32) -> (i32, i32) {
    %c0_i32 = arith.constant 0 : i32
    %c0_i32_0 = arith.constant 0 : i32
    %c0_i32_1 = arith.constant 0 : i32
    return %c0_i32, %c0_i32_0 : i32, i32
  }
  func.func @transform_3(%arg0: i32) -> (i32, i32) {
    %c0_i32 = arith.constant 0 : i32
    %c0_i32_0 = arith.constant 0 : i32
    return %arg0, %c0_i32 : i32, i32
  }
  func.func @transform_4(%arg0: i32) -> i32 {
    %c0_i32 = arith.constant 0 : i32
    %c0_i32_0 = arith.constant 0 : i32
    return %c0_i32 : i32
  }
  func.func @transform_5(%arg0: i32) -> (i32, i32) {
    %c0_i32 = arith.constant 0 : i32
    %c0_i32_0 = arith.constant 0 : i32
    return %arg0, %c0_i32 : i32, i32
  }
}

</mosaic_0001>

<llo_original>
// kernel: generator_forward.10
$region0: #{generator_forward.10}
  #allocation0 [shape = 'u32[]', space=smem, size = 0x4, offset = 0x4, fixed_abs, tag = 'smem constant byte address 0x4 - core index']
  #allocation1 [shape = 'u32[144,128]{1,0:T(1,128)}', space=vmem, size = 0x12000, scoped, tag = 'internal scratch']
  %s0 = inlined_call_operand.vmem [shape: bf16[1,16,896], index: 0, kind: input, shape index: {}]
  %s1 = inlined_call_operand.hbm [shape: bf16[1,896,128], index: 1, kind: input, shape index: {}]
  %s2 = inlined_call_operand.vmem [shape: f32[1,128], index: 2, kind: input, shape index: {}]
  %s3 = inlined_call_operand.vmem [shape: f32[16,128], index: 3, kind: output, shape index: {}]
  %s4 = sld [smem:[#allocation0]]
  $region26: #{generator_forward.10} parent=0
    _
  %s6 = ssub.s32 1, %s4
  %s7 = scalar_select 0, %s6, %s4
  $region1: #{generator_forward.10} parent=0
    #allocation2 [shape = 'u8[229376]{0}', space=vmem, size = 0x38000, scoped, tag = 'input window, operand 1, single buffered']
    #allocation3 [shape = 's32[1]{0}', space=sflag, size = 0x4, scoped, tag = 'scoped memory for generator_forward.10']
    %8 = vsyncpa [#allocation3], 0
    // Predicated region
    $region2: #{generator_forward.10} parent=1 // pred_check
      _
    $region3: #{generator_forward.10} parent=1 // pred_check_branch
      %10 = sbr.rel (0) target = $region5
    $region4: #{generator_forward.10} parent=1 // pred_region
      _
    $region5: #{generator_forward.10} parent=1 // pred_fallthru
      _
    // Predicated region
    $region6: #{generator_forward.10} parent=1 // pred_check
      _
    $region7: #{generator_forward.10} parent=1 // pred_check_branch
      %12 = sbr.rel (0) target = $region9
    $region8: #{generator_forward.10} parent=1 // pred_region
      %s14 = ssub.s32 7168, 7168
      %15 = vsyncadd [#allocation3], %s14
      %s16 = sshll.u32 [#allocation2], 4
      %s17 = int_to_ptr.vmem [resolvable:$true] %s16
      %22 = dma.hbm_to_vmem [thread:$0]  %s1, 7168, %s17, [#allocation3], 64, 64, 4
    $region9: #{generator_forward.10} parent=1 // pred_fallthru
      _
    // Predicated region
    $region10: #{generator_forward.10} parent=1 // pred_check
      _
    $region11: #{generator_forward.10} parent=1 // pred_check_branch
      %24 = sbr.rel (0) target = $region13
    $region12: #{generator_forward.10} parent=1 // pred_region
      _
    $region13: #{generator_forward.10} parent=1 // pred_fallthru
      _
    // Predicated region
    $region14: #{generator_forward.10} parent=1 // pred_check
      _
    $region15: #{generator_forward.10} parent=1 // pred_check_branch
      %26 = sbr.rel (0) target = $region17
    $region16: #{generator_forward.10} parent=1 // pred_region
      %27 = dma.done [#allocation3], 7168
    $region17: #{generator_forward.10} parent=1 // pred_fallthru
      _
    %v29 = vld [vmem:[%s2] sm:$0x1]
    %v30 = vld [vmem:[%s0] sm:$0xff]
    %v31 = vld [vmem:[%s0 + $0x8] sm:$0xff]
    %v32 = vld [vmem:[%s0 + $0x10] sm:$0xff]
    %v33 = vld [vmem:[%s0 + $0x18] sm:$0xf]
    %v34 = vld [vmem:[%s0 + $0x1c] sm:$0xff]
    %v35 = vld [vmem:[%s0 + $0x24] sm:$0xff]
    %v36 = vld [vmem:[%s0 + $0x2c] sm:$0xff]
    %v37 = vld [vmem:[%s0 + $0x34] sm:$0xf]
    %v38 = vld [vmem:[#allocation2] sm:$0xf]
    %v39 = vld [vmem:[#allocation2 + $0x4] sm:$0xf]
    %v40 = vld [vmem:[#allocation2 + $0x8] sm:$0xf]
    %v41 = vld [vmem:[#allocation2 + $0xc] sm:$0xf]
    %v42 = vld [vmem:[#allocation2 + $0x10] sm:$0xf]
    %v43 = vld [vmem:[#allocation2 + $0x14] sm:$0xf]
    %v44 = vld [vmem:[#allocation2 + $0x18] sm:$0xf]
    %v45 = vld [vmem:[#allocation2 + $0x1c] sm:$0xf]
    %v46 = vld [vmem:[#allocation2 + $0x20] sm:$0xf]
    %v47 = vld [vmem:[#allocation2 + $0x24] sm:$0xf]
    %v48 = vld [vmem:[#allocation2 + $0x28] sm:$0xf]
    %v49 = vld [vmem:[#allocation2 + $0x2c] sm:$0xf]
    %v50 = vld [vmem:[#allocation2 + $0x30] sm:$0xf]
    %v51 = vld [vmem:[#allocation2 + $0x34] sm:$0xf]
    %v52 = vld [vmem:[#allocation2 + $0x38] sm:$0xf]
    %v53 = vld [vmem:[#allocation2 + $0x3c] sm:$0xf]
    %v54 = vld [vmem:[#allocation2 + $0x40] sm:$0xf]
    %v55 = vld [vmem:[#allocation2 + $0x44] sm:$0xf]
    %v56 = vld [vmem:[#allocation2 + $0x48] sm:$0xf]
    %v57 = vld [vmem:[#allocation2 + $0x4c] sm:$0xf]
    %v58 = vld [vmem:[#allocation2 + $0x50] sm:$0xf]
    %v59 = vld [vmem:[#allocation2 + $0x54] sm:$0xf]
    %v60 = vld [vmem:[#allocation2 + $0x58] sm:$0xf]
    %v61 = vld [vmem:[#allocation2 + $0x5c] sm:$0xf]
    %v62 = vld [vmem:[#allocation2 + $0x60] sm:$0xf]
    %v63 = vld [vmem:[#allocation2 + $0x64] sm:$0xf]
    %v64 = vld [vmem:[#allocation2 + $0x68] sm:$0xf]
    %v65 = vld [vmem:[#allocation2 + $0x6c] sm:$0xf]
    %v66 = vld [vmem:[#allocation2 + $0x70] sm:$0xf]
    %v67 = vld [vmem:[#allocation2 + $0x74] sm:$0xf]
    %v68 = vld [vmem:[#allocation2 + $0x78] sm:$0xf]
    %v69 = vld [vmem:[#allocation2 + $0x7c] sm:$0xf]
    %v70 = vld [vmem:[#allocation2 + $0x80] sm:$0xf]
    %v71 = vld [vmem:[#allocation2 + $0x84] sm:$0xf]
    %v72 = vld [vmem:[#allocation2 + $0x88] sm:$0xf]
    %v73 = vld [vmem:[#allocation2 + $0x8c] sm:$0xf]
    %v74 = vld [vmem:[#allocation2 + $0x90] sm:$0xf]
    %v75 = vld [vmem:[#allocation2 + $0x94] sm:$0xf]
    %v76 = vld [vmem:[#allocation2 + $0x98] sm:$0xf]
    %v77 = vld [vmem:[#allocation2 + $0x9c] sm:$0xf]
    %v78 = vld [vmem:[#allocation2 + $0xa0] sm:$0xf]
    %v79 = vld [vmem:[#allocation2 + $0xa4] sm:$0xf]
    %v80 = vld [vmem:[#allocation2 + $0xa8] sm:$0xf]
    %v81 = vld [vmem:[#allocation2 + $0xac] sm:$0xf]
    %v82 = vld [vmem:[#allocation2 + $0xb0] sm:$0xf]
    %v83 = vld [vmem:[#allocation2 + $0xb4] sm:$0xf]
    %v84 = vld [vmem:[#allocation2 + $0xb8] sm:$0xf]
    %v85 = vld [vmem:[#allocation2 + $0xbc] sm:$0xf]
    %v86 = vld [vmem:[#allocation2 + $0xc0] sm:$0xf]
    %v87 = vld [vmem:[#allocation2 + $0xc4] sm:$0xf]
    %v88 = vld [vmem:[#allocation2 + $0xc8] sm:$0xf]
    %v89 = vld [vmem:[#allocation2 + $0xcc] sm:$0xf]
    %v90 = vld [vmem:[#allocation2 + $0xd0] sm:$0xf]
    %v91 = vld [vmem:[#allocation2 + $0xd4] sm:$0xf]
    %v92 = vld [vmem:[#allocation2 + $0xd8] sm:$0xf]
    %v93 = vld [vmem:[#allocation2 + $0xdc] sm:$0xf]
    %v94 = vld [vmem:[#allocation2 + $0xe0] sm:$0xf]
    %v95 = vld [vmem:[#allocation2 + $0xe4] sm:$0xf]
    %v96 = vld [vmem:[#allocation2 + $0xe8] sm:$0xf]
    %v97 = vld [vmem:[#allocation2 + $0xec] sm:$0xf]
    %v98 = vld [vmem:[#allocation2 + $0xf0] sm:$0xf]
    %v99 = vld [vmem:[#allocation2 + $0xf4] sm:$0xf]
    %v100 = vld [vmem:[#allocation2 + $0xf8] sm:$0xf]
    %v101 = vld [vmem:[#allocation2 + $0xfc] sm:$0xf]
    %v102 = vld [vmem:[#allocation2 + $0x100] sm:$0xf]
    %v103 = vld [vmem:[#allocation2 + $0x104] sm:$0xf]
    %v104 = vld [vmem:[#allocation2 + $0x108] sm:$0xf]
    %v105 = vld [vmem:[#allocation2 + $0x10c] sm:$0xf]
    %v106 = vld [vmem:[#allocation2 + $0x110] sm:$0xf]
    %v107 = vld [vmem:[#allocation2 + $0x114] sm:$0xf]
    %v108 = vld [vmem:[#allocation2 + $0x118] sm:$0xf]
    %v109 = vld [vmem:[#allocation2 + $0x11c] sm:$0xf]
    %v110 = vld [vmem:[#allocation2 + $0x120] sm:$0xf]
    %v111 = vld [vmem:[#allocation2 + $0x124] sm:$0xf]
    %v112 = vld [vmem:[#allocation2 + $0x128] sm:$0xf]
    %v113 = vld [vmem:[#allocation2 + $0x12c] sm:$0xf]
    %v114 = vld [vmem:[#allocation2 + $0x130] sm:$0xf]
    %v115 = vld [vmem:[#allocation2 + $0x134] sm:$0xf]
    %v116 = vld [vmem:[#allocation2 + $0x138] sm:$0xf]
    %v117 = vld [vmem:[#allocation2 + $0x13c] sm:$0xf]
    %v118 = vld [vmem:[#allocation2 + $0x140] sm:$0xf]
    %v119 = vld [vmem:[#allocation2 + $0x144] sm:$0xf]
    %v120 = vld [vmem:[#allocation2 + $0x148] sm:$0xf]
    %v121 = vld [vmem:[#allocation2 + $0x14c] sm:$0xf]
    %v122 = vld [vmem:[#allocation2 + $0x150] sm:$0xf]
    %v123 = vld [vmem:[#allocation2 + $0x154] sm:$0xf]
    %v124 = vld [vmem:[#allocation2 + $0x158] sm:$0xf]
    %v125 = vld [vmem:[#allocation2 + $0x15c] sm:$0xf]
    %v126 = vld [vmem:[#allocation2 + $0x160] sm:$0xf]
    %v127 = vld [vmem:[#allocation2 + $0x164] sm:$0xf]
    %v128 = vld [vmem:[#allocation2 + $0x168] sm:$0xf]
    %v129 = vld [vmem:[#allocation2 + $0x16c] sm:$0xf]
    %v130 = vld [vmem:[#allocation2 + $0x170] sm:$0xf]
    %v131 = vld [vmem:[#allocation2 + $0x174] sm:$0xf]
    %v132 = vld [vmem:[#allocation2 + $0x178] sm:$0xf]
    %v133 = vld [vmem:[#allocation2 + $0x17c] sm:$0xf]
    %v134 = vld [vmem:[#allocation2 + $0x180] sm:$0xf]
    %v135 = vld [vmem:[#allocation2 + $0x184] sm:$0xf]
    %v136 = vld [vmem:[#allocation2 + $0x188] sm:$0xf]
    %v137 = vld [vmem:[#allocation2 + $0x18c] sm:$0xf]
    %v138 = vld [vmem:[#allocation2 + $0x190] sm:$0xf]
    %v139 = vld [vmem:[#allocation2 + $0x194] sm:$0xf]
    %v140 = vld [vmem:[#allocation2 + $0x198] sm:$0xf]
    %v141 = vld [vmem:[#allocation2 + $0x19c] sm:$0xf]
    %v142 = vld [vmem:[#allocation2 + $0x1a0] sm:$0xf]
    %v143 = vld [vmem:[#allocation2 + $0x1a4] sm:$0xf]
    %v144 = vld [vmem:[#allocation2 + $0x1a8] sm:$0xf]
    %v145 = vld [vmem:[#allocation2 + $0x1ac] sm:$0xf]
    %v146 = vld [vmem:[#allocation2 + $0x1b0] sm:$0xf]
    %v147 = vld [vmem:[#allocation2 + $0x1b4] sm:$0xf]
    %v148 = vld [vmem:[#allocation2 + $0x1b8] sm:$0xf]
    %v149 = vld [vmem:[#allocation2 + $0x1bc] sm:$0xf]
    %v158 = vunpack.c.l.b16 %v30
    %v159 = vunpack.c.h.b16 %v30
    %v160 = vunpack.c.l.b16 %v31
    %v161 = vunpack.c.h.b16 %v31
    %v162 = vunpack.c.l.b16 %v32
    %v163 = vunpack.c.h.b16 %v32
    %v164 = vunpack.c.l.b16 %v33
    %v165 = vunpack.c.l.b16 %v34
    %v166 = vunpack.c.h.b16 %v34
    %v167 = vunpack.c.l.b16 %v35
    %v168 = vunpack.c.h.b16 %v35
    %v169 = vunpack.c.l.b16 %v36
    %v170 = vunpack.c.h.b16 %v36
    %v171 = vunpack.c.l.b16 %v37
    %v172 = vpack.c.b16 %v165, %v158
    %v173 = vpack.c.b16 %v166, %v159
    %v174 = vpack.c.b16 %v167, %v160
    %v175 = vpack.c.b16 %v168, %v161
    %v176 = vpack.c.b16 %v169, %v162
    %v177 = vpack.c.b16 %v170, %v163
    %v178 = vpack.c.b16 %v171, %v164
    %v298 = vunpack.c.l.b16 %v38
    %v299 = vunpack.c.l.b16 %v39
    %v300 = vunpack.c.l.b16 %v40
    %v301 = vunpack.c.l.b16 %v41
    %v302 = vunpack.c.l.b16 %v42
    %v303 = vunpack.c.l.b16 %v43
    %v304 = vunpack.c.l.b16 %v44
    %v305 = vunpack.c.l.b16 %v45
    %v306 = vunpack.c.l.b16 %v46
    %v307 = vunpack.c.l.b16 %v47
    %v308 = vunpack.c.l.b16 %v48
    %v309 = vunpack.c.l.b16 %v49
    %v310 = vunpack.c.l.b16 %v50
    %v311 = vunpack.c.l.b16 %v51
    %v312 = vunpack.c.l.b16 %v52
    %v313 = vunpack.c.l.b16 %v53
    %v314 = vunpack.c.l.b16 %v54
    %v315 = vunpack.c.l.b16 %v55
    %v316 = vunpack.c.l.b16 %v56
    %v317 = vunpack.c.l.b16 %v57
    %v318 = vunpack.c.l.b16 %v58
    %v319 = vunpack.c.l.b16 %v59
    %v320 = vunpack.c.l.b16 %v60
    %v321 = vunpack.c.l.b16 %v61
    %v322 = vunpack.c.l.b16 %v62
    %v323 = vunpack.c.l.b16 %v63
    %v324 = vunpack.c.l.b16 %v64
    %v325 = vunpack.c.l.b16 %v65
    %v326 = vunpack.c.l.b16 %v66
    %v327 = vunpack.c.l.b16 %v67
    %v328 = vunpack.c.l.b16 %v68
    %v329 = vunpack.c.l.b16 %v69
    %v330 = vunpack.c.l.b16 %v70
    %v331 = vunpack.c.l.b16 %v71
    %v332 = vunpack.c.l.b16 %v72
    %v333 = vunpack.c.l.b16 %v73
    %v334 = vunpack.c.l.b16 %v74
    %v335 = vunpack.c.l.b16 %v75
    %v336 = vunpack.c.l.b16 %v76
    %v337 = vunpack.c.l.b16 %v77
    %v338 = vunpack.c.l.b16 %v78
    %v339 = vunpack.c.l.b16 %v79
    %v340 = vunpack.c.l.b16 %v80
    %v341 = vunpack.c.l.b16 %v81
    %v342 = vunpack.c.l.b16 %v82
    %v343 = vunpack.c.l.b16 %v83
    %v344 = vunpack.c.l.b16 %v84
    %v345 = vunpack.c.l.b16 %v85
    %v346 = vunpack.c.l.b16 %v86
    %v347 = vunpack.c.l.b16 %v87
    %v348 = vunpack.c.l.b16 %v88
    %v349 = vunpack.c.l.b16 %v89
    %v350 = vunpack.c.l.b16 %v90
    %v351 = vunpack.c.l.b16 %v91
    %v352 = vunpack.c.l.b16 %v92
    %v353 = vunpack.c.l.b16 %v93
    %v354 = vunpack.c.l.b16 %v94
    %v355 = vunpack.c.l.b16 %v95
    %v356 = vunpack.c.l.b16 %v96
    %v357 = vunpack.c.l.b16 %v97
    %v358 = vunpack.c.l.b16 %v98
    %v359 = vunpack.c.l.b16 %v99
    %v360 = vunpack.c.l.b16 %v100
    %v361 = vunpack.c.l.b16 %v101
    %v362 = vunpack.c.l.b16 %v102
    %v363 = vunpack.c.l.b16 %v103
    %v364 = vunpack.c.l.b16 %v104
    %v365 = vunpack.c.l.b16 %v105
    %v366 = vunpack.c.l.b16 %v106
    %v367 = vunpack.c.l.b16 %v107
    %v368 = vunpack.c.l.b16 %v108
    %v369 = vunpack.c.l.b16 %v109
    %v370 = vunpack.c.l.b16 %v110
    %v371 = vunpack.c.l.b16 %v111
    %v372 = vunpack.c.l.b16 %v112
    %v373 = vunpack.c.l.b16 %v113
    %v374 = vunpack.c.l.b16 %v114
    %v375 = vunpack.c.l.b16 %v115
    %v376 = vunpack.c.l.b16 %v116
    %v377 = vunpack.c.l.b16 %v117
    %v378 = vunpack.c.l.b16 %v118
    %v379 = vunpack.c.l.b16 %v119
    %v380 = vunpack.c.l.b16 %v120
    %v381 = vunpack.c.l.b16 %v121
    %v382 = vunpack.c.l.b16 %v122
    %v383 = vunpack.c.l.b16 %v123
    %v384 = vunpack.c.l.b16 %v124
    %v385 = vunpack.c.l.b16 %v125
    %v386 = vunpack.c.l.b16 %v126
    %v387 = vunpack.c.l.b16 %v127
    %v388 = vunpack.c.l.b16 %v128
    %v389 = vunpack.c.l.b16 %v129
    %v390 = vunpack.c.l.b16 %v130
    %v391 = vunpack.c.l.b16 %v131
    %v392 = vunpack.c.l.b16 %v132
    %v393 = vunpack.c.l.b16 %v133
    %v394 = vunpack.c.l.b16 %v134
    %v395 = vunpack.c.l.b16 %v135
    %v396 = vunpack.c.l.b16 %v136
    %v397 = vunpack.c.l.b16 %v137
    %v398 = vunpack.c.l.b16 %v138
    %v399 = vunpack.c.l.b16 %v139
    %v400 = vunpack.c.l.b16 %v140
    %v401 = vunpack.c.l.b16 %v141
    %v402 = vunpack.c.l.b16 %v142
    %v403 = vunpack.c.l.b16 %v143
    %v404 = vunpack.c.l.b16 %v144
    %v405 = vunpack.c.l.b16 %v145
    %v406 = vunpack.c.l.b16 %v146
    %v407 = vunpack.c.l.b16 %v147
    %v408 = vunpack.c.l.b16 %v148
    %v409 = vunpack.c.l.b16 %v149
    %v410 = vpack.c.b16 %v299, %v298
    %v411 = vpack.c.b16 %v301, %v300
    %v412 = vpack.c.b16 %v303, %v302
    %v413 = vpack.c.b16 %v305, %v304
    %v414 = vpack.c.b16 %v307, %v306
    %v415 = vpack.c.b16 %v309, %v308
    %v416 = vpack.c.b16 %v311, %v310
    %v417 = vpack.c.b16 %v313, %v312
    %v418 = vpack.c.b16 %v315, %v314
    %v419 = vpack.c.b16 %v317, %v316
    %v420 = vpack.c.b16 %v319, %v318
    %v421 = vpack.c.b16 %v321, %v320
    %v422 = vpack.c.b16 %v323, %v322
    %v423 = vpack.c.b16 %v325, %v324
    %v424 = vpack.c.b16 %v327, %v326
    %v425 = vpack.c.b16 %v329, %v328
    %v426 = vpack.c.b16 %v331, %v330
    %v427 = vpack.c.b16 %v333, %v332
    %v428 = vpack.c.b16 %v335, %v334
    %v429 = vpack.c.b16 %v337, %v336
    %v430 = vpack.c.b16 %v339, %v338
    %v431 = vpack.c.b16 %v341, %v340
    %v432 = vpack.c.b16 %v343, %v342
    %v433 = vpack.c.b16 %v345, %v344
    %v434 = vpack.c.b16 %v347, %v346
    %v435 = vpack.c.b16 %v349, %v348
    %v436 = vpack.c.b16 %v351, %v350
    %v437 = vpack.c.b16 %v353, %v352
    %v438 = vpack.c.b16 %v355, %v354
    %v439 = vpack.c.b16 %v357, %v356
    %v440 = vpack.c.b16 %v359, %v358
    %v441 = vpack.c.b16 %v361, %v360
    %v442 = vpack.c.b16 %v363, %v362
    %v443 = vpack.c.b16 %v365, %v364
    %v444 = vpack.c.b16 %v367, %v366
    %v445 = vpack.c.b16 %v369, %v368
    %v446 = vpack.c.b16 %v371, %v370
    %v447 = vpack.c.b16 %v373, %v372
    %v448 = vpack.c.b16 %v375, %v374
    %v449 = vpack.c.b16 %v377, %v376
    %v450 = vpack.c.b16 %v379, %v378
    %v451 = vpack.c.b16 %v381, %v380
    %v452 = vpack.c.b16 %v383, %v382
    %v453 = vpack.c.b16 %v385, %v384
    %v454 = vpack.c.b16 %v387, %v386
    %v455 = vpack.c.b16 %v389, %v388
    %v456 = vpack.c.b16 %v391, %v390
    %v457 = vpack.c.b16 %v393, %v392
    %v458 = vpack.c.b16 %v395, %v394
    %v459 = vpack.c.b16 %v397, %v396
    %v460 = vpack.c.b16 %v399, %v398
    %v461 = vpack.c.b16 %v401, %v400
    %v462 = vpack.c.b16 %v403, %v402
    %v463 = vpack.c.b16 %v405, %v404
    %v464 = vpack.c.b16 %v407, %v406
    %v465 = vpack.c.b16 %v409, %v408
    %522 = vmatprep.subr.bf16.mxu0 0
    %523 = vmatpush1.bf16.msra.mxu0 %v410
    %524 = vmatprep.subr.bf16.mxu0 0
    %525 = vmatpush1.bf16.msra.mxu0 %v411
    %526 = vmatprep.subr.bf16.mxu0 0
    %527 = vmatpush1.bf16.msra.mxu0 %v412
    %528 = vmatprep.subr.bf16.mxu0 0
    %529 = vmatpush1.bf16.msra.mxu0 %v413
    %530 = vmatprep.subr.bf16.mxu0 0
    %531 = vmatpush1.bf16.msra.mxu0 %v414
    %532 = vmatprep.subr.bf16.mxu0 0
    %533 = vmatpush1.bf16.msra.mxu0 %v415
    %534 = vmatprep.subr.bf16.mxu0 0
    %535 = vmatpush1.bf16.msra.mxu0 %v416
    %536 = vmatprep.subr.bf16.mxu0 0
    %537 = vmatpush1.bf16.msra.mxu0 %v417
    %538 = vmatprep.subr.bf16.mxu0 0
    %539 = vmatpush1.bf16.msra.mxu0 %v418
    %540 = vmatprep.subr.bf16.mxu0 0
    %541 = vmatpush1.bf16.msra.mxu0 %v419
    %542 = vmatprep.subr.bf16.mxu0 0
    %543 = vmatpush1.bf16.msra.mxu0 %v420
    %544 = vmatprep.subr.bf16.mxu0 0
    %545 = vmatpush1.bf16.msra.mxu0 %v421
    %546 = vmatprep.subr.bf16.mxu0 0
    %547 = vmatpush1.bf16.msra.mxu0 %v422
    %548 = vmatprep.subr.bf16.mxu0 0
    %549 = vmatpush1.bf16.msra.mxu0 %v423
    %550 = vmatprep.subr.bf16.mxu0 0
    %551 = vmatpush1.bf16.msra.mxu0 %v424
    %552 = vmatprep.subr.bf16.mxu0 0
    %553 = vmatpush1.bf16.msra.mxu0 %v425
    %554 = vmatprep.mubr.bf16.mxu0 %v173
    %555 = vmatmul.mubr.bf16.gmra.mrb[0].mxu0 %v172
    %v556 = vpop.f32.mrb[0].mxu0
    %v557 = vadd.f32 0.0, %v556
    %v558 = vpop.f32.mrb[0].mxu0
    %v559 = vpop.f32.mrb[0].mxu0
    %v560 = vadd.f32 0.0, %v559
    %v561 = vpop.f32.mrb[0].mxu0
    %562 = vdwg.mxu0
    %563 = vmatprep.subr.bf16.mxu0 0
    %564 = vmatpush1.bf16.msra.mxu0 %v426
    %565 = vmatprep.subr.bf16.mxu0 0
    %566 = vmatpush1.bf16.msra.mxu0 %v427
    %567 = vmatprep.subr.bf16.mxu0 0
    %568 = vmatpush1.bf16.msra.mxu0 %v428
    %569 = vmatprep.subr.bf16.mxu0 0
    %570 = vmatpush1.bf16.msra.mxu0 %v429
    %571 = vmatprep.subr.bf16.mxu0 0
    %572 = vmatpush1.bf16.msra.mxu0 %v430
    %573 = vmatprep.subr.bf16.mxu0 0
    %574 = vmatpush1.bf16.msra.mxu0 %v431
    %575 = vmatprep.subr.bf16.mxu0 0
    %576 = vmatpush1.bf16.msra.mxu0 %v432
    %577 = vmatprep.subr.bf16.mxu0 0
    %578 = vmatpush1.bf16.msra.mxu0 %v433
    %579 = vmatprep.subr.bf16.mxu0 0
    %580 = vmatpush1.bf16.msra.mxu0 %v434
    %581 = vmatprep.subr.bf16.mxu0 0
    %582 = vmatpush1.bf16.msra.mxu0 %v435
    %583 = vmatprep.subr.bf16.mxu0 0
    %584 = vmatpush1.bf16.msra.mxu0 %v436
    %585 = vmatprep.subr.bf16.mxu0 0
    %586 = vmatpush1.bf16.msra.mxu0 %v437
    %587 = vmatprep.subr.bf16.mxu0 0
    %588 = vmatpush1.bf16.msra.mxu0 %v438
    %589 = vmatprep.subr.bf16.mxu0 0
    %590 = vmatpush1.bf16.msra.mxu0 %v439
    %591 = vmatprep.subr.bf16.mxu0 0
    %592 = vmatpush1.bf16.msra.mxu0 %v440
    %593 = vmatprep.subr.bf16.mxu0 0
    %594 = vmatpush1.bf16.msra.mxu0 %v441
    %595 = vmatprep.mubr.bf16.mxu0 %v175
    %596 = vmatmul.mubr.bf16.gmra.mrb[0].mxu0 %v174
    %v597 = vpop.f32.mrb[0].mxu0
    %v598 = vadd.f32 %v557, %v597
    %v599 = vpop.f32.mrb[0].mxu0
    %v600 = vpop.f32.mrb[0].mxu0
    %v601 = vadd.f32 %v560, %v600
    %v602 = vpop.f32.mrb[0].mxu0
    %603 = vdwg.mxu0
    %604 = vmatprep.subr.bf16.mxu0 0
    %605 = vmatpush1.bf16.msra.mxu0 %v442
    %606 = vmatprep.subr.bf16.mxu0 0
    %607 = vmatpush1.bf16.msra.mxu0 %v443
    %608 = vmatprep.subr.bf16.mxu0 0
    %609 = vmatpush1.bf16.msra.mxu0 %v444
    %610 = vmatprep.subr.bf16.mxu0 0
    %611 = vmatpush1.bf16.msra.mxu0 %v445
    %612 = vmatprep.subr.bf16.mxu0 0
    %613 = vmatpush1.bf16.msra.mxu0 %v446
    %614 = vmatprep.subr.bf16.mxu0 0
    %615 = vmatpush1.bf16.msra.mxu0 %v447
    %616 = vmatprep.subr.bf16.mxu0 0
    %617 = vmatpush1.bf16.msra.mxu0 %v448
    %618 = vmatprep.subr.bf16.mxu0 0
    %619 = vmatpush1.bf16.msra.mxu0 %v449
    %620 = vmatprep.subr.bf16.mxu0 0
    %621 = vmatpush1.bf16.msra.mxu0 %v450
    %622 = vmatprep.subr.bf16.mxu0 0
    %623 = vmatpush1.bf16.msra.mxu0 %v451
    %624 = vmatprep.subr.bf16.mxu0 0
    %625 = vmatpush1.bf16.msra.mxu0 %v452
    %626 = vmatprep.subr.bf16.mxu0 0
    %627 = vmatpush1.bf16.msra.mxu0 %v453
    %628 = vmatprep.subr.bf16.mxu0 0
    %629 = vmatpush1.bf16.msra.mxu0 %v454
    %630 = vmatprep.subr.bf16.mxu0 0
    %631 = vmatpush1.bf16.msra.mxu0 %v455
    %632 = vmatprep.subr.bf16.mxu0 0
    %633 = vmatpush1.bf16.msra.mxu0 %v456
    %634 = vmatprep.subr.bf16.mxu0 0
    %635 = vmatpush1.bf16.msra.mxu0 %v457
    %636 = vmatprep.mubr.bf16.mxu0 %v177
    %637 = vmatmul.mubr.bf16.gmra.mrb[0].mxu0 %v176
    %v638 = vpop.f32.mrb[0].mxu0
    %v639 = vadd.f32 %v598, %v638
    %v640 = vpop.f32.mrb[0].mxu0
    %v641 = vpop.f32.mrb[0].mxu0
    %v642 = vadd.f32 %v601, %v641
    %v643 = vpop.f32.mrb[0].mxu0
    %644 = vdwg.mxu0
    %645 = vmatprep.subr.bf16.mxu0 0
    %646 = vmatpush1.bf16.msra.mxu0 %v458
    %647 = vmatprep.subr.bf16.mxu0 0
    %648 = vmatpush1.bf16.msra.mxu0 %v459
    %649 = vmatprep.subr.bf16.mxu0 0
    %650 = vmatpush1.bf16.msra.mxu0 %v460
    %651 = vmatprep.subr.bf16.mxu0 0
    %652 = vmatpush1.bf16.msra.mxu0 %v461
    %653 = vmatprep.subr.bf16.mxu0 0
    %654 = vmatpush1.bf16.msra.mxu0 %v462
    %655 = vmatprep.subr.bf16.mxu0 0
    %656 = vmatpush1.bf16.msra.mxu0 %v463
    %657 = vmatprep.subr.bf16.mxu0 0
    %658 = vmatpush1.bf16.msra.mxu0 %v464
    %659 = vmatprep.subr.bf16.mxu0 0
    %660 = vmatpush1.bf16.msra.mxu0 %v465
    %661 = vmatprep.subr.bf16.mxu0 0
    %662 = vmatpush1.bf16.msra.mxu0 0
    %663 = vmatprep.subr.bf16.mxu0 0
    %664 = vmatpush1.bf16.msra.mxu0 0
    %665 = vmatprep.subr.bf16.mxu0 0
    %666 = vmatpush1.bf16.msra.mxu0 0
    %667 = vmatprep.subr.bf16.mxu0 0
    %668 = vmatpush1.bf16.msra.mxu0 0
    %669 = vmatprep.subr.bf16.mxu0 0
    %670 = vmatpush1.bf16.msra.mxu0 0
    %671 = vmatprep.subr.bf16.mxu0 0
    %672 = vmatpush1.bf16.msra.mxu0 0
    %673 = vmatprep.subr.bf16.mxu0 0
    %674 = vmatpush1.bf16.msra.mxu0 0
    %675 = vmatprep.subr.bf16.mxu0 0
    %676 = vmatpush1.bf16.msra.mxu0 0
    %677 = vmatprep.mubr.bf16.mxu0 0
    %678 = vmatmul.mubr.bf16.gmra.mrb[0].mxu0 %v178
    %v679 = vpop.f32.mrb[0].mxu0
    %v680 = vadd.f32 %v639, %v679
    %v681 = vpop.f32.mrb[0].mxu0
    %v682 = vpop.f32.mrb[0].mxu0
    %v683 = vadd.f32 %v642, %v682
    %v684 = vpop.f32.mrb[0].mxu0
    %685 = vdwg.mxu0
    %v687 = vlaneseq
    %v688 = vshrl.u32 %v687, 7
    %v689 = vsub.s32 0, %v688
    %v690 = vrot.slane %v29, %v689
    %v692 = vadd.f32 %v690, %v680
    %v693 = vadd.f32 %v690, %v683
    %694 = vst [vmem:[%s3] sm:$0xff] %v692
    %695 = vst [vmem:[%s3 + $0x8] sm:$0xff] %v693
    // Predicated region
    $region18: #{generator_forward.10} parent=1 // pred_check
      _
    $region19: #{generator_forward.10} parent=1 // pred_check_branch
      %697 = sbr.rel (0) target = $region21
    $region20: #{generator_forward.10} parent=1 // pred_region
      _
    $region21: #{generator_forward.10} parent=1 // pred_fallthru
      _
    // Predicated region
    $region22: #{generator_forward.10} parent=1 // pred_check
      _
    $region23: #{generator_forward.10} parent=1 // pred_check_branch
      %699 = sbr.rel (0) target = $region25
    $region24: #{generator_forward.10} parent=1 // pred_region
      _
    $region25: #{generator_forward.10} parent=1 // pred_fallthru
      _
    %700 = vsyncpa [#allocation3], 1

// kernel: generator_forward.11
$region0: #{generator_forward.11}
  #allocation0 [shape = 'u32[]', space=smem, size = 0x4, offset = 0x4, fixed_abs, tag = 'smem constant byte address 0x4 - core index']
  #allocation1 [shape = 'u32[144,128]{1,0:T(1,128)}', space=vmem, size = 0x12000, scoped, tag = 'internal scratch']
  %s0 = inlined_call_operand.vmem [shape: bf16[3,16,128], index: 0, kind: input, shape index: {}]
  %s1 = inlined_call_operand.vmem [shape: bf16[3,128,128], index: 1, kind: input, shape index: {}]
  %s2 = inlined_call_operand.vmem [shape: f32[1,128], index: 2, kind: input, shape index: {}]
  %s3 = inlined_call_operand.vmem [shape: f32[16,128], index: 3, kind: output, shape index: {}]
  %s4 = sld [smem:[#allocation0]]
  $region22: #{generator_forward.11} parent=0
    _
  %s6 = ssub.s32 1, %s4
  %s7 = scalar_select 0, %s6, %s4
  // Predicated region
  $region2: #{generator_forward.11} parent=0 // pred_check
    _
  $region3: #{generator_forward.11} parent=0 // pred_check_branch
    %9 = sbr.rel (0) target = $region5
  $region4: #{generator_forward.11} parent=0 // pred_region
    _
  $region5: #{generator_forward.11} parent=0 // pred_fallthru
    _
  // Predicated region
  $region6: #{generator_forward.11} parent=0 // pred_check
    _
  $region7: #{generator_forward.11} parent=0 // pred_check_branch
    %11 = sbr.rel (0) target = $region9
  $region8: #{generator_forward.11} parent=0 // pred_region
    _
  $region9: #{generator_forward.11} parent=0 // pred_fallthru
    _
  // Predicated region
  $region10: #{generator_forward.11} parent=0 // pred_check
    _
  $region11: #{generator_forward.11} parent=0 // pred_check_branch
    %13 = sbr.rel (0) target = $region13
  $region12: #{generator_forward.11} parent=0 // pred_region
    _
  $region13: #{generator_forward.11} parent=0 // pred_fallthru
    _
  %v15 = vld [vmem:[%s2] sm:$0x1]
  %v16 = vld [vmem:[%s0] sm:$0xf]
  %v17 = vld [vmem:[%s0 + $0x4] sm:$0xf]
  %v18 = vld [vmem:[%s1] sm:$0xf]
  %v19 = vld [vmem:[%s1 + $0x4] sm:$0xf]
  %v20 = vld [vmem:[%s1 + $0x8] sm:$0xf]
  %v21 = vld [vmem:[%s1 + $0xc] sm:$0xf]
  %v22 = vld [vmem:[%s1 + $0x10] sm:$0xf]
  %v23 = vld [vmem:[%s1 + $0x14] sm:$0xf]
  %v24 = vld [vmem:[%s1 + $0x18] sm:$0xf]
  %v25 = vld [vmem:[%s1 + $0x1c] sm:$0xf]
  %v26 = vld [vmem:[%s1 + $0x20] sm:$0xf]
  %v27 = vld [vmem:[%s1 + $0x24] sm:$0xf]
  %v28 = vld [vmem:[%s1 + $0x28] sm:$0xf]
  %v29 = vld [vmem:[%s1 + $0x2c] sm:$0xf]
  %v30 = vld [vmem:[%s1 + $0x30] sm:$0xf]
  %v31 = vld [vmem:[%s1 + $0x34] sm:$0xf]
  %v32 = vld [vmem:[%s1 + $0x38] sm:$0xf]
  %v33 = vld [vmem:[%s1 + $0x3c] sm:$0xf]
  %v36 = vunpack.c.l.b16 %v16
  %v37 = vunpack.c.l.b16 %v17
  %v38 = vpack.c.b16 %v37, %v36
  %v56 = vunpack.c.l.b16 %v18
  %v57 = vunpack.c.l.b16 %v19
  %v58 = vunpack.c.l.b16 %v20
  %v59 = vunpack.c.l.b16 %v21
  %v60 = vunpack.c.l.b16 %v22
  %v61 = vunpack.c.l.b16 %v23
  %v62 = vunpack.c.l.b16 %v24
  %v63 = vunpack.c.l.b16 %v25
  %v64 = vunpack.c.l.b16 %v26
  %v65 = vunpack.c.l.b16 %v27
  %v66 = vunpack.c.l.b16 %v28
  %v67 = vunpack.c.l.b16 %v29
  %v68 = vunpack.c.l.b16 %v30
  %v69 = vunpack.c.l.b16 %v31
  %v70 = vunpack.c.l.b16 %v32
  %v71 = vunpack.c.l.b16 %v33
  %v72 = vpack.c.b16 %v57, %v56
  %v73 = vpack.c.b16 %v59, %v58
  %v74 = vpack.c.b16 %v61, %v60
  %v75 = vpack.c.b16 %v63, %v62
  %v76 = vpack.c.b16 %v65, %v64
  %v77 = vpack.c.b16 %v67, %v66
  %v78 = vpack.c.b16 %v69, %v68
  %v79 = vpack.c.b16 %v71, %v70
  %88 = vmatprep.subr.bf16.mxu0 0
  %89 = vmatpush1.bf16.msra.mxu0 %v72
  %90 = vmatprep.subr.bf16.mxu0 0
  %91 = vmatpush1.bf16.msra.mxu0 %v73
  %92 = vmatprep.subr.bf16.mxu0 0
  %93 = vmatpush1.bf16.msra.mxu0 %v74
  %94 = vmatprep.subr.bf16.mxu0 0
  %95 = vmatpush1.bf16.msra.mxu0 %v75
  %96 = vmatprep.subr.bf16.mxu0 0
  %97 = vmatpush1.bf16.msra.mxu0 %v76
  %98 = vmatprep.subr.bf16.mxu0 0
  %99 = vmatpush1.bf16.msra.mxu0 %v77
  %100 = vmatprep.subr.bf16.mxu0 0
  %101 = vmatpush1.bf16.msra.mxu0 %v78
  %102 = vmatprep.subr.bf16.mxu0 0
  %103 = vmatpush1.bf16.msra.mxu0 %v79
  %104 = vmatprep.subr.bf16.mxu0 0
  %105 = vmatpush1.bf16.msra.mxu0 0
  %106 = vmatprep.subr.bf16.mxu0 0
  %107 = vmatpush1.bf16.msra.mxu0 0
  %108 = vmatprep.subr.bf16.mxu0 0
  %109 = vmatpush1.bf16.msra.mxu0 0
  %110 = vmatprep.subr.bf16.mxu0 0
  %111 = vmatpush1.bf16.msra.mxu0 0
  %112 = vmatprep.subr.bf16.mxu0 0
  %113 = vmatpush1.bf16.msra.mxu0 0
  %114 = vmatprep.subr.bf16.mxu0 0
  %115 = vmatpush1.bf16.msra.mxu0 0
  %116 = vmatprep.subr.bf16.mxu0 0
  %117 = vmatpush1.bf16.msra.mxu0 0
  %118 = vmatprep.subr.bf16.mxu0 0
  %119 = vmatpush1.bf16.msra.mxu0 0
  %120 = vmatprep.mubr.bf16.mxu0 0
  %121 = vmatmul.mubr.bf16.gmra.mrb[0].mxu0 %v38
  %v122 = vpop.f32.mrb[0].mxu0
  %v123 = vadd.f32 0.0, %v122
  %v124 = vpop.f32.mrb[0].mxu0
  %v125 = vpop.f32.mrb[0].mxu0
  %v126 = vadd.f32 0.0, %v125
  %v127 = vpop.f32.mrb[0].mxu0
  %128 = vdwg.mxu0
  %v130 = vlaneseq
  %v131 = vshrl.u32 %v130, 7
  %v132 = vsub.s32 0, %v131
  %v133 = vrot.slane %v15, %v132
  %v135 = vadd.f32 %v133, %v123
  %v136 = vadd.f32 %v133, %v126
  %s137 = scalar_lea.vmem %s0, 8
  %v138 = vld [vmem:[%s137] sm:$0xf]
  %v139 = vld [vmem:[%s137 + $0x4] sm:$0xf]
  %s140 = scalar_lea.vmem %s1, 64
  %v141 = vld [vmem:[%s140] sm:$0xf]
  %v142 = vld [vmem:[%s140 + $0x4] sm:$0xf]
  %v143 = vld [vmem:[%s140 + $0x8] sm:$0xf]
  %v144 = vld [vmem:[%s140 + $0xc] sm:$0xf]
  %v145 = vld [vmem:[%s140 + $0x10] sm:$0xf]
  %v146 = vld [vmem:[%s140 + $0x14] sm:$0xf]
  %v147 = vld [vmem:[%s140 + $0x18] sm:$0xf]
  %v148 = vld [vmem:[%s140 + $0x1c] sm:$0xf]
  %v149 = vld [vmem:[%s140 + $0x20] sm:$0xf]
  %v150 = vld [vmem:[%s140 + $0x24] sm:$0xf]
  %v151 = vld [vmem:[%s140 + $0x28] sm:$0xf]
  %v152 = vld [vmem:[%s140 + $0x2c] sm:$0xf]
  %v153 = vld [vmem:[%s140 + $0x30] sm:$0xf]
  %v154 = vld [vmem:[%s140 + $0x34] sm:$0xf]
  %v155 = vld [vmem:[%s140 + $0x38] sm:$0xf]
  %v156 = vld [vmem:[%s140 + $0x3c] sm:$0xf]
  %v159 = vunpack.c.l.b16 %v138
  %v160 = vunpack.c.l.b16 %v139
  %v161 = vpack.c.b16 %v160, %v159
  %v179 = vunpack.c.l.b16 %v141
  %v180 = vunpack.c.l.b16 %v142
  %v181 = vunpack.c.l.b16 %v143
  %v182 = vunpack.c.l.b16 %v144
  %v183 = vunpack.c.l.b16 %v145
  %v184 = vunpack.c.l.b16 %v146
  %v185 = vunpack.c.l.b16 %v147
  %v186 = vunpack.c.l.b16 %v148
  %v187 = vunpack.c.l.b16 %v149
  %v188 = vunpack.c.l.b16 %v150
  %v189 = vunpack.c.l.b16 %v151
  %v190 = vunpack.c.l.b16 %v152
  %v191 = vunpack.c.l.b16 %v153
  %v192 = vunpack.c.l.b16 %v154
  %v193 = vunpack.c.l.b16 %v155
  %v194 = vunpack.c.l.b16 %v156
  %v195 = vpack.c.b16 %v180, %v179
  %v196 = vpack.c.b16 %v182, %v181
  %v197 = vpack.c.b16 %v184, %v183
  %v198 = vpack.c.b16 %v186, %v185
  %v199 = vpack.c.b16 %v188, %v187
  %v200 = vpack.c.b16 %v190, %v189
  %v201 = vpack.c.b16 %v192, %v191
  %v202 = vpack.c.b16 %v194, %v193
  %211 = vmatprep.subr.bf16.mxu0 0
  %212 = vmatpush1.bf16.msra.mxu0 %v195
  %213 = vmatprep.subr.bf16.mxu0 0
  %214 = vmatpush1.bf16.msra.mxu0 %v196
  %215 = vmatprep.subr.bf16.mxu0 0
  %216 = vmatpush1.bf16.msra.mxu0 %v197
  %217 = vmatprep.subr.bf16.mxu0 0
  %218 = vmatpush1.bf16.msra.mxu0 %v198
  %219 = vmatprep.subr.bf16.mxu0 0
  %220 = vmatpush1.bf16.msra.mxu0 %v199
  %221 = vmatprep.subr.bf16.mxu0 0
  %222 = vmatpush1.bf16.msra.mxu0 %v200
  %223 = vmatprep.subr.bf16.mxu0 0
  %224 = vmatpush1.bf16.msra.mxu0 %v201
  %225 = vmatprep.subr.bf16.mxu0 0
  %226 = vmatpush1.bf16.msra.mxu0 %v202
  %227 = vmatprep.subr.bf16.mxu0 0
  %228 = vmatpush1.bf16.msra.mxu0 0
  %229 = vmatprep.subr.bf16.mxu0 0
  %230 = vmatpush1.bf16.msra.mxu0 0
  %231 = vmatprep.subr.bf16.mxu0 0
  %232 = vmatpush1.bf16.msra.mxu0 0
  %233 = vmatprep.subr.bf16.mxu0 0
  %234 = vmatpush1.bf16.msra.mxu0 0
  %235 = vmatprep.subr.bf16.mxu0 0
  %236 = vmatpush1.bf16.msra.mxu0 0
  %237 = vmatprep.subr.bf16.mxu0 0
  %238 = vmatpush1.bf16.msra.mxu0 0
  %239 = vmatprep.subr.bf16.mxu0 0
  %240 = vmatpush1.bf16.msra.mxu0 0
  %241 = vmatprep.subr.bf16.mxu0 0
  %242 = vmatpush1.bf16.msra.mxu0 0
  %243 = vmatprep.mubr.bf16.mxu0 0
  %244 = vmatmul.mubr.bf16.gmra.mrb[0].mxu0 %v161
  %v245 = vpop.f32.mrb[0].mxu0
  %v246 = vadd.f32 0.0, %v245
  %v247 = vpop.f32.mrb[0].mxu0
  %v248 = vpop.f32.mrb[0].mxu0
  %v249 = vadd.f32 0.0, %v248
  %v250 = vpop.f32.mrb[0].mxu0
  %251 = vdwg.mxu0
  %v252 = vadd.f32 %v135, %v246
  %v253 = vadd.f32 %v136, %v249
  %s254 = scalar_lea.vmem %s0, 16
  %v255 = vld [vmem:[%s254] sm:$0xf]
  %v256 = vld [vmem:[%s254 + $0x4] sm:$0xf]
  %s257 = scalar_lea.vmem %s1, 128
  %v258 = vld [vmem:[%s257] sm:$0xf]
  %v259 = vld [vmem:[%s257 + $0x4] sm:$0xf]
  %v260 = vld [vmem:[%s257 + $0x8] sm:$0xf]
  %v261 = vld [vmem:[%s257 + $0xc] sm:$0xf]
  %v262 = vld [vmem:[%s257 + $0x10] sm:$0xf]
  %v263 = vld [vmem:[%s257 + $0x14] sm:$0xf]
  %v264 = vld [vmem:[%s257 + $0x18] sm:$0xf]
  %v265 = vld [vmem:[%s257 + $0x1c] sm:$0xf]
  %v266 = vld [vmem:[%s257 + $0x20] sm:$0xf]
  %v267 = vld [vmem:[%s257 + $0x24] sm:$0xf]
  %v268 = vld [vmem:[%s257 + $0x28] sm:$0xf]
  %v269 = vld [vmem:[%s257 + $0x2c] sm:$0xf]
  %v270 = vld [vmem:[%s257 + $0x30] sm:$0xf]
  %v271 = vld [vmem:[%s257 + $0x34] sm:$0xf]
  %v272 = vld [vmem:[%s257 + $0x38] sm:$0xf]
  %v273 = vld [vmem:[%s257 + $0x3c] sm:$0xf]
  %v276 = vunpack.c.l.b16 %v255
  %v277 = vunpack.c.l.b16 %v256
  %v278 = vpack.c.b16 %v277, %v276
  %v296 = vunpack.c.l.b16 %v258
  %v297 = vunpack.c.l.b16 %v259
  %v298 = vunpack.c.l.b16 %v260
  %v299 = vunpack.c.l.b16 %v261
  %v300 = vunpack.c.l.b16 %v262
  %v301 = vunpack.c.l.b16 %v263
  %v302 = vunpack.c.l.b16 %v264
  %v303 = vunpack.c.l.b16 %v265
  %v304 = vunpack.c.l.b16 %v266
  %v305 = vunpack.c.l.b16 %v267
  %v306 = vunpack.c.l.b16 %v268
  %v307 = vunpack.c.l.b16 %v269
  %v308 = vunpack.c.l.b16 %v270
  %v309 = vunpack.c.l.b16 %v271
  %v310 = vunpack.c.l.b16 %v272
  %v311 = vunpack.c.l.b16 %v273
  %v312 = vpack.c.b16 %v297, %v296
  %v313 = vpack.c.b16 %v299, %v298
  %v314 = vpack.c.b16 %v301, %v300
  %v315 = vpack.c.b16 %v303, %v302
  %v316 = vpack.c.b16 %v305, %v304
  %v317 = vpack.c.b16 %v307, %v306
  %v318 = vpack.c.b16 %v309, %v308
  %v319 = vpack.c.b16 %v311, %v310
  %328 = vmatprep.subr.bf16.mxu0 0
  %329 = vmatpush1.bf16.msra.mxu0 %v312
  %330 = vmatprep.subr.bf16.mxu0 0
  %331 = vmatpush1.bf16.msra.mxu0 %v313
  %332 = vmatprep.subr.bf16.mxu0 0
  %333 = vmatpush1.bf16.msra.mxu0 %v314
  %334 = vmatprep.subr.bf16.mxu0 0
  %335 = vmatpush1.bf16.msra.mxu0 %v315
  %336 = vmatprep.subr.bf16.mxu0 0
  %337 = vmatpush1.bf16.msra.mxu0 %v316
  %338 = vmatprep.subr.bf16.mxu0 0
  %339 = vmatpush1.bf16.msra.mxu0 %v317
  %340 = vmatprep.subr.bf16.mxu0 0
  %341 = vmatpush1.bf16.msra.mxu0 %v318
  %342 = vmatprep.subr.bf16.mxu0 0
  %343 = vmatpush1.bf16.msra.mxu0 %v319
  %344 = vmatprep.subr.bf16.mxu0 0
  %345 = vmatpush1.bf16.msra.mxu0 0
  %346 = vmatprep.subr.bf16.mxu0 0
  %347 = vmatpush1.bf16.msra.mxu0 0
  %348 = vmatprep.subr.bf16.mxu0 0
  %349 = vmatpush1.bf16.msra.mxu0 0
  %350 = vmatprep.subr.bf16.mxu0 0
  %351 = vmatpush1.bf16.msra.mxu0 0
  %352 = vmatprep.subr.bf16.mxu0 0
  %353 = vmatpush1.bf16.msra.mxu0 0
  %354 = vmatprep.subr.bf16.mxu0 0
  %355 = vmatpush1.bf16.msra.mxu0 0
  %356 = vmatprep.subr.bf16.mxu0 0
  %357 = vmatpush1.bf16.msra.mxu0 0
  %358 = vmatprep.subr.bf16.mxu0 0
  %359 = vmatpush1.bf16.msra.mxu0 0
  %360 = vmatprep.mubr.bf16.mxu0 0
  %361 = vmatmul.mubr.bf16.gmra.mrb[0].mxu0 %v278
  %v362 = vpop.f32.mrb[0].mxu0
  %v363 = vadd.f32 0.0, %v362
  %v364 = vpop.f32.mrb[0].mxu0
  %v365 = vpop.f32.mrb[0].mxu0
  %v366 = vadd.f32 0.0, %v365
  %v367 = vpop.f32.mrb[0].mxu0
  %368 = vdwg.mxu0
  %v369 = vadd.f32 %v252, %v363
  %v370 = vadd.f32 %v253, %v366
  %vm371 = vcmp.ge.f32.partialorder %v369, 0.0
  %vm372 = vcmp.ge.f32.partialorder %v370, 0.0
  %v373 = vmul.f32 %v369, 0.2
  %v374 = vmul.f32 %v370, 0.2
  %v375 = vsel %vm371, %v369, %v373
  %v376 = vsel %vm372, %v370, %v374
  %377 = vst [vmem:[%s3] sm:$0xff] %v375
  %378 = vst [vmem:[%s3 + $0x8] sm:$0xff] %v376
  // Predicated region
  $region14: #{generator_forward.11} parent=0 // pred_check
    _
  $region15: #{generator_forward.11} parent=0 // pred_check_branch
    %380 = sbr.rel (0) target = $region17
  $region16: #{generator_forward.11} parent=0 // pred_region
    _
  $region17: #{generator_forward.11} parent=0 // pred_fallthru
    _
  // Predicated region
  $region18: #{generator_forward.11} parent=0 // pred_check
    _
  $region19: #{generator_forward.11} parent=0 // pred_check_branch
    %382 = sbr.rel (0) target = $region21
  $region20: #{generator_forward.11} parent=0 // pred_region
    _
  $region21: #{generator_forward.11} parent=0 // pred_fallthru
    _

// kernel: generator_forward.13
$region0: #{generator_forward.13}
  #allocation0 [shape = 'u32[]', space=smem, size = 0x4, offset = 0x4, fixed_abs, tag = 'smem constant byte address 0x4 - core index']
  #allocation1 [shape = 'u32[144,128]{1,0:T(1,128)}', space=vmem, size = 0x12000, scoped, tag = 'internal scratch']
  %s0 = inlined_call_operand.vmem [shape: bf16[3,16,128], index: 0, kind: input, shape index: {}]
  %s1 = inlined_call_operand.vmem [shape: bf16[3,128,64], index: 1, kind: input, shape index: {}]
  %s2 = inlined_call_operand.vmem [shape: f32[1,64], index: 2, kind: input, shape index: {}]
  %s3 = inlined_call_operand.vmem [shape: f32[16,64], index: 3, kind: output, shape index: {}]
  %s4 = sld [smem:[#allocation0]]
  $region22: #{generator_forward.13} parent=0
    _
  %s6 = ssub.s32 1, %s4
  %s7 = scalar_select 0, %s6, %s4
  // Predicated region
  $region2: #{generator_forward.13} parent=0 // pred_check
    _
  $region3: #{generator_forward.13} parent=0 // pred_check_branch
    %9 = sbr.rel (0) target = $region5
  $region4: #{generator_forward.13} parent=0 // pred_region
    _
  $region5: #{generator_forward.13} parent=0 // pred_fallthru
    _
  // Predicated region
  $region6: #{generator_forward.13} parent=0 // pred_check
    _
  $region7: #{generator_forward.13} parent=0 // pred_check_branch
    %11 = sbr.rel (0) target = $region9
  $region8: #{generator_forward.13} parent=0 // pred_region
    _
  $region9: #{generator_forward.13} parent=0 // pred_fallthru
    _
  // Predicated region
  $region10: #{generator_forward.13} parent=0 // pred_check
    _
  $region11: #{generator_forward.13} parent=0 // pred_check_branch
    %13 = sbr.rel (0) target = $region13
  $region12: #{generator_forward.13} parent=0 // pred_region
    _
  $region13: #{generator_forward.13} parent=0 // pred_fallthru
    _
  %v15 = vld [vmem:[%s2] sm:$0x1]
  %v16 = vld [vmem:[%s0] sm:$0xf]
  %v17 = vld [vmem:[%s0 + $0x4] sm:$0xf]
  %v18 = vld [vmem:[%s1] sm:$0xf]
  %v19 = vld [vmem:[%s1 + $0x4] sm:$0xf]
  %v20 = vld [vmem:[%s1 + $0x8] sm:$0xf]
  %v21 = vld [vmem:[%s1 + $0xc] sm:$0xf]
  %v22 = vld [vmem:[%s1 + $0x10] sm:$0xf]
  %v23 = vld [vmem:[%s1 + $0x14] sm:$0xf]
  %v24 = vld [vmem:[%s1 + $0x18] sm:$0xf]
  %v25 = vld [vmem:[%s1 + $0x1c] sm:$0xf]
  %v26 = vld [vmem:[%s1 + $0x20] sm:$0xf]
  %v27 = vld [vmem:[%s1 + $0x24] sm:$0xf]
  %v28 = vld [vmem:[%s1 + $0x28] sm:$0xf]
  %v29 = vld [vmem:[%s1 + $0x2c] sm:$0xf]
  %v30 = vld [vmem:[%s1 + $0x30] sm:$0xf]
  %v31 = vld [vmem:[%s1 + $0x34] sm:$0xf]
  %v32 = vld [vmem:[%s1 + $0x38] sm:$0xf]
  %v33 = vld [vmem:[%s1 + $0x3c] sm:$0xf]
  %v36 = vunpack.c.l.b16 %v16
  %v37 = vunpack.c.l.b16 %v17
  %v38 = vpack.c.b16 %v37, %v36
  %v56 = vunpack.c.l.b16 %v18
  %v57 = vunpack.c.l.b16 %v19
  %v58 = vunpack.c.l.b16 %v20
  %v59 = vunpack.c.l.b16 %v21
  %v60 = vunpack.c.l.b16 %v22
  %v61 = vunpack.c.l.b16 %v23
  %v62 = vunpack.c.l.b16 %v24
  %v63 = vunpack.c.l.b16 %v25
  %v64 = vunpack.c.l.b16 %v26
  %v65 = vunpack.c.l.b16 %v27
  %v66 = vunpack.c.l.b16 %v28
  %v67 = vunpack.c.l.b16 %v29
  %v68 = vunpack.c.l.b16 %v30
  %v69 = vunpack.c.l.b16 %v31
  %v70 = vunpack.c.l.b16 %v32
  %v71 = vunpack.c.l.b16 %v33
  %v72 = vpack.c.b16 %v57, %v56
  %v73 = vpack.c.b16 %v59, %v58
  %v74 = vpack.c.b16 %v61, %v60
  %v75 = vpack.c.b16 %v63, %v62
  %v76 = vpack.c.b16 %v65, %v64
  %v77 = vpack.c.b16 %v67, %v66
  %v78 = vpack.c.b16 %v69, %v68
  %v79 = vpack.c.b16 %v71, %v70
  %88 = vmatprep.subr.bf16.mxu0 0
  %89 = vmatpush1.bf16.msra.mxu0 %v72
  %90 = vmatprep.subr.bf16.mxu0 0
  %91 = vmatpush1.bf16.msra.mxu0 %v73
  %92 = vmatprep.subr.bf16.mxu0 0
  %93 = vmatpush1.bf16.msra.mxu0 %v74
  %94 = vmatprep.subr.bf16.mxu0 0
  %95 = vmatpush1.bf16.msra.mxu0 %v75
  %96 = vmatprep.subr.bf16.mxu0 0
  %97 = vmatpush1.bf16.msra.mxu0 %v76
  %98 = vmatprep.subr.bf16.mxu0 0
  %99 = vmatpush1.bf16.msra.mxu0 %v77
  %100 = vmatprep.subr.bf16.mxu0 0
  %101 = vmatpush1.bf16.msra.mxu0 %v78
  %102 = vmatprep.subr.bf16.mxu0 0
  %103 = vmatpush1.bf16.msra.mxu0 %v79
  %104 = vmatprep.subr.bf16.mxu0 0
  %105 = vmatpush1.bf16.msra.mxu0 0
  %106 = vmatprep.subr.bf16.mxu0 0
  %107 = vmatpush1.bf16.msra.mxu0 0
  %108 = vmatprep.subr.bf16.mxu0 0
  %109 = vmatpush1.bf16.msra.mxu0 0
  %110 = vmatprep.subr.bf16.mxu0 0
  %111 = vmatpush1.bf16.msra.mxu0 0
  %112 = vmatprep.subr.bf16.mxu0 0
  %113 = vmatpush1.bf16.msra.mxu0 0
  %114 = vmatprep.subr.bf16.mxu0 0
  %115 = vmatpush1.bf16.msra.mxu0 0
  %116 = vmatprep.subr.bf16.mxu0 0
  %117 = vmatpush1.bf16.msra.mxu0 0
  %118 = vmatprep.subr.bf16.mxu0 0
  %119 = vmatpush1.bf16.msra.mxu0 0
  %120 = vmatprep.mubr.bf16.mxu0 0
  %121 = vmatmul.mubr.bf16.gmra.mrb[0].mxu0 %v38
  %v122 = vpop.f32.mrb[0].mxu0
  %v123 = vadd.f32 0.0, %v122
  %v124 = vpop.f32.mrb[0].mxu0
  %v125 = vpop.f32.mrb[0].mxu0
  %v126 = vadd.f32 0.0, %v125
  %v127 = vpop.f32.mrb[0].mxu0
  %128 = vdwg.mxu0
  %v130 = vlaneseq
  %v131 = vshrl.u32 %v130, 7
  %v132 = vsub.s32 0, %v131
  %v133 = vrot.slane %v15, %v132
  %v135 = vadd.f32 %v133, %v123
  %v136 = vadd.f32 %v133, %v126
  %s137 = scalar_lea.vmem %s0, 8
  %v138 = vld [vmem:[%s137] sm:$0xf]
  %v139 = vld [vmem:[%s137 + $0x4] sm:$0xf]
  %s140 = scalar_lea.vmem %s1, 64
  %v141 = vld [vmem:[%s140] sm:$0xf]
  %v142 = vld [vmem:[%s140 + $0x4] sm:$0xf]
  %v143 = vld [vmem:[%s140 + $0x8] sm:$0xf]
  %v144 = vld [vmem:[%s140 + $0xc] sm:$0xf]
  %v145 = vld [vmem:[%s140 + $0x10] sm:$0xf]
  %v146 = vld [vmem:[%s140 + $0x14] sm:$0xf]
  %v147 = vld [vmem:[%s140 + $0x18] sm:$0xf]
  %v148 = vld [vmem:[%s140 + $0x1c] sm:$0xf]
  %v149 = vld [vmem:[%s140 + $0x20] sm:$0xf]
  %v150 = vld [vmem:[%s140 + $0x24] sm:$0xf]
  %v151 = vld [vmem:[%s140 + $0x28] sm:$0xf]
  %v152 = vld [vmem:[%s140 + $0x2c] sm:$0xf]
  %v153 = vld [vmem:[%s140 + $0x30] sm:$0xf]
  %v154 = vld [vmem:[%s140 + $0x34] sm:$0xf]
  %v155 = vld [vmem:[%s140 + $0x38] sm:$0xf]
  %v156 = vld [vmem:[%s140 + $0x3c] sm:$0xf]
  %v159 = vunpack.c.l.b16 %v138
  %v160 = vunpack.c.l.b16 %v139
  %v161 = vpack.c.b16 %v160, %v159
  %v179 = vunpack.c.l.b16 %v141
  %v180 = vunpack.c.l.b16 %v142
  %v181 = vunpack.c.l.b16 %v143
  %v182 = vunpack.c.l.b16 %v144
  %v183 = vunpack.c.l.b16 %v145
  %v184 = vunpack.c.l.b16 %v146
  %v185 = vunpack.c.l.b16 %v147
  %v186 = vunpack.c.l.b16 %v148
  %v187 = vunpack.c.l.b16 %v149
  %v188 = vunpack.c.l.b16 %v150
  %v189 = vunpack.c.l.b16 %v151
  %v190 = vunpack.c.l.b16 %v152
  %v191 = vunpack.c.l.b16 %v153
  %v192 = vunpack.c.l.b16 %v154
  %v193 = vunpack.c.l.b16 %v155
  %v194 = vunpack.c.l.b16 %v156
  %v195 = vpack.c.b16 %v180, %v179
  %v196 = vpack.c.b16 %v182, %v181
  %v197 = vpack.c.b16 %v184, %v183
  %v198 = vpack.c.b16 %v186, %v185
  %v199 = vpack.c.b16 %v188, %v187
  %v200 = vpack.c.b16 %v190, %v189
  %v201 = vpack.c.b16 %v192, %v191
  %v202 = vpack.c.b16 %v194, %v193
  %211 = vmatprep.subr.bf16.mxu0 0
  %212 = vmatpush1.bf16.msra.mxu0 %v195
  %213 = vmatprep.subr.bf16.mxu0 0
  %214 = vmatpush1.bf16.msra.mxu0 %v196
  %215 = vmatprep.subr.bf16.mxu0 0
  %216 = vmatpush1.bf16.msra.mxu0 %v197
  %217 = vmatprep.subr.bf16.mxu0 0
  %218 = vmatpush1.bf16.msra.mxu0 %v198
  %219 = vmatprep.subr.bf16.mxu0 0
  %220 = vmatpush1.bf16.msra.mxu0 %v199
  %221 = vmatprep.subr.bf16.mxu0 0
  %222 = vmatpush1.bf16.msra.mxu0 %v200
  %223 = vmatprep.subr.bf16.mxu0 0
  %224 = vmatpush1.bf16.msra.mxu0 %v201
  %225 = vmatprep.subr.bf16.mxu0 0
  %226 = vmatpush1.bf16.msra.mxu0 %v202
  %227 = vmatprep.subr.bf16.mxu0 0
  %228 = vmatpush1.bf16.msra.mxu0 0
  %229 = vmatprep.subr.bf16.mxu0 0
  %230 = vmatpush1.bf16.msra.mxu0 0
  %231 = vmatprep.subr.bf16.mxu0 0
  %232 = vmatpush1.bf16.msra.mxu0 0
  %233 = vmatprep.subr.bf16.mxu0 0
  %234 = vmatpush1.bf16.msra.mxu0 0
  %235 = vmatprep.subr.bf16.mxu0 0
  %236 = vmatpush1.bf16.msra.mxu0 0
  %237 = vmatprep.subr.bf16.mxu0 0
  %238 = vmatpush1.bf16.msra.mxu0 0
  %239 = vmatprep.subr.bf16.mxu0 0
  %240 = vmatpush1.bf16.msra.mxu0 0
  %241 = vmatprep.subr.bf16.mxu0 0
  %242 = vmatpush1.bf16.msra.mxu0 0
  %243 = vmatprep.mubr.bf16.mxu0 0
  %244 = vmatmul.mubr.bf16.gmra.mrb[0].mxu0 %v161
  %v245 = vpop.f32.mrb[0].mxu0
  %v246 = vadd.f32 0.0, %v245
  %v247 = vpop.f32.mrb[0].mxu0
  %v248 = vpop.f32.mrb[0].mxu0
  %v249 = vadd.f32 0.0, %v248
  %v250 = vpop.f32.mrb[0].mxu0
  %251 = vdwg.mxu0
  %v252 = vadd.f32 %v135, %v246
  %v253 = vadd.f32 %v136, %v249
  %s254 = scalar_lea.vmem %s0, 16
  %v255 = vld [vmem:[%s254] sm:$0xf]
  %v256 = vld [vmem:[%s254 + $0x4] sm:$0xf]
  %s257 = scalar_lea.vmem %s1, 128
  %v258 = vld [vmem:[%s257] sm:$0xf]
  %v259 = vld [vmem:[%s257 + $0x4] sm:$0xf]
  %v260 = vld [vmem:[%s257 + $0x8] sm:$0xf]
  %v261 = vld [vmem:[%s257 + $0xc] sm:$0xf]
  %v262 = vld [vmem:[%s257 + $0x10] sm:$0xf]
  %v263 = vld [vmem:[%s257 + $0x14] sm:$0xf]
  %v264 = vld [vmem:[%s257 + $0x18] sm:$0xf]
  %v265 = vld [vmem:[%s257 + $0x1c] sm:$0xf]
  %v266 = vld [vmem:[%s257 + $0x20] sm:$0xf]
  %v267 = vld [vmem:[%s257 + $0x24] sm:$0xf]
  %v268 = vld [vmem:[%s257 + $0x28] sm:$0xf]
  %v269 = vld [vmem:[%s257 + $0x2c] sm:$0xf]
  %v270 = vld [vmem:[%s257 + $0x30] sm:$0xf]
  %v271 = vld [vmem:[%s257 + $0x34] sm:$0xf]
  %v272 = vld [vmem:[%s257 + $0x38] sm:$0xf]
  %v273 = vld [vmem:[%s257 + $0x3c] sm:$0xf]
  %v276 = vunpack.c.l.b16 %v255
  %v277 = vunpack.c.l.b16 %v256
  %v278 = vpack.c.b16 %v277, %v276
  %v296 = vunpack.c.l.b16 %v258
  %v297 = vunpack.c.l.b16 %v259
  %v298 = vunpack.c.l.b16 %v260
  %v299 = vunpack.c.l.b16 %v261
  %v300 = vunpack.c.l.b16 %v262
  %v301 = vunpack.c.l.b16 %v263
  %v302 = vunpack.c.l.b16 %v264
  %v303 = vunpack.c.l.b16 %v265
  %v304 = vunpack.c.l.b16 %v266
  %v305 = vunpack.c.l.b16 %v267
  %v306 = vunpack.c.l.b16 %v268
  %v307 = vunpack.c.l.b16 %v269
  %v308 = vunpack.c.l.b16 %v270
  %v309 = vunpack.c.l.b16 %v271
  %v310 = vunpack.c.l.b16 %v272
  %v311 = vunpack.c.l.b16 %v273
  %v312 = vpack.c.b16 %v297, %v296
  %v313 = vpack.c.b16 %v299, %v298
  %v314 = vpack.c.b16 %v301, %v300
  %v315 = vpack.c.b16 %v303, %v302
  %v316 = vpack.c.b16 %v305, %v304
  %v317 = vpack.c.b16 %v307, %v306
  %v318 = vpack.c.b16 %v309, %v308
  %v319 = vpack.c.b16 %v311, %v310
  %328 = vmatprep.subr.bf16.mxu0 0
  %329 = vmatpush1.bf16.msra.mxu0 %v312
  %330 = vmatprep.subr.bf16.mxu0 0
  %331 = vmatpush1.bf16.msra.mxu0 %v313
  %332 = vmatprep.subr.bf16.mxu0 0
  %333 = vmatpush1.bf16.msra.mxu0 %v314
  %334 = vmatprep.subr.bf16.mxu0 0
  %335 = vmatpush1.bf16.msra.mxu0 %v315
  %336 = vmatprep.subr.bf16.mxu0 0
  %337 = vmatpush1.bf16.msra.mxu0 %v316
  %338 = vmatprep.subr.bf16.mxu0 0
  %339 = vmatpush1.bf16.msra.mxu0 %v317
  %340 = vmatprep.subr.bf16.mxu0 0
  %341 = vmatpush1.bf16.msra.mxu0 %v318
  %342 = vmatprep.subr.bf16.mxu0 0
  %343 = vmatpush1.bf16.msra.mxu0 %v319
  %344 = vmatprep.subr.bf16.mxu0 0
  %345 = vmatpush1.bf16.msra.mxu0 0
  %346 = vmatprep.subr.bf16.mxu0 0
  %347 = vmatpush1.bf16.msra.mxu0 0
  %348 = vmatprep.subr.bf16.mxu0 0
  %349 = vmatpush1.bf16.msra.mxu0 0
  %350 = vmatprep.subr.bf16.mxu0 0
  %351 = vmatpush1.bf16.msra.mxu0 0
  %352 = vmatprep.subr.bf16.mxu0 0
  %353 = vmatpush1.bf16.msra.mxu0 0
  %354 = vmatprep.subr.bf16.mxu0 0
  %355 = vmatpush1.bf16.msra.mxu0 0
  %356 = vmatprep.subr.bf16.mxu0 0
  %357 = vmatpush1.bf16.msra.mxu0 0
  %358 = vmatprep.subr.bf16.mxu0 0
  %359 = vmatpush1.bf16.msra.mxu0 0
  %360 = vmatprep.mubr.bf16.mxu0 0
  %361 = vmatmul.mubr.bf16.gmra.mrb[0].mxu0 %v278
  %v362 = vpop.f32.mrb[0].mxu0
  %v363 = vadd.f32 0.0, %v362
  %v364 = vpop.f32.mrb[0].mxu0
  %v365 = vpop.f32.mrb[0].mxu0
  %v366 = vadd.f32 0.0, %v365
  %v367 = vpop.f32.mrb[0].mxu0
  %368 = vdwg.mxu0
  %v369 = vadd.f32 %v252, %v363
  %v370 = vadd.f32 %v253, %v366
  %vm371 = vcmp.ge.f32.partialorder %v369, 0.0
  %vm372 = vcmp.ge.f32.partialorder %v370, 0.0
  %v373 = vmul.f32 %v369, 0.2
  %v374 = vmul.f32 %v370, 0.2
  %v375 = vsel %vm371, %v369, %v373
  %v376 = vsel %vm372, %v370, %v374
  %vm377 = vcmask 523264
  %378 = vst.msk [vmem:[%s3] sm:$0xff] %vm377, %v375
  %379 = vst.msk [vmem:[%s3 + $0x8] sm:$0xff] %vm377, %v376
  // Predicated region
  $region14: #{generator_forward.13} parent=0 // pred_check
    _
  $region15: #{generator_forward.13} parent=0 // pred_check_branch
    %381 = sbr.rel (0) target = $region17
  $region16: #{generator_forward.13} parent=0 // pred_region
    _
  $region17: #{generator_forward.13} parent=0 // pred_fallthru
    _
  // Predicated region
  $region18: #{generator_forward.13} parent=0 // pred_check
    _
  $region19: #{generator_forward.13} parent=0 // pred_check_branch
    %383 = sbr.rel (0) target = $region21
  $region20: #{generator_forward.13} parent=0 // pred_region
    _
  $region21: #{generator_forward.13} parent=0 // pred_fallthru
    _

// kernel: generator_forward.14
$region0: #{generator_forward.14}
  #allocation0 [shape = 'u32[]', space=smem, size = 0x4, offset = 0x4, fixed_abs, tag = 'smem constant byte address 0x4 - core index']
  #allocation1 [shape = 'u32[144,128]{1,0:T(1,128)}', space=vmem, size = 0x12000, scoped, tag = 'internal scratch']
  %s0 = inlined_call_operand.vmem [shape: bf16[3,16,64], index: 0, kind: input, shape index: {}]
  %s1 = inlined_call_operand.vmem [shape: bf16[3,64,64], index: 1, kind: input, shape index: {}]
  %s2 = inlined_call_operand.vmem [shape: f32[1,64], index: 2, kind: input, shape index: {}]
  %s3 = inlined_call_operand.vmem [shape: f32[16,64], index: 3, kind: output, shape index: {}]
  %s4 = sld [smem:[#allocation0]]
  $region22: #{generator_forward.14} parent=0
    _
  %s6 = ssub.s32 1, %s4
  %s7 = scalar_select 0, %s6, %s4
  // Predicated region
  $region2: #{generator_forward.14} parent=0 // pred_check
    _
  $region3: #{generator_forward.14} parent=0 // pred_check_branch
    %9 = sbr.rel (0) target = $region5
  $region4: #{generator_forward.14} parent=0 // pred_region
    _
  $region5: #{generator_forward.14} parent=0 // pred_fallthru
    _
  // Predicated region
  $region6: #{generator_forward.14} parent=0 // pred_check
    _
  $region7: #{generator_forward.14} parent=0 // pred_check_branch
    %11 = sbr.rel (0) target = $region9
  $region8: #{generator_forward.14} parent=0 // pred_region
    _
  $region9: #{generator_forward.14} parent=0 // pred_fallthru
    _
  // Predicated region
  $region10: #{generator_forward.14} parent=0 // pred_check
    _
  $region11: #{generator_forward.14} parent=0 // pred_check_branch
    %13 = sbr.rel (0) target = $region13
  $region12: #{generator_forward.14} parent=0 // pred_region
    _
  $region13: #{generator_forward.14} parent=0 // pred_fallthru
    _
  %v15 = vld [vmem:[%s2] sm:$0x1]
  %v16 = vld [vmem:[%s0] sm:$0xf]
  %v17 = vld [vmem:[%s0 + $0x4] sm:$0xf]
  %v18 = vld [vmem:[%s1] sm:$0xf]
  %v19 = vld [vmem:[%s1 + $0x4] sm:$0xf]
  %v20 = vld [vmem:[%s1 + $0x8] sm:$0xf]
  %v21 = vld [vmem:[%s1 + $0xc] sm:$0xf]
  %v22 = vld [vmem:[%s1 + $0x10] sm:$0xf]
  %v23 = vld [vmem:[%s1 + $0x14] sm:$0xf]
  %v24 = vld [vmem:[%s1 + $0x18] sm:$0xf]
  %v25 = vld [vmem:[%s1 + $0x1c] sm:$0xf]
  %v28 = vunpack.c.l.b16 %v16
  %v29 = vunpack.c.l.b16 %v17
  %v30 = vpack.c.b16 %v29, %v28
  %v39 = vunpack.c.l.b16 %v18
  %v40 = vunpack.c.l.b16 %v19
  %v41 = vunpack.c.l.b16 %v20
  %v42 = vunpack.c.l.b16 %v21
  %v43 = vunpack.c.l.b16 %v22
  %v44 = vunpack.c.l.b16 %v23
  %v45 = vunpack.c.l.b16 %v24
  %v46 = vunpack.c.l.b16 %v25
  %v47 = vpack.c.b16 %v40, %v39
  %v48 = vpack.c.b16 %v42, %v41
  %v49 = vpack.c.b16 %v44, %v43
  %v50 = vpack.c.b16 %v46, %v45
  %vm55 = vcmask 523264
  %v57 = vsel %vm55, %v30, 0
  %59 = vmatprep.subr.bf16.mxu0 0
  %60 = vmatpush1.bf16.msra.mxu0 %v47
  %61 = vmatprep.subr.bf16.mxu0 0
  %62 = vmatpush1.bf16.msra.mxu0 %v48
  %63 = vmatprep.subr.bf16.mxu0 0
  %64 = vmatpush1.bf16.msra.mxu0 %v49
  %65 = vmatprep.subr.bf16.mxu0 0
  %66 = vmatpush1.bf16.msra.mxu0 %v50
  %67 = vmatprep.subr.bf16.mxu0 0
  %68 = vmatpush1.bf16.msra.mxu0 0
  %69 = vmatprep.subr.bf16.mxu0 0
  %70 = vmatpush1.bf16.msra.mxu0 0
  %71 = vmatprep.subr.bf16.mxu0 0
  %72 = vmatpush1.bf16.msra.mxu0 0
  %73 = vmatprep.subr.bf16.mxu0 0
  %74 = vmatpush1.bf16.msra.mxu0 0
  %75 = vmatprep.subr.bf16.mxu0 0
  %76 = vmatpush1.bf16.msra.mxu0 0
  %77 = vmatprep.subr.bf16.mxu0 0
  %78 = vmatpush1.bf16.msra.mxu0 0
  %79 = vmatprep.subr.bf16.mxu0 0
  %80 = vmatpush1.bf16.msra.mxu0 0
  %81 = vmatprep.subr.bf16.mxu0 0
  %82 = vmatpush1.bf16.msra.mxu0 0
  %83 = vmatprep.subr.bf16.mxu0 0
  %84 = vmatpush1.bf16.msra.mxu0 0
  %85 = vmatprep.subr.bf16.mxu0 0
  %86 = vmatpush1.bf16.msra.mxu0 0
  %87 = vmatprep.subr.bf16.mxu0 0
  %88 = vmatpush1.bf16.msra.mxu0 0
  %89 = vmatprep.subr.bf16.mxu0 0
  %90 = vmatpush1.bf16.msra.mxu0 0
  %91 = vmatprep.mubr.bf16.mxu0 0
  %92 = vmatmul.mubr.bf16.gmra.mrb[0].mxu0 %v57
  %v93 = vpop.f32.mrb[0].mxu0
  %v94 = vadd.f32 0.0, %v93
  %v95 = vpop.f32.mrb[0].mxu0
  %v96 = vpop.f32.mrb[0].mxu0
  %v97 = vadd.f32 0.0, %v96
  %v98 = vpop.f32.mrb[0].mxu0
  %99 = vdwg.mxu0
  %v101 = vlaneseq
  %v102 = vshrl.u32 %v101, 7
  %v103 = vsub.s32 0, %v102
  %v104 = vrot.slane %v15, %v103
  %v106 = vadd.f32 %v104, %v94
  %v107 = vadd.f32 %v104, %v97
  %s108 = scalar_lea.vmem %s0, 8
  %v109 = vld [vmem:[%s108] sm:$0xf]
  %v110 = vld [vmem:[%s108 + $0x4] sm:$0xf]
  %s111 = scalar_lea.vmem %s1, 32
  %v112 = vld [vmem:[%s111] sm:$0xf]
  %v113 = vld [vmem:[%s111 + $0x4] sm:$0xf]
  %v114 = vld [vmem:[%s111 + $0x8] sm:$0xf]
  %v115 = vld [vmem:[%s111 + $0xc] sm:$0xf]
  %v116 = vld [vmem:[%s111 + $0x10] sm:$0xf]
  %v117 = vld [vmem:[%s111 + $0x14] sm:$0xf]
  %v118 = vld [vmem:[%s111 + $0x18] sm:$0xf]
  %v119 = vld [vmem:[%s111 + $0x1c] sm:$0xf]
  %v122 = vunpack.c.l.b16 %v109
  %v123 = vunpack.c.l.b16 %v110
  %v124 = vpack.c.b16 %v123, %v122
  %v133 = vunpack.c.l.b16 %v112
  %v134 = vunpack.c.l.b16 %v113
  %v135 = vunpack.c.l.b16 %v114
  %v136 = vunpack.c.l.b16 %v115
  %v137 = vunpack.c.l.b16 %v116
  %v138 = vunpack.c.l.b16 %v117
  %v139 = vunpack.c.l.b16 %v118
  %v140 = vunpack.c.l.b16 %v119
  %v141 = vpack.c.b16 %v134, %v133
  %v142 = vpack.c.b16 %v136, %v135
  %v143 = vpack.c.b16 %v138, %v137
  %v144 = vpack.c.b16 %v140, %v139
  %v150 = vsel %vm55, %v124, 0
  %152 = vmatprep.subr.bf16.mxu0 0
  %153 = vmatpush1.bf16.msra.mxu0 %v141
  %154 = vmatprep.subr.bf16.mxu0 0
  %155 = vmatpush1.bf16.msra.mxu0 %v142
  %156 = vmatprep.subr.bf16.mxu0 0
  %157 = vmatpush1.bf16.msra.mxu0 %v143
  %158 = vmatprep.subr.bf16.mxu0 0
  %159 = vmatpush1.bf16.msra.mxu0 %v144
  %160 = vmatprep.subr.bf16.mxu0 0
  %161 = vmatpush1.bf16.msra.mxu0 0
  %162 = vmatprep.subr.bf16.mxu0 0
  %163 = vmatpush1.bf16.msra.mxu0 0
  %164 = vmatprep.subr.bf16.mxu0 0
  %165 = vmatpush1.bf16.msra.mxu0 0
  %166 = vmatprep.subr.bf16.mxu0 0
  %167 = vmatpush1.bf16.msra.mxu0 0
  %168 = vmatprep.subr.bf16.mxu0 0
  %169 = vmatpush1.bf16.msra.mxu0 0
  %170 = vmatprep.subr.bf16.mxu0 0
  %171 = vmatpush1.bf16.msra.mxu0 0
  %172 = vmatprep.subr.bf16.mxu0 0
  %173 = vmatpush1.bf16.msra.mxu0 0
  %174 = vmatprep.subr.bf16.mxu0 0
  %175 = vmatpush1.bf16.msra.mxu0 0
  %176 = vmatprep.subr.bf16.mxu0 0
  %177 = vmatpush1.bf16.msra.mxu0 0
  %178 = vmatprep.subr.bf16.mxu0 0
  %179 = vmatpush1.bf16.msra.mxu0 0
  %180 = vmatprep.subr.bf16.mxu0 0
  %181 = vmatpush1.bf16.msra.mxu0 0
  %182 = vmatprep.subr.bf16.mxu0 0
  %183 = vmatpush1.bf16.msra.mxu0 0
  %184 = vmatprep.mubr.bf16.mxu0 0
  %185 = vmatmul.mubr.bf16.gmra.mrb[0].mxu0 %v150
  %v186 = vpop.f32.mrb[0].mxu0
  %v187 = vadd.f32 0.0, %v186
  %v188 = vpop.f32.mrb[0].mxu0
  %v189 = vpop.f32.mrb[0].mxu0
  %v190 = vadd.f32 0.0, %v189
  %v191 = vpop.f32.mrb[0].mxu0
  %192 = vdwg.mxu0
  %v193 = vadd.f32 %v106, %v187
  %v194 = vadd.f32 %v107, %v190
  %s195 = scalar_lea.vmem %s0, 16
  %v196 = vld [vmem:[%s195] sm:$0xf]
  %v197 = vld [vmem:[%s195 + $0x4] sm:$0xf]
  %s198 = scalar_lea.vmem %s1, 64
  %v199 = vld [vmem:[%s198] sm:$0xf]
  %v200 = vld [vmem:[%s198 + $0x4] sm:$0xf]
  %v201 = vld [vmem:[%s198 + $0x8] sm:$0xf]
  %v202 = vld [vmem:[%s198 + $0xc] sm:$0xf]
  %v203 = vld [vmem:[%s198 + $0x10] sm:$0xf]
  %v204 = vld [vmem:[%s198 + $0x14] sm:$0xf]
  %v205 = vld [vmem:[%s198 + $0x18] sm:$0xf]
  %v206 = vld [vmem:[%s198 + $0x1c] sm:$0xf]
  %v209 = vunpack.c.l.b16 %v196
  %v210 = vunpack.c.l.b16 %v197
  %v211 = vpack.c.b16 %v210, %v209
  %v220 = vunpack.c.l.b16 %v199
  %v221 = vunpack.c.l.b16 %v200
  %v222 = vunpack.c.l.b16 %v201
  %v223 = vunpack.c.l.b16 %v202
  %v224 = vunpack.c.l.b16 %v203
  %v225 = vunpack.c.l.b16 %v204
  %v226 = vunpack.c.l.b16 %v205
  %v227 = vunpack.c.l.b16 %v206
  %v228 = vpack.c.b16 %v221, %v220
  %v229 = vpack.c.b16 %v223, %v222
  %v230 = vpack.c.b16 %v225, %v224
  %v231 = vpack.c.b16 %v227, %v226
  %v237 = vsel %vm55, %v211, 0
  %239 = vmatprep.subr.bf16.mxu0 0
  %240 = vmatpush1.bf16.msra.mxu0 %v228
  %241 = vmatprep.subr.bf16.mxu0 0
  %242 = vmatpush1.bf16.msra.mxu0 %v229
  %243 = vmatprep.subr.bf16.mxu0 0
  %244 = vmatpush1.bf16.msra.mxu0 %v230
  %245 = vmatprep.subr.bf16.mxu0 0
  %246 = vmatpush1.bf16.msra.mxu0 %v231
  %247 = vmatprep.subr.bf16.mxu0 0
  %248 = vmatpush1.bf16.msra.mxu0 0
  %249 = vmatprep.subr.bf16.mxu0 0
  %250 = vmatpush1.bf16.msra.mxu0 0
  %251 = vmatprep.subr.bf16.mxu0 0
  %252 = vmatpush1.bf16.msra.mxu0 0
  %253 = vmatprep.subr.bf16.mxu0 0
  %254 = vmatpush1.bf16.msra.mxu0 0
  %255 = vmatprep.subr.bf16.mxu0 0
  %256 = vmatpush1.bf16.msra.mxu0 0
  %257 = vmatprep.subr.bf16.mxu0 0
  %258 = vmatpush1.bf16.msra.mxu0 0
  %259 = vmatprep.subr.bf16.mxu0 0
  %260 = vmatpush1.bf16.msra.mxu0 0
  %261 = vmatprep.subr.bf16.mxu0 0
  %262 = vmatpush1.bf16.msra.mxu0 0
  %263 = vmatprep.subr.bf16.mxu0 0
  %264 = vmatpush1.bf16.msra.mxu0 0
  %265 = vmatprep.subr.bf16.mxu0 0
  %266 = vmatpush1.bf16.msra.mxu0 0
  %267 = vmatprep.subr.bf16.mxu0 0
  %268 = vmatpush1.bf16.msra.mxu0 0
  %269 = vmatprep.subr.bf16.mxu0 0
  %270 = vmatpush1.bf16.msra.mxu0 0
  %271 = vmatprep.mubr.bf16.mxu0 0
  %272 = vmatmul.mubr.bf16.gmra.mrb[0].mxu0 %v237
  %v273 = vpop.f32.mrb[0].mxu0
  %v274 = vadd.f32 0.0, %v273
  %v275 = vpop.f32.mrb[0].mxu0
  %v276 = vpop.f32.mrb[0].mxu0
  %v277 = vadd.f32 0.0, %v276
  %v278 = vpop.f32.mrb[0].mxu0
  %279 = vdwg.mxu0
  %v280 = vadd.f32 %v193, %v274
  %v281 = vadd.f32 %v194, %v277
  %vm282 = vcmp.ge.f32.partialorder %v280, 0.0
  %vm283 = vcmp.ge.f32.partialorder %v281, 0.0
  %v284 = vmul.f32 %v280, 0.2
  %v285 = vmul.f32 %v281, 0.2
  %v286 = vsel %vm282, %v280, %v284
  %v287 = vsel %vm283, %v281, %v285
  %288 = vst.msk [vmem:[%s3] sm:$0xff] %vm55, %v286
  %289 = vst.msk [vmem:[%s3 + $0x8] sm:$0xff] %vm55, %v287
  // Predicated region
  $region14: #{generator_forward.14} parent=0 // pred_check
    _
  $region15: #{generator_forward.14} parent=0 // pred_check_branch
    %291 = sbr.rel (0) target = $region17
  $region16: #{generator_forward.14} parent=0 // pred_region
    _
  $region17: #{generator_forward.14} parent=0 // pred_fallthru
    _
  // Predicated region
  $region18: #{generator_forward.14} parent=0 // pred_check
    _
  $region19: #{generator_forward.14} parent=0 // pred_check_branch
    %293 = sbr.rel (0) target = $region21
  $region20: #{generator_forward.14} parent=0 // pred_region
    _
  $region21: #{generator_forward.14} parent=0 // pred_fallthru
    _

// kernel: generator_forward.17
$region0: #{generator_forward.17}
  #allocation0 [shape = 'u32[]', space=smem, size = 0x4, offset = 0x4, fixed_abs, tag = 'smem constant byte address 0x4 - core index']
  #allocation1 [shape = 'u32[144,128]{1,0:T(1,128)}', space=vmem, size = 0x12000, scoped, tag = 'internal scratch']
  %s0 = inlined_call_operand.vmem [shape: bf16[3,16,64], index: 0, kind: input, shape index: {}]
  %s1 = inlined_call_operand.vmem [shape: bf16[3,64,128], index: 1, kind: input, shape index: {}]
  %s2 = inlined_call_operand.vmem [shape: f32[1,128], index: 2, kind: input, shape index: {}]
  %s3 = inlined_call_operand.vmem [shape: f32[16,128], index: 3, kind: output, shape index: {}]
  %s4 = sld [smem:[#allocation0]]
  $region22: #{generator_forward.17} parent=0
    _
  %s6 = ssub.s32 1, %s4
  %s7 = scalar_select 0, %s6, %s4
  // Predicated region
  $region2: #{generator_forward.17} parent=0 // pred_check
    _
  $region3: #{generator_forward.17} parent=0 // pred_check_branch
    %9 = sbr.rel (0) target = $region5
  $region4: #{generator_forward.17} parent=0 // pred_region
    _
  $region5: #{generator_forward.17} parent=0 // pred_fallthru
    _
  // Predicated region
  $region6: #{generator_forward.17} parent=0 // pred_check
    _
  $region7: #{generator_forward.17} parent=0 // pred_check_branch
    %11 = sbr.rel (0) target = $region9
  $region8: #{generator_forward.17} parent=0 // pred_region
    _
  $region9: #{generator_forward.17} parent=0 // pred_fallthru
    _
  // Predicated region
  $region10: #{generator_forward.17} parent=0 // pred_check
    _
  $region11: #{generator_forward.17} parent=0 // pred_check_branch
    %13 = sbr.rel (0) target = $region13
  $region12: #{generator_forward.17} parent=0 // pred_region
    _
  $region13: #{generator_forward.17} parent=0 // pred_fallthru
    _
  %v15 = vld [vmem:[%s2] sm:$0x1]
  %v16 = vld [vmem:[%s0] sm:$0xf]
  %v17 = vld [vmem:[%s0 + $0x4] sm:$0xf]
  %v18 = vld [vmem:[%s1] sm:$0xf]
  %v19 = vld [vmem:[%s1 + $0x4] sm:$0xf]
  %v20 = vld [vmem:[%s1 + $0x8] sm:$0xf]
  %v21 = vld [vmem:[%s1 + $0xc] sm:$0xf]
  %v22 = vld [vmem:[%s1 + $0x10] sm:$0xf]
  %v23 = vld [vmem:[%s1 + $0x14] sm:$0xf]
  %v24 = vld [vmem:[%s1 + $0x18] sm:$0xf]
  %v25 = vld [vmem:[%s1 + $0x1c] sm:$0xf]
  %v28 = vunpack.c.l.b16 %v16
  %v29 = vunpack.c.l.b16 %v17
  %v30 = vpack.c.b16 %v29, %v28
  %v39 = vunpack.c.l.b16 %v18
  %v40 = vunpack.c.l.b16 %v19
  %v41 = vunpack.c.l.b16 %v20
  %v42 = vunpack.c.l.b16 %v21
  %v43 = vunpack.c.l.b16 %v22
  %v44 = vunpack.c.l.b16 %v23
  %v45 = vunpack.c.l.b16 %v24
  %v46 = vunpack.c.l.b16 %v25
  %v47 = vpack.c.b16 %v40, %v39
  %v48 = vpack.c.b16 %v42, %v41
  %v49 = vpack.c.b16 %v44, %v43
  %v50 = vpack.c.b16 %v46, %v45
  %vm55 = vcmask 523264
  %v57 = vsel %vm55, %v30, 0
  %59 = vmatprep.subr.bf16.mxu0 0
  %60 = vmatpush1.bf16.msra.mxu0 %v47
  %61 = vmatprep.subr.bf16.mxu0 0
  %62 = vmatpush1.bf16.msra.mxu0 %v48
  %63 = vmatprep.subr.bf16.mxu0 0
  %64 = vmatpush1.bf16.msra.mxu0 %v49
  %65 = vmatprep.subr.bf16.mxu0 0
  %66 = vmatpush1.bf16.msra.mxu0 %v50
  %67 = vmatprep.subr.bf16.mxu0 0
  %68 = vmatpush1.bf16.msra.mxu0 0
  %69 = vmatprep.subr.bf16.mxu0 0
  %70 = vmatpush1.bf16.msra.mxu0 0
  %71 = vmatprep.subr.bf16.mxu0 0
  %72 = vmatpush1.bf16.msra.mxu0 0
  %73 = vmatprep.subr.bf16.mxu0 0
  %74 = vmatpush1.bf16.msra.mxu0 0
  %75 = vmatprep.subr.bf16.mxu0 0
  %76 = vmatpush1.bf16.msra.mxu0 0
  %77 = vmatprep.subr.bf16.mxu0 0
  %78 = vmatpush1.bf16.msra.mxu0 0
  %79 = vmatprep.subr.bf16.mxu0 0
  %80 = vmatpush1.bf16.msra.mxu0 0
  %81 = vmatprep.subr.bf16.mxu0 0
  %82 = vmatpush1.bf16.msra.mxu0 0
  %83 = vmatprep.subr.bf16.mxu0 0
  %84 = vmatpush1.bf16.msra.mxu0 0
  %85 = vmatprep.subr.bf16.mxu0 0
  %86 = vmatpush1.bf16.msra.mxu0 0
  %87 = vmatprep.subr.bf16.mxu0 0
  %88 = vmatpush1.bf16.msra.mxu0 0
  %89 = vmatprep.subr.bf16.mxu0 0
  %90 = vmatpush1.bf16.msra.mxu0 0
  %91 = vmatprep.mubr.bf16.mxu0 0
  %92 = vmatmul.mubr.bf16.gmra.mrb[0].mxu0 %v57
  %v93 = vpop.f32.mrb[0].mxu0
  %v94 = vadd.f32 0.0, %v93
  %v95 = vpop.f32.mrb[0].mxu0
  %v96 = vpop.f32.mrb[0].mxu0
  %v97 = vadd.f32 0.0, %v96
  %v98 = vpop.f32.mrb[0].mxu0
  %99 = vdwg.mxu0
  %v101 = vlaneseq
  %v102 = vshrl.u32 %v101, 7
  %v103 = vsub.s32 0, %v102
  %v104 = vrot.slane %v15, %v103
  %v106 = vadd.f32 %v104, %v94
  %v107 = vadd.f32 %v104, %v97
  %s108 = scalar_lea.vmem %s0, 8
  %v109 = vld [vmem:[%s108] sm:$0xf]
  %v110 = vld [vmem:[%s108 + $0x4] sm:$0xf]
  %s111 = scalar_lea.vmem %s1, 32
  %v112 = vld [vmem:[%s111] sm:$0xf]
  %v113 = vld [vmem:[%s111 + $0x4] sm:$0xf]
  %v114 = vld [vmem:[%s111 + $0x8] sm:$0xf]
  %v115 = vld [vmem:[%s111 + $0xc] sm:$0xf]
  %v116 = vld [vmem:[%s111 + $0x10] sm:$0xf]
  %v117 = vld [vmem:[%s111 + $0x14] sm:$0xf]
  %v118 = vld [vmem:[%s111 + $0x18] sm:$0xf]
  %v119 = vld [vmem:[%s111 + $0x1c] sm:$0xf]
  %v122 = vunpack.c.l.b16 %v109
  %v123 = vunpack.c.l.b16 %v110
  %v124 = vpack.c.b16 %v123, %v122
  %v133 = vunpack.c.l.b16 %v112
  %v134 = vunpack.c.l.b16 %v113
  %v135 = vunpack.c.l.b16 %v114
  %v136 = vunpack.c.l.b16 %v115
  %v137 = vunpack.c.l.b16 %v116
  %v138 = vunpack.c.l.b16 %v117
  %v139 = vunpack.c.l.b16 %v118
  %v140 = vunpack.c.l.b16 %v119
  %v141 = vpack.c.b16 %v134, %v133
  %v142 = vpack.c.b16 %v136, %v135
  %v143 = vpack.c.b16 %v138, %v137
  %v144 = vpack.c.b16 %v140, %v139
  %v150 = vsel %vm55, %v124, 0
  %152 = vmatprep.subr.bf16.mxu0 0
  %153 = vmatpush1.bf16.msra.mxu0 %v141
  %154 = vmatprep.subr.bf16.mxu0 0
  %155 = vmatpush1.bf16.msra.mxu0 %v142
  %156 = vmatprep.subr.bf16.mxu0 0
  %157 = vmatpush1.bf16.msra.mxu0 %v143
  %158 = vmatprep.subr.bf16.mxu0 0
  %159 = vmatpush1.bf16.msra.mxu0 %v144
  %160 = vmatprep.subr.bf16.mxu0 0
  %161 = vmatpush1.bf16.msra.mxu0 0
  %162 = vmatprep.subr.bf16.mxu0 0
  %163 = vmatpush1.bf16.msra.mxu0 0
  %164 = vmatprep.subr.bf16.mxu0 0
  %165 = vmatpush1.bf16.msra.mxu0 0
  %166 = vmatprep.subr.bf16.mxu0 0
  %167 = vmatpush1.bf16.msra.mxu0 0
  %168 = vmatprep.subr.bf16.mxu0 0
  %169 = vmatpush1.bf16.msra.mxu0 0
  %170 = vmatprep.subr.bf16.mxu0 0
  %171 = vmatpush1.bf16.msra.mxu0 0
  %172 = vmatprep.subr.bf16.mxu0 0
  %173 = vmatpush1.bf16.msra.mxu0 0
  %174 = vmatprep.subr.bf16.mxu0 0
  %175 = vmatpush1.bf16.msra.mxu0 0
  %176 = vmatprep.subr.bf16.mxu0 0
  %177 = vmatpush1.bf16.msra.mxu0 0
  %178 = vmatprep.subr.bf16.mxu0 0
  %179 = vmatpush1.bf16.msra.mxu0 0
  %180 = vmatprep.subr.bf16.mxu0 0
  %181 = vmatpush1.bf16.msra.mxu0 0
  %182 = vmatprep.subr.bf16.mxu0 0
  %183 = vmatpush1.bf16.msra.mxu0 0
  %184 = vmatprep.mubr.bf16.mxu0 0
  %185 = vmatmul.mubr.bf16.gmra.mrb[0].mxu0 %v150
  %v186 = vpop.f32.mrb[0].mxu0
  %v187 = vadd.f32 0.0, %v186
  %v188 = vpop.f32.mrb[0].mxu0
  %v189 = vpop.f32.mrb[0].mxu0
  %v190 = vadd.f32 0.0, %v189
  %v191 = vpop.f32.mrb[0].mxu0
  %192 = vdwg.mxu0
  %v193 = vadd.f32 %v106, %v187
  %v194 = vadd.f32 %v107, %v190
  %s195 = scalar_lea.vmem %s0, 16
  %v196 = vld [vmem:[%s195] sm:$0xf]
  %v197 = vld [vmem:[%s195 + $0x4] sm:$0xf]
  %s198 = scalar_lea.vmem %s1, 64
  %v199 = vld [vmem:[%s198] sm:$0xf]
  %v200 = vld [vmem:[%s198 + $0x4] sm:$0xf]
  %v201 = vld [vmem:[%s198 + $0x8] sm:$0xf]
  %v202 = vld [vmem:[%s198 + $0xc] sm:$0xf]
  %v203 = vld [vmem:[%s198 + $0x10] sm:$0xf]
  %v204 = vld [vmem:[%s198 + $0x14] sm:$0xf]
  %v205 = vld [vmem:[%s198 + $0x18] sm:$0xf]
  %v206 = vld [vmem:[%s198 + $0x1c] sm:$0xf]
  %v209 = vunpack.c.l.b16 %v196
  %v210 = vunpack.c.l.b16 %v197
  %v211 = vpack.c.b16 %v210, %v209
  %v220 = vunpack.c.l.b16 %v199
  %v221 = vunpack.c.l.b16 %v200
  %v222 = vunpack.c.l.b16 %v201
  %v223 = vunpack.c.l.b16 %v202
  %v224 = vunpack.c.l.b16 %v203
  %v225 = vunpack.c.l.b16 %v204
  %v226 = vunpack.c.l.b16 %v205
  %v227 = vunpack.c.l.b16 %v206
  %v228 = vpack.c.b16 %v221, %v220
  %v229 = vpack.c.b16 %v223, %v222
  %v230 = vpack.c.b16 %v225, %v224
  %v231 = vpack.c.b16 %v227, %v226
  %v237 = vsel %vm55, %v211, 0
  %239 = vmatprep.subr.bf16.mxu0 0
  %240 = vmatpush1.bf16.msra.mxu0 %v228
  %241 = vmatprep.subr.bf16.mxu0 0
  %242 = vmatpush1.bf16.msra.mxu0 %v229
  %243 = vmatprep.subr.bf16.mxu0 0
  %244 = vmatpush1.bf16.msra.mxu0 %v230
  %245 = vmatprep.subr.bf16.mxu0 0
  %246 = vmatpush1.bf16.msra.mxu0 %v231
  %247 = vmatprep.subr.bf16.mxu0 0
  %248 = vmatpush1.bf16.msra.mxu0 0
  %249 = vmatprep.subr.bf16.mxu0 0
  %250 = vmatpush1.bf16.msra.mxu0 0
  %251 = vmatprep.subr.bf16.mxu0 0
  %252 = vmatpush1.bf16.msra.mxu0 0
  %253 = vmatprep.subr.bf16.mxu0 0
  %254 = vmatpush1.bf16.msra.mxu0 0
  %255 = vmatprep.subr.bf16.mxu0 0
  %256 = vmatpush1.bf16.msra.mxu0 0
  %257 = vmatprep.subr.bf16.mxu0 0
  %258 = vmatpush1.bf16.msra.mxu0 0
  %259 = vmatprep.subr.bf16.mxu0 0
  %260 = vmatpush1.bf16.msra.mxu0 0
  %261 = vmatprep.subr.bf16.mxu0 0
  %262 = vmatpush1.bf16.msra.mxu0 0
  %263 = vmatprep.subr.bf16.mxu0 0
  %264 = vmatpush1.bf16.msra.mxu0 0
  %265 = vmatprep.subr.bf16.mxu0 0
  %266 = vmatpush1.bf16.msra.mxu0 0
  %267 = vmatprep.subr.bf16.mxu0 0
  %268 = vmatpush1.bf16.msra.mxu0 0
  %269 = vmatprep.subr.bf16.mxu0 0
  %270 = vmatpush1.bf16.msra.mxu0 0
  %271 = vmatprep.mubr.bf16.mxu0 0
  %272 = vmatmul.mubr.bf16.gmra.mrb[0].mxu0 %v237
  %v273 = vpop.f32.mrb[0].mxu0
  %v274 = vadd.f32 0.0, %v273
  %v275 = vpop.f32.mrb[0].mxu0
  %v276 = vpop.f32.mrb[0].mxu0
  %v277 = vadd.f32 0.0, %v276
  %v278 = vpop.f32.mrb[0].mxu0
  %279 = vdwg.mxu0
  %v280 = vadd.f32 %v193, %v274
  %v281 = vadd.f32 %v194, %v277
  %vm282 = vcmp.ge.f32.partialorder %v280, 0.0
  %vm283 = vcmp.ge.f32.partialorder %v281, 0.0
  %v284 = vmul.f32 %v280, 0.2
  %v285 = vmul.f32 %v281, 0.2
  %v286 = vsel %vm282, %v280, %v284
  %v287 = vsel %vm283, %v281, %v285
  %288 = vst [vmem:[%s3] sm:$0xff] %v286
  %289 = vst [vmem:[%s3 + $0x8] sm:$0xff] %v287
  // Predicated region
  $region14: #{generator_forward.17} parent=0 // pred_check
    _
  $region15: #{generator_forward.17} parent=0 // pred_check_branch
    %291 = sbr.rel (0) target = $region17
  $region16: #{generator_forward.17} parent=0 // pred_region
    _
  $region17: #{generator_forward.17} parent=0 // pred_fallthru
    _
  // Predicated region
  $region18: #{generator_forward.17} parent=0 // pred_check
    _
  $region19: #{generator_forward.17} parent=0 // pred_check_branch
    %293 = sbr.rel (0) target = $region21
  $region20: #{generator_forward.17} parent=0 // pred_region
    _
  $region21: #{generator_forward.17} parent=0 // pred_fallthru
    _

// kernel: generator_forward.15
$region0: #{generator_forward.15}
  #allocation0 [shape = 'u32[]', space=smem, size = 0x4, offset = 0x4, fixed_abs, tag = 'smem constant byte address 0x4 - core index']
  #allocation1 [shape = 'u32[144,128]{1,0:T(1,128)}', space=vmem, size = 0x12000, scoped, tag = 'internal scratch']
  #allocation2 [shape = 'f32[8,128]{1,0:T(8,128)}', space=vmem, size = 0x1000, scoped, tag = 'scratch operand']
  #allocation3 [shape = 'f32[8,128]{1,0:T(8,128)}', space=vmem, size = 0x1000, scoped, tag = 'scratch operand']
  #allocation4 [shape = 'f32[8,128]{1,0:T(8,128)}', space=vmem, size = 0x1000, scoped, tag = 'scratch operand']
  #allocation5 [shape = 'f32[8,128]{1,0:T(8,128)}', space=vmem, size = 0x1000, scoped, tag = 'scratch operand']
  %s0 = inlined_call_operand.vmem [shape: f32[8,128], index: 0, kind: input, shape index: {}]
  %s1 = inlined_call_operand.vmem [shape: f32[2,3,128,128], index: 1, kind: input, shape index: {}]
  %s2 = inlined_call_operand.vmem [shape: f32[2,3,128,128], index: 2, kind: input, shape index: {}]
  %s3 = inlined_call_operand.vmem [shape: f32[2,3,1,128], index: 3, kind: input, shape index: {}]
  %s4 = inlined_call_operand.vmem [shape: f32[2,3,1,128], index: 4, kind: input, shape index: {}]
  %s5 = inlined_call_operand.vmem [shape: f32[8,128], index: 5, kind: output, shape index: {}]
  %s6 = sld [smem:[#allocation0]]
  $region44: #{generator_forward.15} parent=0
    _
  %s8 = ssub.s32 1, %s6
  %s9 = scalar_select 0, %s8, %s6
  // Predicated region
  $region2: #{generator_forward.15} parent=0 // pred_check
    _
  $region3: #{generator_forward.15} parent=0 // pred_check_branch
    %11 = sbr.rel (0) target = $region5
  $region4: #{generator_forward.15} parent=0 // pred_region
    _
  $region5: #{generator_forward.15} parent=0 // pred_fallthru
    _
  // Predicated region
  $region6: #{generator_forward.15} parent=0 // pred_check
    _
  $region7: #{generator_forward.15} parent=0 // pred_check_branch
    %13 = sbr.rel (0) target = $region9
  $region8: #{generator_forward.15} parent=0 // pred_region
    _
  $region9: #{generator_forward.15} parent=0 // pred_fallthru
    _
  // Predicated region
  $region10: #{generator_forward.15} parent=0 // pred_check
    _
  $region11: #{generator_forward.15} parent=0 // pred_check_branch
    %15 = sbr.rel (0) target = $region13
  $region12: #{generator_forward.15} parent=0 // pred_region
    _
  $region13: #{generator_forward.15} parent=0 // pred_fallthru
    _
  // Predicated region
  $region14: #{generator_forward.15} parent=0 // pred_check
    _
  $region15: #{generator_forward.15} parent=0 // pred_check_branch
    %17 = sbr.rel (0) target = $region17
  $region16: #{generator_forward.15} parent=0 // pred_region
    _
  $region17: #{generator_forward.15} parent=0 // pred_fallthru
    _
  // Predicated region
  $region18: #{generator_forward.15} parent=0 // pred_check
    _
  $region19: #{generator_forward.15} parent=0 // pred_check_branch
    %19 = sbr.rel (0) target = $region21
  $region20: #{generator_forward.15} parent=0 // pred_region
    _
  $region21: #{generator_forward.15} parent=0 // pred_fallthru
    _
  %v20 = vld [vmem:[%s0] sm:$0xff]
  %v21 = vld [vmem:[%s1] sm:$0xff]
  %v22 = vld [vmem:[%s1 + $0x8] sm:$0xff]
  %v23 = vld [vmem:[%s1 + $0x10] sm:$0xff]
  %v24 = vld [vmem:[%s1 + $0x18] sm:$0xff]
  %v25 = vld [vmem:[%s1 + $0x20] sm:$0xff]
  %v26 = vld [vmem:[%s1 + $0x28] sm:$0xff]
  %v27 = vld [vmem:[%s1 + $0x30] sm:$0xff]
  %v28 = vld [vmem:[%s1 + $0x38] sm:$0xff]
  %v29 = vld [vmem:[%s1 + $0x40] sm:$0xff]
  %v30 = vld [vmem:[%s1 + $0x48] sm:$0xff]
  %v31 = vld [vmem:[%s1 + $0x50] sm:$0xff]
  %v32 = vld [vmem:[%s1 + $0x58] sm:$0xff]
  %v33 = vld [vmem:[%s1 + $0x60] sm:$0xff]
  %v34 = vld [vmem:[%s1 + $0x68] sm:$0xff]
  %v35 = vld [vmem:[%s1 + $0x70] sm:$0xff]
  %v36 = vld [vmem:[%s1 + $0x78] sm:$0xff]
  %v37 = vld [vmem:[%s3] sm:$0x1]
  %v39 = vlaneseq
  %v40 = vshrl.u32 %v39, 7
  %v41 = vsub.s32 0, %v40
  %v42 = vrot.slane %v37, %v41
  %44 = vmatprep.subr.mxu0 0.0
  %45 = vmatpush1.msra.mxu0 %v21
  %46 = vmatprep.subr.mxu0 0.0
  %47 = vmatpush1.msra.mxu0 %v22
  %48 = vmatprep.subr.mxu0 0.0
  %49 = vmatpush1.msra.mxu0 %v23
  %50 = vmatprep.subr.mxu0 0.0
  %51 = vmatpush1.msra.mxu0 %v24
  %52 = vmatprep.subr.mxu0 0.0
  %53 = vmatpush1.msra.mxu0 %v25
  %54 = vmatprep.subr.mxu0 0.0
  %55 = vmatpush1.msra.mxu0 %v26
  %56 = vmatprep.subr.mxu0 0.0
  %57 = vmatpush1.msra.mxu0 %v27
  %58 = vmatprep.subr.mxu0 0.0
  %59 = vmatpush1.msra.mxu0 %v28
  %60 = vmatprep.subr.mxu0 0.0
  %61 = vmatpush1.msra.mxu0 %v29
  %62 = vmatprep.subr.mxu0 0.0
  %63 = vmatpush1.msra.mxu0 %v30
  %64 = vmatprep.subr.mxu0 0.0
  %65 = vmatpush1.msra.mxu0 %v31
  %66 = vmatprep.subr.mxu0 0.0
  %67 = vmatpush1.msra.mxu0 %v32
  %68 = vmatprep.subr.mxu0 0.0
  %69 = vmatpush1.msra.mxu0 %v33
  %70 = vmatprep.subr.mxu0 0.0
  %71 = vmatpush1.msra.mxu0 %v34
  %72 = vmatprep.subr.mxu0 0.0
  %73 = vmatpush1.msra.mxu0 %v35
  %74 = vmatprep.subr.mxu0 0.0
  %75 = vmatpush1.msra.mxu0 %v36
  %76 = vmatprep.subr.mxu0 0.0
  %77 = vmatpush1.msra.mxu0 0.0
  %78 = vmatprep.subr.mxu0 0.0
  %79 = vmatpush1.msra.mxu0 0.0
  %80 = vmatprep.subr.mxu0 0.0
  %81 = vmatpush1.msra.mxu0 0.0
  %82 = vmatprep.subr.mxu0 0.0
  %83 = vmatpush1.msra.mxu0 0.0
  %84 = vmatprep.subr.mxu0 0.0
  %85 = vmatpush1.msra.mxu0 0.0
  %86 = vmatprep.subr.mxu0 0.0
  %87 = vmatpush1.msra.mxu0 0.0
  %88 = vmatprep.subr.mxu0 0.0
  %89 = vmatpush1.msra.mxu0 0.0
  %90 = vmatprep.subr.mxu0 0.0
  %91 = vmatpush1.msra.mxu0 0.0
  %92 = vmatprep.subr.mxu0 0.0
  %93 = vmatpush1.msra.mxu0 0.0
  %94 = vmatprep.subr.mxu0 0.0
  %95 = vmatpush1.msra.mxu0 0.0
  %96 = vmatprep.subr.mxu0 0.0
  %97 = vmatpush1.msra.mxu0 0.0
  %98 = vmatprep.subr.mxu0 0.0
  %99 = vmatpush1.msra.mxu0 0.0
  %100 = vmatprep.subr.mxu0 0.0
  %101 = vmatpush1.msra.mxu0 0.0
  %102 = vmatprep.subr.mxu0 0.0
  %103 = vmatpush1.msra.mxu0 0.0
  %104 = vmatprep.subr.mxu0 0.0
  %105 = vmatpush1.msra.mxu0 0.0
  %106 = vmatprep.subr.mxu0 0.0
  %107 = vmatpush1.msra.mxu0 0.0
  %108 = vmatprep.mubr.f32.mxu0 0.0
  %109 = vmatmul.mubr.f32.gmra.mrb[0].mxu0 %v20
  %v110 = vpop.f32.mrb[0].mxu0
  %v111 = vadd.f32 %v42, %v110
  %v112 = vpop.f32.mrb[0].mxu0
  %113 = vdwg.mxu0
  %114 = vst [vmem:[#allocation2] sm:$0xff] %v111
  %s115 = scalar_lea.vmem %s1, 128
  %v116 = vld [vmem:[%s115] sm:$0xff]
  %v117 = vld [vmem:[%s115 + $0x8] sm:$0xff]
  %v118 = vld [vmem:[%s115 + $0x10] sm:$0xff]
  %v119 = vld [vmem:[%s115 + $0x18] sm:$0xff]
  %v120 = vld [vmem:[%s115 + $0x20] sm:$0xff]
  %v121 = vld [vmem:[%s115 + $0x28] sm:$0xff]
  %v122 = vld [vmem:[%s115 + $0x30] sm:$0xff]
  %v123 = vld [vmem:[%s115 + $0x38] sm:$0xff]
  %v124 = vld [vmem:[%s115 + $0x40] sm:$0xff]
  %v125 = vld [vmem:[%s115 + $0x48] sm:$0xff]
  %v126 = vld [vmem:[%s115 + $0x50] sm:$0xff]
  %v127 = vld [vmem:[%s115 + $0x58] sm:$0xff]
  %v128 = vld [vmem:[%s115 + $0x60] sm:$0xff]
  %v129 = vld [vmem:[%s115 + $0x68] sm:$0xff]
  %v130 = vld [vmem:[%s115 + $0x70] sm:$0xff]
  %v131 = vld [vmem:[%s115 + $0x78] sm:$0xff]
  %s132 = scalar_lea.vmem %s3, 1
  %v133 = vld [vmem:[%s132] sm:$0x1]
  %v135 = vlaneseq
  %v136 = vshrl.u32 %v135, 7
  %v137 = vsub.s32 0, %v136
  %v138 = vrot.slane %v133, %v137
  %140 = vmatprep.subr.mxu0 0.0
  %141 = vmatpush1.msra.mxu0 %v116
  %142 = vmatprep.subr.mxu0 0.0
  %143 = vmatpush1.msra.mxu0 %v117
  %144 = vmatprep.subr.mxu0 0.0
  %145 = vmatpush1.msra.mxu0 %v118
  %146 = vmatprep.subr.mxu0 0.0
  %147 = vmatpush1.msra.mxu0 %v119
  %148 = vmatprep.subr.mxu0 0.0
  %149 = vmatpush1.msra.mxu0 %v120
  %150 = vmatprep.subr.mxu0 0.0
  %151 = vmatpush1.msra.mxu0 %v121
  %152 = vmatprep.subr.mxu0 0.0
  %153 = vmatpush1.msra.mxu0 %v122
  %154 = vmatprep.subr.mxu0 0.0
  %155 = vmatpush1.msra.mxu0 %v123
  %156 = vmatprep.subr.mxu0 0.0
  %157 = vmatpush1.msra.mxu0 %v124
  %158 = vmatprep.subr.mxu0 0.0
  %159 = vmatpush1.msra.mxu0 %v125
  %160 = vmatprep.subr.mxu0 0.0
  %161 = vmatpush1.msra.mxu0 %v126
  %162 = vmatprep.subr.mxu0 0.0
  %163 = vmatpush1.msra.mxu0 %v127
  %164 = vmatprep.subr.mxu0 0.0
  %165 = vmatpush1.msra.mxu0 %v128
  %166 = vmatprep.subr.mxu0 0.0
  %167 = vmatpush1.msra.mxu0 %v129
  %168 = vmatprep.subr.mxu0 0.0
  %169 = vmatpush1.msra.mxu0 %v130
  %170 = vmatprep.subr.mxu0 0.0
  %171 = vmatpush1.msra.mxu0 %v131
  %172 = vmatprep.subr.mxu0 0.0
  %173 = vmatpush1.msra.mxu0 0.0
  %174 = vmatprep.subr.mxu0 0.0
  %175 = vmatpush1.msra.mxu0 0.0
  %176 = vmatprep.subr.mxu0 0.0
  %177 = vmatpush1.msra.mxu0 0.0
  %178 = vmatprep.subr.mxu0 0.0
  %179 = vmatpush1.msra.mxu0 0.0
  %180 = vmatprep.subr.mxu0 0.0
  %181 = vmatpush1.msra.mxu0 0.0
  %182 = vmatprep.subr.mxu0 0.0
  %183 = vmatpush1.msra.mxu0 0.0
  %184 = vmatprep.subr.mxu0 0.0
  %185 = vmatpush1.msra.mxu0 0.0
  %186 = vmatprep.subr.mxu0 0.0
  %187 = vmatpush1.msra.mxu0 0.0
  %188 = vmatprep.subr.mxu0 0.0
  %189 = vmatpush1.msra.mxu0 0.0
  %190 = vmatprep.subr.mxu0 0.0
  %191 = vmatpush1.msra.mxu0 0.0
  %192 = vmatprep.subr.mxu0 0.0
  %193 = vmatpush1.msra.mxu0 0.0
  %194 = vmatprep.subr.mxu0 0.0
  %195 = vmatpush1.msra.mxu0 0.0
  %196 = vmatprep.subr.mxu0 0.0
  %197 = vmatpush1.msra.mxu0 0.0
  %198 = vmatprep.subr.mxu0 0.0
  %199 = vmatpush1.msra.mxu0 0.0
  %200 = vmatprep.subr.mxu0 0.0
  %201 = vmatpush1.msra.mxu0 0.0
  %202 = vmatprep.subr.mxu0 0.0
  %203 = vmatpush1.msra.mxu0 0.0
  %204 = vmatprep.mubr.f32.mxu0 0.0
  %205 = vmatmul.mubr.f32.gmra.mrb[0].mxu0 %v20
  %v206 = vpop.f32.mrb[0].mxu0
  %v207 = vadd.f32 %v138, %v206
  %v208 = vpop.f32.mrb[0].mxu0
  %209 = vdwg.mxu0
  %210 = vst [vmem:[#allocation3] sm:$0xff] %v207
  %s211 = scalar_lea.vmem %s1, 256
  %v212 = vld [vmem:[%s211] sm:$0xff]
  %v213 = vld [vmem:[%s211 + $0x8] sm:$0xff]
  %v214 = vld [vmem:[%s211 + $0x10] sm:$0xff]
  %v215 = vld [vmem:[%s211 + $0x18] sm:$0xff]
  %v216 = vld [vmem:[%s211 + $0x20] sm:$0xff]
  %v217 = vld [vmem:[%s211 + $0x28] sm:$0xff]
  %v218 = vld [vmem:[%s211 + $0x30] sm:$0xff]
  %v219 = vld [vmem:[%s211 + $0x38] sm:$0xff]
  %v220 = vld [vmem:[%s211 + $0x40] sm:$0xff]
  %v221 = vld [vmem:[%s211 + $0x48] sm:$0xff]
  %v222 = vld [vmem:[%s211 + $0x50] sm:$0xff]
  %v223 = vld [vmem:[%s211 + $0x58] sm:$0xff]
  %v224 = vld [vmem:[%s211 + $0x60] sm:$0xff]
  %v225 = vld [vmem:[%s211 + $0x68] sm:$0xff]
  %v226 = vld [vmem:[%s211 + $0x70] sm:$0xff]
  %v227 = vld [vmem:[%s211 + $0x78] sm:$0xff]
  %s228 = scalar_lea.vmem %s3, 2
  %v229 = vld [vmem:[%s228] sm:$0x1]
  %v231 = vlaneseq
  %v232 = vshrl.u32 %v231, 7
  %v233 = vsub.s32 0, %v232
  %v234 = vrot.slane %v229, %v233
  %236 = vmatprep.subr.mxu0 0.0
  %237 = vmatpush1.msra.mxu0 %v212
  %238 = vmatprep.subr.mxu0 0.0
  %239 = vmatpush1.msra.mxu0 %v213
  %240 = vmatprep.subr.mxu0 0.0
  %241 = vmatpush1.msra.mxu0 %v214
  %242 = vmatprep.subr.mxu0 0.0
  %243 = vmatpush1.msra.mxu0 %v215
  %244 = vmatprep.subr.mxu0 0.0
  %245 = vmatpush1.msra.mxu0 %v216
  %246 = vmatprep.subr.mxu0 0.0
  %247 = vmatpush1.msra.mxu0 %v217
  %248 = vmatprep.subr.mxu0 0.0
  %249 = vmatpush1.msra.mxu0 %v218
  %250 = vmatprep.subr.mxu0 0.0
  %251 = vmatpush1.msra.mxu0 %v219
  %252 = vmatprep.subr.mxu0 0.0
  %253 = vmatpush1.msra.mxu0 %v220
  %254 = vmatprep.subr.mxu0 0.0
  %255 = vmatpush1.msra.mxu0 %v221
  %256 = vmatprep.subr.mxu0 0.0
  %257 = vmatpush1.msra.mxu0 %v222
  %258 = vmatprep.subr.mxu0 0.0
  %259 = vmatpush1.msra.mxu0 %v223
  %260 = vmatprep.subr.mxu0 0.0
  %261 = vmatpush1.msra.mxu0 %v224
  %262 = vmatprep.subr.mxu0 0.0
  %263 = vmatpush1.msra.mxu0 %v225
  %264 = vmatprep.subr.mxu0 0.0
  %265 = vmatpush1.msra.mxu0 %v226
  %266 = vmatprep.subr.mxu0 0.0
  %267 = vmatpush1.msra.mxu0 %v227
  %268 = vmatprep.subr.mxu0 0.0
  %269 = vmatpush1.msra.mxu0 0.0
  %270 = vmatprep.subr.mxu0 0.0
  %271 = vmatpush1.msra.mxu0 0.0
  %272 = vmatprep.subr.mxu0 0.0
  %273 = vmatpush1.msra.mxu0 0.0
  %274 = vmatprep.subr.mxu0 0.0
  %275 = vmatpush1.msra.mxu0 0.0
  %276 = vmatprep.subr.mxu0 0.0
  %277 = vmatpush1.msra.mxu0 0.0
  %278 = vmatprep.subr.mxu0 0.0
  %279 = vmatpush1.msra.mxu0 0.0
  %280 = vmatprep.subr.mxu0 0.0
  %281 = vmatpush1.msra.mxu0 0.0
  %282 = vmatprep.subr.mxu0 0.0
  %283 = vmatpush1.msra.mxu0 0.0
  %284 = vmatprep.subr.mxu0 0.0
  %285 = vmatpush1.msra.mxu0 0.0
  %286 = vmatprep.subr.mxu0 0.0
  %287 = vmatpush1.msra.mxu0 0.0
  %288 = vmatprep.subr.mxu0 0.0
  %289 = vmatpush1.msra.mxu0 0.0
  %290 = vmatprep.subr.mxu0 0.0
  %291 = vmatpush1.msra.mxu0 0.0
  %292 = vmatprep.subr.mxu0 0.0
  %293 = vmatpush1.msra.mxu0 0.0
  %294 = vmatprep.subr.mxu0 0.0
  %295 = vmatpush1.msra.mxu0 0.0
  %296 = vmatprep.subr.mxu0 0.0
  %297 = vmatpush1.msra.mxu0 0.0
  %298 = vmatprep.subr.mxu0 0.0
  %299 = vmatpush1.msra.mxu0 0.0
  %300 = vmatprep.mubr.f32.mxu0 0.0
  %301 = vmatmul.mubr.f32.gmra.mrb[0].mxu0 %v20
  %v302 = vpop.f32.mrb[0].mxu0
  %v303 = vadd.f32 %v234, %v302
  %v304 = vpop.f32.mrb[0].mxu0
  %305 = vdwg.mxu0
  %306 = vst [vmem:[#allocation4] sm:$0xff] %v303
  loop: start=0, step=1, limit=8
  $region22: #{generator_forward.15} parent=0 // loop_pre_header
    _
  $region23: #{generator_forward.15} parent=0 // loop_header
    %s308 = sphi 0, %s312
    %p309 = scmp.ge.s32.totalorder %s308, 8
    %v313 = vphi 0.0, %v605
  $region24: #{generator_forward.15} parent=0 // loop_header_branch
    %311 = sbr.rel (%p309) target = $region28
  $region25: #{generator_forward.15} parent=0 // loop_body
    %v314 = vld [vmem:[%s2] sm:$0xff]
    %v315 = vld [vmem:[%s2 + $0x8] sm:$0xff]
    %v316 = vld [vmem:[%s2 + $0x10] sm:$0xff]
    %v317 = vld [vmem:[%s2 + $0x18] sm:$0xff]
    %v318 = vld [vmem:[%s2 + $0x20] sm:$0xff]
    %v319 = vld [vmem:[%s2 + $0x28] sm:$0xff]
    %v320 = vld [vmem:[%s2 + $0x30] sm:$0xff]
    %v321 = vld [vmem:[%s2 + $0x38] sm:$0xff]
    %v322 = vld [vmem:[%s2 + $0x40] sm:$0xff]
    %v323 = vld [vmem:[%s2 + $0x48] sm:$0xff]
    %v324 = vld [vmem:[%s2 + $0x50] sm:$0xff]
    %v325 = vld [vmem:[%s2 + $0x58] sm:$0xff]
    %v326 = vld [vmem:[%s2 + $0x60] sm:$0xff]
    %v327 = vld [vmem:[%s2 + $0x68] sm:$0xff]
    %v328 = vld [vmem:[%s2 + $0x70] sm:$0xff]
    %v329 = vld [vmem:[%s2 + $0x78] sm:$0xff]
    %v330 = vld [vmem:[%s4] sm:$0x1]
    %331 = vmatprep.subr.mxu0 0.0
    %332 = vmatpush1.msra.mxu0 %v314
    %333 = vmatprep.subr.mxu0 0.0
    %334 = vmatpush1.msra.mxu0 %v315
    %335 = vmatprep.subr.mxu0 0.0
    %336 = vmatpush1.msra.mxu0 %v316
    %337 = vmatprep.subr.mxu0 0.0
    %338 = vmatpush1.msra.mxu0 %v317
    %339 = vmatprep.subr.mxu0 0.0
    %340 = vmatpush1.msra.mxu0 %v318
    %341 = vmatprep.subr.mxu0 0.0
    %342 = vmatpush1.msra.mxu0 %v319
    %343 = vmatprep.subr.mxu0 0.0
    %344 = vmatpush1.msra.mxu0 %v320
    %345 = vmatprep.subr.mxu0 0.0
    %346 = vmatpush1.msra.mxu0 %v321
    %347 = vmatprep.subr.mxu0 0.0
    %348 = vmatpush1.msra.mxu0 %v322
    %349 = vmatprep.subr.mxu0 0.0
    %350 = vmatpush1.msra.mxu0 %v323
    %351 = vmatprep.subr.mxu0 0.0
    %352 = vmatpush1.msra.mxu0 %v324
    %353 = vmatprep.subr.mxu0 0.0
    %354 = vmatpush1.msra.mxu0 %v325
    %355 = vmatprep.subr.mxu0 0.0
    %356 = vmatpush1.msra.mxu0 %v326
    %357 = vmatprep.subr.mxu0 0.0
    %358 = vmatpush1.msra.mxu0 %v327
    %359 = vmatprep.subr.mxu0 0.0
    %360 = vmatpush1.msra.mxu0 %v328
    %361 = vmatprep.subr.mxu0 0.0
    %362 = vmatpush1.msra.mxu0 %v329
    %363 = vmatprep.subr.mxu0 0.0
    %364 = vmatpush1.msra.mxu0 0.0
    %365 = vmatprep.subr.mxu0 0.0
    %366 = vmatpush1.msra.mxu0 0.0
    %367 = vmatprep.subr.mxu0 0.0
    %368 = vmatpush1.msra.mxu0 0.0
    %369 = vmatprep.subr.mxu0 0.0
    %370 = vmatpush1.msra.mxu0 0.0
    %371 = vmatprep.subr.mxu0 0.0
    %372 = vmatpush1.msra.mxu0 0.0
    %373 = vmatprep.subr.mxu0 0.0
    %374 = vmatpush1.msra.mxu0 0.0
    %375 = vmatprep.subr.mxu0 0.0
    %376 = vmatpush1.msra.mxu0 0.0
    %377 = vmatprep.subr.mxu0 0.0
    %378 = vmatpush1.msra.mxu0 0.0
    %379 = vmatprep.subr.mxu0 0.0
    %380 = vmatpush1.msra.mxu0 0.0
    %381 = vmatprep.subr.mxu0 0.0
    %382 = vmatpush1.msra.mxu0 0.0
    %383 = vmatprep.subr.mxu0 0.0
    %384 = vmatpush1.msra.mxu0 0.0
    %385 = vmatprep.subr.mxu0 0.0
    %386 = vmatpush1.msra.mxu0 0.0
    %387 = vmatprep.subr.mxu0 0.0
    %388 = vmatpush1.msra.mxu0 0.0
    %389 = vmatprep.subr.mxu0 0.0
    %390 = vmatpush1.msra.mxu0 0.0
    %391 = vmatprep.subr.mxu0 0.0
    %392 = vmatpush1.msra.mxu0 0.0
    %393 = vmatprep.subr.mxu0 0.0
    %394 = vmatpush1.msra.mxu0 0.0
    %395 = vmatprep.mubr.f32.mxu0 0.0
    %396 = vmatmul.mubr.f32.gmra.mrb[0].mxu0 %v313
    %v397 = vpop.f32.mrb[0].mxu0
    %v398 = vadd.f32 %v330, %v397
    %v399 = vpop.f32.mrb[0].mxu0
    %400 = vdwg.mxu0
    %s401 = scalar_lea.vmem %s2, 128
    %v402 = vld [vmem:[%s401] sm:$0xff]
    %v403 = vld [vmem:[%s401 + $0x8] sm:$0xff]
    %v404 = vld [vmem:[%s401 + $0x10] sm:$0xff]
    %v405 = vld [vmem:[%s401 + $0x18] sm:$0xff]
    %v406 = vld [vmem:[%s401 + $0x20] sm:$0xff]
    %v407 = vld [vmem:[%s401 + $0x28] sm:$0xff]
    %v408 = vld [vmem:[%s401 + $0x30] sm:$0xff]
    %v409 = vld [vmem:[%s401 + $0x38] sm:$0xff]
    %v410 = vld [vmem:[%s401 + $0x40] sm:$0xff]
    %v411 = vld [vmem:[%s401 + $0x48] sm:$0xff]
    %v412 = vld [vmem:[%s401 + $0x50] sm:$0xff]
    %v413 = vld [vmem:[%s401 + $0x58] sm:$0xff]
    %v414 = vld [vmem:[%s401 + $0x60] sm:$0xff]
    %v415 = vld [vmem:[%s401 + $0x68] sm:$0xff]
    %v416 = vld [vmem:[%s401 + $0x70] sm:$0xff]
    %v417 = vld [vmem:[%s401 + $0x78] sm:$0xff]
    %s418 = scalar_lea.vmem %s4, 1
    %v419 = vld [vmem:[%s418] sm:$0x1]
    %420 = vmatprep.subr.mxu0 0.0
    %421 = vmatpush1.msra.mxu0 %v402
    %422 = vmatprep.subr.mxu0 0.0
    %423 = vmatpush1.msra.mxu0 %v403
    %424 = vmatprep.subr.mxu0 0.0
    %425 = vmatpush1.msra.mxu0 %v404
    %426 = vmatprep.subr.mxu0 0.0
    %427 = vmatpush1.msra.mxu0 %v405
    %428 = vmatprep.subr.mxu0 0.0
    %429 = vmatpush1.msra.mxu0 %v406
    %430 = vmatprep.subr.mxu0 0.0
    %431 = vmatpush1.msra.mxu0 %v407
    %432 = vmatprep.subr.mxu0 0.0
    %433 = vmatpush1.msra.mxu0 %v408
    %434 = vmatprep.subr.mxu0 0.0
    %435 = vmatpush1.msra.mxu0 %v409
    %436 = vmatprep.subr.mxu0 0.0
    %437 = vmatpush1.msra.mxu0 %v410
    %438 = vmatprep.subr.mxu0 0.0
    %439 = vmatpush1.msra.mxu0 %v411
    %440 = vmatprep.subr.mxu0 0.0
    %441 = vmatpush1.msra.mxu0 %v412
    %442 = vmatprep.subr.mxu0 0.0
    %443 = vmatpush1.msra.mxu0 %v413
    %444 = vmatprep.subr.mxu0 0.0
    %445 = vmatpush1.msra.mxu0 %v414
    %446 = vmatprep.subr.mxu0 0.0
    %447 = vmatpush1.msra.mxu0 %v415
    %448 = vmatprep.subr.mxu0 0.0
    %449 = vmatpush1.msra.mxu0 %v416
    %450 = vmatprep.subr.mxu0 0.0
    %451 = vmatpush1.msra.mxu0 %v417
    %452 = vmatprep.subr.mxu0 0.0
    %453 = vmatpush1.msra.mxu0 0.0
    %454 = vmatprep.subr.mxu0 0.0
    %455 = vmatpush1.msra.mxu0 0.0
    %456 = vmatprep.subr.mxu0 0.0
    %457 = vmatpush1.msra.mxu0 0.0
    %458 = vmatprep.subr.mxu0 0.0
    %459 = vmatpush1.msra.mxu0 0.0
    %460 = vmatprep.subr.mxu0 0.0
    %461 = vmatpush1.msra.mxu0 0.0
    %462 = vmatprep.subr.mxu0 0.0
    %463 = vmatpush1.msra.mxu0 0.0
    %464 = vmatprep.subr.mxu0 0.0
    %465 = vmatpush1.msra.mxu0 0.0
    %466 = vmatprep.subr.mxu0 0.0
    %467 = vmatpush1.msra.mxu0 0.0
    %468 = vmatprep.subr.mxu0 0.0
    %469 = vmatpush1.msra.mxu0 0.0
    %470 = vmatprep.subr.mxu0 0.0
    %471 = vmatpush1.msra.mxu0 0.0
    %472 = vmatprep.subr.mxu0 0.0
    %473 = vmatpush1.msra.mxu0 0.0
    %474 = vmatprep.subr.mxu0 0.0
    %475 = vmatpush1.msra.mxu0 0.0
    %476 = vmatprep.subr.mxu0 0.0
    %477 = vmatpush1.msra.mxu0 0.0
    %478 = vmatprep.subr.mxu0 0.0
    %479 = vmatpush1.msra.mxu0 0.0
    %480 = vmatprep.subr.mxu0 0.0
    %481 = vmatpush1.msra.mxu0 0.0
    %482 = vmatprep.subr.mxu0 0.0
    %483 = vmatpush1.msra.mxu0 0.0
    %484 = vmatprep.mubr.f32.mxu0 0.0
    %485 = vmatmul.mubr.f32.gmra.mrb[0].mxu0 %v313
    %v486 = vpop.f32.mrb[0].mxu0
    %v487 = vadd.f32 %v419, %v486
    %v488 = vpop.f32.mrb[0].mxu0
    %489 = vdwg.mxu0
    %s490 = scalar_lea.vmem %s2, 256
    %v491 = vld [vmem:[%s490] sm:$0xff]
    %v492 = vld [vmem:[%s490 + $0x8] sm:$0xff]
    %v493 = vld [vmem:[%s490 + $0x10] sm:$0xff]
    %v494 = vld [vmem:[%s490 + $0x18] sm:$0xff]
    %v495 = vld [vmem:[%s490 + $0x20] sm:$0xff]
    %v496 = vld [vmem:[%s490 + $0x28] sm:$0xff]
    %v497 = vld [vmem:[%s490 + $0x30] sm:$0xff]
    %v498 = vld [vmem:[%s490 + $0x38] sm:$0xff]
    %v499 = vld [vmem:[%s490 + $0x40] sm:$0xff]
    %v500 = vld [vmem:[%s490 + $0x48] sm:$0xff]
    %v501 = vld [vmem:[%s490 + $0x50] sm:$0xff]
    %v502 = vld [vmem:[%s490 + $0x58] sm:$0xff]
    %v503 = vld [vmem:[%s490 + $0x60] sm:$0xff]
    %v504 = vld [vmem:[%s490 + $0x68] sm:$0xff]
    %v505 = vld [vmem:[%s490 + $0x70] sm:$0xff]
    %v506 = vld [vmem:[%s490 + $0x78] sm:$0xff]
    %s507 = scalar_lea.vmem %s4, 2
    %v508 = vld [vmem:[%s507] sm:$0x1]
    %509 = vmatprep.subr.mxu0 0.0
    %510 = vmatpush1.msra.mxu0 %v491
    %511 = vmatprep.subr.mxu0 0.0
    %512 = vmatpush1.msra.mxu0 %v492
    %513 = vmatprep.subr.mxu0 0.0
    %514 = vmatpush1.msra.mxu0 %v493
    %515 = vmatprep.subr.mxu0 0.0
    %516 = vmatpush1.msra.mxu0 %v494
    %517 = vmatprep.subr.mxu0 0.0
    %518 = vmatpush1.msra.mxu0 %v495
    %519 = vmatprep.subr.mxu0 0.0
    %520 = vmatpush1.msra.mxu0 %v496
    %521 = vmatprep.subr.mxu0 0.0
    %522 = vmatpush1.msra.mxu0 %v497
    %523 = vmatprep.subr.mxu0 0.0
    %524 = vmatpush1.msra.mxu0 %v498
    %525 = vmatprep.subr.mxu0 0.0
    %526 = vmatpush1.msra.mxu0 %v499
    %527 = vmatprep.subr.mxu0 0.0
    %528 = vmatpush1.msra.mxu0 %v500
    %529 = vmatprep.subr.mxu0 0.0
    %530 = vmatpush1.msra.mxu0 %v501
    %531 = vmatprep.subr.mxu0 0.0
    %532 = vmatpush1.msra.mxu0 %v502
    %533 = vmatprep.subr.mxu0 0.0
    %534 = vmatpush1.msra.mxu0 %v503
    %535 = vmatprep.subr.mxu0 0.0
    %536 = vmatpush1.msra.mxu0 %v504
    %537 = vmatprep.subr.mxu0 0.0
    %538 = vmatpush1.msra.mxu0 %v505
    %539 = vmatprep.subr.mxu0 0.0
    %540 = vmatpush1.msra.mxu0 %v506
    %541 = vmatprep.subr.mxu0 0.0
    %542 = vmatpush1.msra.mxu0 0.0
    %543 = vmatprep.subr.mxu0 0.0
    %544 = vmatpush1.msra.mxu0 0.0
    %545 = vmatprep.subr.mxu0 0.0
    %546 = vmatpush1.msra.mxu0 0.0
    %547 = vmatprep.subr.mxu0 0.0
    %548 = vmatpush1.msra.mxu0 0.0
    %549 = vmatprep.subr.mxu0 0.0
    %550 = vmatpush1.msra.mxu0 0.0
    %551 = vmatprep.subr.mxu0 0.0
    %552 = vmatpush1.msra.mxu0 0.0
    %553 = vmatprep.subr.mxu0 0.0
    %554 = vmatpush1.msra.mxu0 0.0
    %555 = vmatprep.subr.mxu0 0.0
    %556 = vmatpush1.msra.mxu0 0.0
    %557 = vmatprep.subr.mxu0 0.0
    %558 = vmatpush1.msra.mxu0 0.0
    %559 = vmatprep.subr.mxu0 0.0
    %560 = vmatpush1.msra.mxu0 0.0
    %561 = vmatprep.subr.mxu0 0.0
    %562 = vmatpush1.msra.mxu0 0.0
    %563 = vmatprep.subr.mxu0 0.0
    %564 = vmatpush1.msra.mxu0 0.0
    %565 = vmatprep.subr.mxu0 0.0
    %566 = vmatpush1.msra.mxu0 0.0
    %567 = vmatprep.subr.mxu0 0.0
    %568 = vmatpush1.msra.mxu0 0.0
    %569 = vmatprep.subr.mxu0 0.0
    %570 = vmatpush1.msra.mxu0 0.0
    %571 = vmatprep.subr.mxu0 0.0
    %572 = vmatpush1.msra.mxu0 0.0
    %573 = vmatprep.mubr.f32.mxu0 0.0
    %574 = vmatmul.mubr.f32.gmra.mrb[0].mxu0 %v313
    %v575 = vpop.f32.mrb[0].mxu0
    %v576 = vadd.f32 %v508, %v575
    %v577 = vpop.f32.mrb[0].mxu0
    %578 = vdwg.mxu0
    %s579 = scalar_lea.vmem [#allocation2], %s308
    %v580 = vld [vmem:[%s579] sm:$0x1]
    %v581 = vadd.f32 %v580, %v398
    %v582 = vxor.u32 %v581, 2147483648
    %v583 = vmul.f32 %v582, 1.442695
    %v584 = vpow.pop %v583
    %v585 = vadd.f32 %v584, 1.0
    %v586 = vrcp.pop %v585
    %v587 = vmul.f32 1.0, %v586
    %s588 = scalar_lea.vmem [#allocation3], %s308
    %v589 = vld [vmem:[%s588] sm:$0x1]
    %v590 = vadd.f32 %v589, %v487
    %v591 = vxor.u32 %v590, 2147483648
    %v592 = vmul.f32 %v591, 1.442695
    %v593 = vpow.pop %v592
    %v594 = vadd.f32 %v593, 1.0
    %v595 = vrcp.pop %v594
    %v596 = vmul.f32 1.0, %v595
    %s597 = scalar_lea.vmem [#allocation4], %s308
    %v598 = vld [vmem:[%s597] sm:$0x1]
    %v599 = vmul.f32 %v587, %v576
    %v600 = vadd.f32 %v598, %v599
    %v601 = vtanh.pop %v600
    %v602 = vsub.f32 1.0, %v596
    %v603 = vmul.f32 %v602, %v601
    %v604 = vmul.f32 %v596, %v313
    %v605 = vadd.f32 %v603, %v604
    %v606 = vmul.f32 %v605, 0.999995
    %s607 = scalar_lea.vmem [#allocation5], %s308
    %608 = vst [vmem:[%s607] sm:$0x1] %v606
  $region26: #{generator_forward.15} parent=0 // loop_footer
    %s312 = sadd.s32 1, %s308
  $region27: #{generator_forward.15} parent=0 // loop_footer_branch
    %307 = sbr.rel target = $region23
  $region28: #{generator_forward.15} parent=0 // loop_exit
    _
  %v609 = vld [vmem:[#allocation5] sm:$0xff]
  %s610 = scalar_lea.vmem %s1, 384
  %v611 = vld [vmem:[%s610] sm:$0xff]
  %v612 = vld [vmem:[%s610 + $0x8] sm:$0xff]
  %v613 = vld [vmem:[%s610 + $0x10] sm:$0xff]
  %v614 = vld [vmem:[%s610 + $0x18] sm:$0xff]
  %v615 = vld [vmem:[%s610 + $0x20] sm:$0xff]
  %v616 = vld [vmem:[%s610 + $0x28] sm:$0xff]
  %v617 = vld [vmem:[%s610 + $0x30] sm:$0xff]
  %v618 = vld [vmem:[%s610 + $0x38] sm:$0xff]
  %v619 = vld [vmem:[%s610 + $0x40] sm:$0xff]
  %v620 = vld [vmem:[%s610 + $0x48] sm:$0xff]
  %v621 = vld [vmem:[%s610 + $0x50] sm:$0xff]
  %v622 = vld [vmem:[%s610 + $0x58] sm:$0xff]
  %v623 = vld [vmem:[%s610 + $0x60] sm:$0xff]
  %v624 = vld [vmem:[%s610 + $0x68] sm:$0xff]
  %v625 = vld [vmem:[%s610 + $0x70] sm:$0xff]
  %v626 = vld [vmem:[%s610 + $0x78] sm:$0xff]
  %s627 = scalar_lea.vmem %s3, 3
  %v628 = vld [vmem:[%s627] sm:$0x1]
  %v630 = vlaneseq
  %v631 = vshrl.u32 %v630, 7
  %v632 = vsub.s32 0, %v631
  %v633 = vrot.slane %v628, %v632
  %635 = vmatprep.subr.mxu0 0.0
  %636 = vmatpush1.msra.mxu0 %v611
  %637 = vmatprep.subr.mxu0 0.0
  %638 = vmatpush1.msra.mxu0 %v612
  %639 = vmatprep.subr.mxu0 0.0
  %640 = vmatpush1.msra.mxu0 %v613
  %641 = vmatprep.subr.mxu0 0.0
  %642 = vmatpush1.msra.mxu0 %v614
  %643 = vmatprep.subr.mxu0 0.0
  %644 = vmatpush1.msra.mxu0 %v615
  %645 = vmatprep.subr.mxu0 0.0
  %646 = vmatpush1.msra.mxu0 %v616
  %647 = vmatprep.subr.mxu0 0.0
  %648 = vmatpush1.msra.mxu0 %v617
  %649 = vmatprep.subr.mxu0 0.0
  %650 = vmatpush1.msra.mxu0 %v618
  %651 = vmatprep.subr.mxu0 0.0
  %652 = vmatpush1.msra.mxu0 %v619
  %653 = vmatprep.subr.mxu0 0.0
  %654 = vmatpush1.msra.mxu0 %v620
  %655 = vmatprep.subr.mxu0 0.0
  %656 = vmatpush1.msra.mxu0 %v621
  %657 = vmatprep.subr.mxu0 0.0
  %658 = vmatpush1.msra.mxu0 %v622
  %659 = vmatprep.subr.mxu0 0.0
  %660 = vmatpush1.msra.mxu0 %v623
  %661 = vmatprep.subr.mxu0 0.0
  %662 = vmatpush1.msra.mxu0 %v624
  %663 = vmatprep.subr.mxu0 0.0
  %664 = vmatpush1.msra.mxu0 %v625
  %665 = vmatprep.subr.mxu0 0.0
  %666 = vmatpush1.msra.mxu0 %v626
  %667 = vmatprep.subr.mxu0 0.0
  %668 = vmatpush1.msra.mxu0 0.0
  %669 = vmatprep.subr.mxu0 0.0
  %670 = vmatpush1.msra.mxu0 0.0
  %671 = vmatprep.subr.mxu0 0.0
  %672 = vmatpush1.msra.mxu0 0.0
  %673 = vmatprep.subr.mxu0 0.0
  %674 = vmatpush1.msra.mxu0 0.0
  %675 = vmatprep.subr.mxu0 0.0
  %676 = vmatpush1.msra.mxu0 0.0
  %677 = vmatprep.subr.mxu0 0.0
  %678 = vmatpush1.msra.mxu0 0.0
  %679 = vmatprep.subr.mxu0 0.0
  %680 = vmatpush1.msra.mxu0 0.0
  %681 = vmatprep.subr.mxu0 0.0
  %682 = vmatpush1.msra.mxu0 0.0
  %683 = vmatprep.subr.mxu0 0.0
  %684 = vmatpush1.msra.mxu0 0.0
  %685 = vmatprep.subr.mxu0 0.0
  %686 = vmatpush1.msra.mxu0 0.0
  %687 = vmatprep.subr.mxu0 0.0
  %688 = vmatpush1.msra.mxu0 0.0
  %689 = vmatprep.subr.mxu0 0.0
  %690 = vmatpush1.msra.mxu0 0.0
  %691 = vmatprep.subr.mxu0 0.0
  %692 = vmatpush1.msra.mxu0 0.0
  %693 = vmatprep.subr.mxu0 0.0
  %694 = vmatpush1.msra.mxu0 0.0
  %695 = vmatprep.subr.mxu0 0.0
  %696 = vmatpush1.msra.mxu0 0.0
  %697 = vmatprep.subr.mxu0 0.0
  %698 = vmatpush1.msra.mxu0 0.0
  %699 = vmatprep.mubr.f32.mxu0 0.0
  %700 = vmatmul.mubr.f32.gmra.mrb[0].mxu0 %v609
  %v701 = vpop.f32.mrb[0].mxu0
  %v702 = vadd.f32 %v633, %v701
  %v703 = vpop.f32.mrb[0].mxu0
  %704 = vdwg.mxu0
  %705 = vst [vmem:[#allocation2] sm:$0xff] %v702
  %s706 = scalar_lea.vmem %s1, 512
  %v707 = vld [vmem:[%s706] sm:$0xff]
  %v708 = vld [vmem:[%s706 + $0x8] sm:$0xff]
  %v709 = vld [vmem:[%s706 + $0x10] sm:$0xff]
  %v710 = vld [vmem:[%s706 + $0x18] sm:$0xff]
  %v711 = vld [vmem:[%s706 + $0x20] sm:$0xff]
  %v712 = vld [vmem:[%s706 + $0x28] sm:$0xff]
  %v713 = vld [vmem:[%s706 + $0x30] sm:$0xff]
  %v714 = vld [vmem:[%s706 + $0x38] sm:$0xff]
  %v715 = vld [vmem:[%s706 + $0x40] sm:$0xff]
  %v716 = vld [vmem:[%s706 + $0x48] sm:$0xff]
  %v717 = vld [vmem:[%s706 + $0x50] sm:$0xff]
  %v718 = vld [vmem:[%s706 + $0x58] sm:$0xff]
  %v719 = vld [vmem:[%s706 + $0x60] sm:$0xff]
  %v720 = vld [vmem:[%s706 + $0x68] sm:$0xff]
  %v721 = vld [vmem:[%s706 + $0x70] sm:$0xff]
  %v722 = vld [vmem:[%s706 + $0x78] sm:$0xff]
  %s723 = scalar_lea.vmem %s3, 4
  %v724 = vld [vmem:[%s723] sm:$0x1]
  %v726 = vlaneseq
  %v727 = vshrl.u32 %v726, 7
  %v728 = vsub.s32 0, %v727
  %v729 = vrot.slane %v724, %v728
  %731 = vmatprep.subr.mxu0 0.0
  %732 = vmatpush1.msra.mxu0 %v707
  %733 = vmatprep.subr.mxu0 0.0
  %734 = vmatpush1.msra.mxu0 %v708
  %735 = vmatprep.subr.mxu0 0.0
  %736 = vmatpush1.msra.mxu0 %v709
  %737 = vmatprep.subr.mxu0 0.0
  %738 = vmatpush1.msra.mxu0 %v710
  %739 = vmatprep.subr.mxu0 0.0
  %740 = vmatpush1.msra.mxu0 %v711
  %741 = vmatprep.subr.mxu0 0.0
  %742 = vmatpush1.msra.mxu0 %v712
  %743 = vmatprep.subr.mxu0 0.0
  %744 = vmatpush1.msra.mxu0 %v713
  %745 = vmatprep.subr.mxu0 0.0
  %746 = vmatpush1.msra.mxu0 %v714
  %747 = vmatprep.subr.mxu0 0.0
  %748 = vmatpush1.msra.mxu0 %v715
  %749 = vmatprep.subr.mxu0 0.0
  %750 = vmatpush1.msra.mxu0 %v716
  %751 = vmatprep.subr.mxu0 0.0
  %752 = vmatpush1.msra.mxu0 %v717
  %753 = vmatprep.subr.mxu0 0.0
  %754 = vmatpush1.msra.mxu0 %v718
  %755 = vmatprep.subr.mxu0 0.0
  %756 = vmatpush1.msra.mxu0 %v719
  %757 = vmatprep.subr.mxu0 0.0
  %758 = vmatpush1.msra.mxu0 %v720
  %759 = vmatprep.subr.mxu0 0.0
  %760 = vmatpush1.msra.mxu0 %v721
  %761 = vmatprep.subr.mxu0 0.0
  %762 = vmatpush1.msra.mxu0 %v722
  %763 = vmatprep.subr.mxu0 0.0
  %764 = vmatpush1.msra.mxu0 0.0
  %765 = vmatprep.subr.mxu0 0.0
  %766 = vmatpush1.msra.mxu0 0.0
  %767 = vmatprep.subr.mxu0 0.0
  %768 = vmatpush1.msra.mxu0 0.0
  %769 = vmatprep.subr.mxu0 0.0
  %770 = vmatpush1.msra.mxu0 0.0
  %771 = vmatprep.subr.mxu0 0.0
  %772 = vmatpush1.msra.mxu0 0.0
  %773 = vmatprep.subr.mxu0 0.0
  %774 = vmatpush1.msra.mxu0 0.0
  %775 = vmatprep.subr.mxu0 0.0
  %776 = vmatpush1.msra.mxu0 0.0
  %777 = vmatprep.subr.mxu0 0.0
  %778 = vmatpush1.msra.mxu0 0.0
  %779 = vmatprep.subr.mxu0 0.0
  %780 = vmatpush1.msra.mxu0 0.0
  %781 = vmatprep.subr.mxu0 0.0
  %782 = vmatpush1.msra.mxu0 0.0
  %783 = vmatprep.subr.mxu0 0.0
  %784 = vmatpush1.msra.mxu0 0.0
  %785 = vmatprep.subr.mxu0 0.0
  %786 = vmatpush1.msra.mxu0 0.0
  %787 = vmatprep.subr.mxu0 0.0
  %788 = vmatpush1.msra.mxu0 0.0
  %789 = vmatprep.subr.mxu0 0.0
  %790 = vmatpush1.msra.mxu0 0.0
  %791 = vmatprep.subr.mxu0 0.0
  %792 = vmatpush1.msra.mxu0 0.0
  %793 = vmatprep.subr.mxu0 0.0
  %794 = vmatpush1.msra.mxu0 0.0
  %795 = vmatprep.mubr.f32.mxu0 0.0
  %796 = vmatmul.mubr.f32.gmra.mrb[0].mxu0 %v609
  %v797 = vpop.f32.mrb[0].mxu0
  %v798 = vadd.f32 %v729, %v797
  %v799 = vpop.f32.mrb[0].mxu0
  %800 = vdwg.mxu0
  %801 = vst [vmem:[#allocation3] sm:$0xff] %v798
  %s802 = scalar_lea.vmem %s1, 640
  %v803 = vld [vmem:[%s802] sm:$0xff]
  %v804 = vld [vmem:[%s802 + $0x8] sm:$0xff]
  %v805 = vld [vmem:[%s802 + $0x10] sm:$0xff]
  %v806 = vld [vmem:[%s802 + $0x18] sm:$0xff]
  %v807 = vld [vmem:[%s802 + $0x20] sm:$0xff]
  %v808 = vld [vmem:[%s802 + $0x28] sm:$0xff]
  %v809 = vld [vmem:[%s802 + $0x30] sm:$0xff]
  %v810 = vld [vmem:[%s802 + $0x38] sm:$0xff]
  %v811 = vld [vmem:[%s802 + $0x40] sm:$0xff]
  %v812 = vld [vmem:[%s802 + $0x48] sm:$0xff]
  %v813 = vld [vmem:[%s802 + $0x50] sm:$0xff]
  %v814 = vld [vmem:[%s802 + $0x58] sm:$0xff]
  %v815 = vld [vmem:[%s802 + $0x60] sm:$0xff]
  %v816 = vld [vmem:[%s802 + $0x68] sm:$0xff]
  %v817 = vld [vmem:[%s802 + $0x70] sm:$0xff]
  %v818 = vld [vmem:[%s802 + $0x78] sm:$0xff]
  %s819 = scalar_lea.vmem %s3, 5
  %v820 = vld [vmem:[%s819] sm:$0x1]
  %v822 = vlaneseq
  %v823 = vshrl.u32 %v822, 7
  %v824 = vsub.s32 0, %v823
  %v825 = vrot.slane %v820, %v824
  %827 = vmatprep.subr.mxu0 0.0
  %828 = vmatpush1.msra.mxu0 %v803
  %829 = vmatprep.subr.mxu0 0.0
  %830 = vmatpush1.msra.mxu0 %v804
  %831 = vmatprep.subr.mxu0 0.0
  %832 = vmatpush1.msra.mxu0 %v805
  %833 = vmatprep.subr.mxu0 0.0
  %834 = vmatpush1.msra.mxu0 %v806
  %835 = vmatprep.subr.mxu0 0.0
  %836 = vmatpush1.msra.mxu0 %v807
  %837 = vmatprep.subr.mxu0 0.0
  %838 = vmatpush1.msra.mxu0 %v808
  %839 = vmatprep.subr.mxu0 0.0
  %840 = vmatpush1.msra.mxu0 %v809
  %841 = vmatprep.subr.mxu0 0.0
  %842 = vmatpush1.msra.mxu0 %v810
  %843 = vmatprep.subr.mxu0 0.0
  %844 = vmatpush1.msra.mxu0 %v811
  %845 = vmatprep.subr.mxu0 0.0
  %846 = vmatpush1.msra.mxu0 %v812
  %847 = vmatprep.subr.mxu0 0.0
  %848 = vmatpush1.msra.mxu0 %v813
  %849 = vmatprep.subr.mxu0 0.0
  %850 = vmatpush1.msra.mxu0 %v814
  %851 = vmatprep.subr.mxu0 0.0
  %852 = vmatpush1.msra.mxu0 %v815
  %853 = vmatprep.subr.mxu0 0.0
  %854 = vmatpush1.msra.mxu0 %v816
  %855 = vmatprep.subr.mxu0 0.0
  %856 = vmatpush1.msra.mxu0 %v817
  %857 = vmatprep.subr.mxu0 0.0
  %858 = vmatpush1.msra.mxu0 %v818
  %859 = vmatprep.subr.mxu0 0.0
  %860 = vmatpush1.msra.mxu0 0.0
  %861 = vmatprep.subr.mxu0 0.0
  %862 = vmatpush1.msra.mxu0 0.0
  %863 = vmatprep.subr.mxu0 0.0
  %864 = vmatpush1.msra.mxu0 0.0
  %865 = vmatprep.subr.mxu0 0.0
  %866 = vmatpush1.msra.mxu0 0.0
  %867 = vmatprep.subr.mxu0 0.0
  %868 = vmatpush1.msra.mxu0 0.0
  %869 = vmatprep.subr.mxu0 0.0
  %870 = vmatpush1.msra.mxu0 0.0
  %871 = vmatprep.subr.mxu0 0.0
  %872 = vmatpush1.msra.mxu0 0.0
  %873 = vmatprep.subr.mxu0 0.0
  %874 = vmatpush1.msra.mxu0 0.0
  %875 = vmatprep.subr.mxu0 0.0
  %876 = vmatpush1.msra.mxu0 0.0
  %877 = vmatprep.subr.mxu0 0.0
  %878 = vmatpush1.msra.mxu0 0.0
  %879 = vmatprep.subr.mxu0 0.0
  %880 = vmatpush1.msra.mxu0 0.0
  %881 = vmatprep.subr.mxu0 0.0
  %882 = vmatpush1.msra.mxu0 0.0
  %883 = vmatprep.subr.mxu0 0.0
  %884 = vmatpush1.msra.mxu0 0.0
  %885 = vmatprep.subr.mxu0 0.0
  %886 = vmatpush1.msra.mxu0 0.0
  %887 = vmatprep.subr.mxu0 0.0
  %888 = vmatpush1.msra.mxu0 0.0
  %889 = vmatprep.subr.mxu0 0.0
  %890 = vmatpush1.msra.mxu0 0.0
  %891 = vmatprep.mubr.f32.mxu0 0.0
  %892 = vmatmul.mubr.f32.gmra.mrb[0].mxu0 %v609
  %v893 = vpop.f32.mrb[0].mxu0
  %v894 = vadd.f32 %v825, %v893
  %v895 = vpop.f32.mrb[0].mxu0
  %896 = vdwg.mxu0
  %897 = vst [vmem:[#allocation4] sm:$0xff] %v894
  loop: start=0, step=1, limit=8
  $region29: #{generator_forward.15} parent=0 // loop_pre_header
    _
  $region30: #{generator_forward.15} parent=0 // loop_header
    %s899 = sphi 0, %s903
    %p900 = scmp.ge.s32.totalorder %s899, 8
    %v904 = vphi 0.0, %v1198
  $region31: #{generator_forward.15} parent=0 // loop_header_branch
    %902 = sbr.rel (%p900) target = $region35
  $region32: #{generator_forward.15} parent=0 // loop_body
    %s905 = scalar_lea.vmem %s2, 384
    %v906 = vld [vmem:[%s905] sm:$0xff]
    %v907 = vld [vmem:[%s905 + $0x8] sm:$0xff]
    %v908 = vld [vmem:[%s905 + $0x10] sm:$0xff]
    %v909 = vld [vmem:[%s905 + $0x18] sm:$0xff]
    %v910 = vld [vmem:[%s905 + $0x20] sm:$0xff]
    %v911 = vld [vmem:[%s905 + $0x28] sm:$0xff]
    %v912 = vld [vmem:[%s905 + $0x30] sm:$0xff]
    %v913 = vld [vmem:[%s905 + $0x38] sm:$0xff]
    %v914 = vld [vmem:[%s905 + $0x40] sm:$0xff]
    %v915 = vld [vmem:[%s905 + $0x48] sm:$0xff]
    %v916 = vld [vmem:[%s905 + $0x50] sm:$0xff]
    %v917 = vld [vmem:[%s905 + $0x58] sm:$0xff]
    %v918 = vld [vmem:[%s905 + $0x60] sm:$0xff]
    %v919 = vld [vmem:[%s905 + $0x68] sm:$0xff]
    %v920 = vld [vmem:[%s905 + $0x70] sm:$0xff]
    %v921 = vld [vmem:[%s905 + $0x78] sm:$0xff]
    %s922 = scalar_lea.vmem %s4, 3
    %v923 = vld [vmem:[%s922] sm:$0x1]
    %924 = vmatprep.subr.mxu0 0.0
    %925 = vmatpush1.msra.mxu0 %v906
    %926 = vmatprep.subr.mxu0 0.0
    %927 = vmatpush1.msra.mxu0 %v907
    %928 = vmatprep.subr.mxu0 0.0
    %929 = vmatpush1.msra.mxu0 %v908
    %930 = vmatprep.subr.mxu0 0.0
    %931 = vmatpush1.msra.mxu0 %v909
    %932 = vmatprep.subr.mxu0 0.0
    %933 = vmatpush1.msra.mxu0 %v910
    %934 = vmatprep.subr.mxu0 0.0
    %935 = vmatpush1.msra.mxu0 %v911
    %936 = vmatprep.subr.mxu0 0.0
    %937 = vmatpush1.msra.mxu0 %v912
    %938 = vmatprep.subr.mxu0 0.0
    %939 = vmatpush1.msra.mxu0 %v913
    %940 = vmatprep.subr.mxu0 0.0
    %941 = vmatpush1.msra.mxu0 %v914
    %942 = vmatprep.subr.mxu0 0.0
    %943 = vmatpush1.msra.mxu0 %v915
    %944 = vmatprep.subr.mxu0 0.0
    %945 = vmatpush1.msra.mxu0 %v916
    %946 = vmatprep.subr.mxu0 0.0
    %947 = vmatpush1.msra.mxu0 %v917
    %948 = vmatprep.subr.mxu0 0.0
    %949 = vmatpush1.msra.mxu0 %v918
    %950 = vmatprep.subr.mxu0 0.0
    %951 = vmatpush1.msra.mxu0 %v919
    %952 = vmatprep.subr.mxu0 0.0
    %953 = vmatpush1.msra.mxu0 %v920
    %954 = vmatprep.subr.mxu0 0.0
    %955 = vmatpush1.msra.mxu0 %v921
    %956 = vmatprep.subr.mxu0 0.0
    %957 = vmatpush1.msra.mxu0 0.0
    %958 = vmatprep.subr.mxu0 0.0
    %959 = vmatpush1.msra.mxu0 0.0
    %960 = vmatprep.subr.mxu0 0.0
    %961 = vmatpush1.msra.mxu0 0.0
    %962 = vmatprep.subr.mxu0 0.0
    %963 = vmatpush1.msra.mxu0 0.0
    %964 = vmatprep.subr.mxu0 0.0
    %965 = vmatpush1.msra.mxu0 0.0
    %966 = vmatprep.subr.mxu0 0.0
    %967 = vmatpush1.msra.mxu0 0.0
    %968 = vmatprep.subr.mxu0 0.0
    %969 = vmatpush1.msra.mxu0 0.0
    %970 = vmatprep.subr.mxu0 0.0
    %971 = vmatpush1.msra.mxu0 0.0
    %972 = vmatprep.subr.mxu0 0.0
    %973 = vmatpush1.msra.mxu0 0.0
    %974 = vmatprep.subr.mxu0 0.0
    %975 = vmatpush1.msra.mxu0 0.0
    %976 = vmatprep.subr.mxu0 0.0
    %977 = vmatpush1.msra.mxu0 0.0
    %978 = vmatprep.subr.mxu0 0.0
    %979 = vmatpush1.msra.mxu0 0.0
    %980 = vmatprep.subr.mxu0 0.0
    %981 = vmatpush1.msra.mxu0 0.0
    %982 = vmatprep.subr.mxu0 0.0
    %983 = vmatpush1.msra.mxu0 0.0
    %984 = vmatprep.subr.mxu0 0.0
    %985 = vmatpush1.msra.mxu0 0.0
    %986 = vmatprep.subr.mxu0 0.0
    %987 = vmatpush1.msra.mxu0 0.0
    %988 = vmatprep.mubr.f32.mxu0 0.0
    %989 = vmatmul.mubr.f32.gmra.mrb[0].mxu0 %v904
    %v990 = vpop.f32.mrb[0].mxu0
    %v991 = vadd.f32 %v923, %v990
    %v992 = vpop.f32.mrb[0].mxu0
    %993 = vdwg.mxu0
    %s994 = scalar_lea.vmem %s2, 512
    %v995 = vld [vmem:[%s994] sm:$0xff]
    %v996 = vld [vmem:[%s994 + $0x8] sm:$0xff]
    %v997 = vld [vmem:[%s994 + $0x10] sm:$0xff]
    %v998 = vld [vmem:[%s994 + $0x18] sm:$0xff]
    %v999 = vld [vmem:[%s994 + $0x20] sm:$0xff]
    %v1000 = vld [vmem:[%s994 + $0x28] sm:$0xff]
    %v1001 = vld [vmem:[%s994 + $0x30] sm:$0xff]
    %v1002 = vld [vmem:[%s994 + $0x38] sm:$0xff]
    %v1003 = vld [vmem:[%s994 + $0x40] sm:$0xff]
    %v1004 = vld [vmem:[%s994 + $0x48] sm:$0xff]
    %v1005 = vld [vmem:[%s994 + $0x50] sm:$0xff]
    %v1006 = vld [vmem:[%s994 + $0x58] sm:$0xff]
    %v1007 = vld [vmem:[%s994 + $0x60] sm:$0xff]
    %v1008 = vld [vmem:[%s994 + $0x68] sm:$0xff]
    %v1009 = vld [vmem:[%s994 + $0x70] sm:$0xff]
    %v1010 = vld [vmem:[%s994 + $0x78] sm:$0xff]
    %s1011 = scalar_lea.vmem %s4, 4
    %v1012 = vld [vmem:[%s1011] sm:$0x1]
    %1013 = vmatprep.subr.mxu0 0.0
    %1014 = vmatpush1.msra.mxu0 %v995
    %1015 = vmatprep.subr.mxu0 0.0
    %1016 = vmatpush1.msra.mxu0 %v996
    %1017 = vmatprep.subr.mxu0 0.0
    %1018 = vmatpush1.msra.mxu0 %v997
    %1019 = vmatprep.subr.mxu0 0.0
    %1020 = vmatpush1.msra.mxu0 %v998
    %1021 = vmatprep.subr.mxu0 0.0
    %1022 = vmatpush1.msra.mxu0 %v999
    %1023 = vmatprep.subr.mxu0 0.0
    %1024 = vmatpush1.msra.mxu0 %v1000
    %1025 = vmatprep.subr.mxu0 0.0
    %1026 = vmatpush1.msra.mxu0 %v1001
    %1027 = vmatprep.subr.mxu0 0.0
    %1028 = vmatpush1.msra.mxu0 %v1002
    %1029 = vmatprep.subr.mxu0 0.0
    %1030 = vmatpush1.msra.mxu0 %v1003
    %1031 = vmatprep.subr.mxu0 0.0
    %1032 = vmatpush1.msra.mxu0 %v1004
    %1033 = vmatprep.subr.mxu0 0.0
    %1034 = vmatpush1.msra.mxu0 %v1005
    %1035 = vmatprep.subr.mxu0 0.0
    %1036 = vmatpush1.msra.mxu0 %v1006
    %1037 = vmatprep.subr.mxu0 0.0
    %1038 = vmatpush1.msra.mxu0 %v1007
    %1039 = vmatprep.subr.mxu0 0.0
    %1040 = vmatpush1.msra.mxu0 %v1008
    %1041 = vmatprep.subr.mxu0 0.0
    %1042 = vmatpush1.msra.mxu0 %v1009
    %1043 = vmatprep.subr.mxu0 0.0
    %1044 = vmatpush1.msra.mxu0 %v1010
    %1045 = vmatprep.subr.mxu0 0.0
    %1046 = vmatpush1.msra.mxu0 0.0
    %1047 = vmatprep.subr.mxu0 0.0
    %1048 = vmatpush1.msra.mxu0 0.0
    %1049 = vmatprep.subr.mxu0 0.0
    %1050 = vmatpush1.msra.mxu0 0.0
    %1051 = vmatprep.subr.mxu0 0.0
    %1052 = vmatpush1.msra.mxu0 0.0
    %1053 = vmatprep.subr.mxu0 0.0
    %1054 = vmatpush1.msra.mxu0 0.0
    %1055 = vmatprep.subr.mxu0 0.0
    %1056 = vmatpush1.msra.mxu0 0.0
    %1057 = vmatprep.subr.mxu0 0.0
    %1058 = vmatpush1.msra.mxu0 0.0
    %1059 = vmatprep.subr.mxu0 0.0
    %1060 = vmatpush1.msra.mxu0 0.0
    %1061 = vmatprep.subr.mxu0 0.0
    %1062 = vmatpush1.msra.mxu0 0.0
    %1063 = vmatprep.subr.mxu0 0.0
    %1064 = vmatpush1.msra.mxu0 0.0
    %1065 = vmatprep.subr.mxu0 0.0
    %1066 = vmatpush1.msra.mxu0 0.0
    %1067 = vmatprep.subr.mxu0 0.0
    %1068 = vmatpush1.msra.mxu0 0.0
    %1069 = vmatprep.subr.mxu0 0.0
    %1070 = vmatpush1.msra.mxu0 0.0
    %1071 = vmatprep.subr.mxu0 0.0
    %1072 = vmatpush1.msra.mxu0 0.0
    %1073 = vmatprep.subr.mxu0 0.0
    %1074 = vmatpush1.msra.mxu0 0.0
    %1075 = vmatprep.subr.mxu0 0.0
    %1076 = vmatpush1.msra.mxu0 0.0
    %1077 = vmatprep.mubr.f32.mxu0 0.0
    %1078 = vmatmul.mubr.f32.gmra.mrb[0].mxu0 %v904
    %v1079 = vpop.f32.mrb[0].mxu0
    %v1080 = vadd.f32 %v1012, %v1079
    %v1081 = vpop.f32.mrb[0].mxu0
    %1082 = vdwg.mxu0
    %s1083 = scalar_lea.vmem %s2, 640
    %v1084 = vld [vmem:[%s1083] sm:$0xff]
    %v1085 = vld [vmem:[%s1083 + $0x8] sm:$0xff]
    %v1086 = vld [vmem:[%s1083 + $0x10] sm:$0xff]
    %v1087 = vld [vmem:[%s1083 + $0x18] sm:$0xff]
    %v1088 = vld [vmem:[%s1083 + $0x20] sm:$0xff]
    %v1089 = vld [vmem:[%s1083 + $0x28] sm:$0xff]
    %v1090 = vld [vmem:[%s1083 + $0x30] sm:$0xff]
    %v1091 = vld [vmem:[%s1083 + $0x38] sm:$0xff]
    %v1092 = vld [vmem:[%s1083 + $0x40] sm:$0xff]
    %v1093 = vld [vmem:[%s1083 + $0x48] sm:$0xff]
    %v1094 = vld [vmem:[%s1083 + $0x50] sm:$0xff]
    %v1095 = vld [vmem:[%s1083 + $0x58] sm:$0xff]
    %v1096 = vld [vmem:[%s1083 + $0x60] sm:$0xff]
    %v1097 = vld [vmem:[%s1083 + $0x68] sm:$0xff]
    %v1098 = vld [vmem:[%s1083 + $0x70] sm:$0xff]
    %v1099 = vld [vmem:[%s1083 + $0x78] sm:$0xff]
    %s1100 = scalar_lea.vmem %s4, 5
    %v1101 = vld [vmem:[%s1100] sm:$0x1]
    %1102 = vmatprep.subr.mxu0 0.0
    %1103 = vmatpush1.msra.mxu0 %v1084
    %1104 = vmatprep.subr.mxu0 0.0
    %1105 = vmatpush1.msra.mxu0 %v1085
    %1106 = vmatprep.subr.mxu0 0.0
    %1107 = vmatpush1.msra.mxu0 %v1086
    %1108 = vmatprep.subr.mxu0 0.0
    %1109 = vmatpush1.msra.mxu0 %v1087
    %1110 = vmatprep.subr.mxu0 0.0
    %1111 = vmatpush1.msra.mxu0 %v1088
    %1112 = vmatprep.subr.mxu0 0.0
    %1113 = vmatpush1.msra.mxu0 %v1089
    %1114 = vmatprep.subr.mxu0 0.0
    %1115 = vmatpush1.msra.mxu0 %v1090
    %1116 = vmatprep.subr.mxu0 0.0
    %1117 = vmatpush1.msra.mxu0 %v1091
    %1118 = vmatprep.subr.mxu0 0.0
    %1119 = vmatpush1.msra.mxu0 %v1092
    %1120 = vmatprep.subr.mxu0 0.0
    %1121 = vmatpush1.msra.mxu0 %v1093
    %1122 = vmatprep.subr.mxu0 0.0
    %1123 = vmatpush1.msra.mxu0 %v1094
    %1124 = vmatprep.subr.mxu0 0.0
    %1125 = vmatpush1.msra.mxu0 %v1095
    %1126 = vmatprep.subr.mxu0 0.0
    %1127 = vmatpush1.msra.mxu0 %v1096
    %1128 = vmatprep.subr.mxu0 0.0
    %1129 = vmatpush1.msra.mxu0 %v1097
    %1130 = vmatprep.subr.mxu0 0.0
    %1131 = vmatpush1.msra.mxu0 %v1098
    %1132 = vmatprep.subr.mxu0 0.0
    %1133 = vmatpush1.msra.mxu0 %v1099
    %1134 = vmatprep.subr.mxu0 0.0
    %1135 = vmatpush1.msra.mxu0 0.0
    %1136 = vmatprep.subr.mxu0 0.0
    %1137 = vmatpush1.msra.mxu0 0.0
    %1138 = vmatprep.subr.mxu0 0.0
    %1139 = vmatpush1.msra.mxu0 0.0
    %1140 = vmatprep.subr.mxu0 0.0
    %1141 = vmatpush1.msra.mxu0 0.0
    %1142 = vmatprep.subr.mxu0 0.0
    %1143 = vmatpush1.msra.mxu0 0.0
    %1144 = vmatprep.subr.mxu0 0.0
    %1145 = vmatpush1.msra.mxu0 0.0
    %1146 = vmatprep.subr.mxu0 0.0
    %1147 = vmatpush1.msra.mxu0 0.0
    %1148 = vmatprep.subr.mxu0 0.0
    %1149 = vmatpush1.msra.mxu0 0.0
    %1150 = vmatprep.subr.mxu0 0.0
    %1151 = vmatpush1.msra.mxu0 0.0
    %1152 = vmatprep.subr.mxu0 0.0
    %1153 = vmatpush1.msra.mxu0 0.0
    %1154 = vmatprep.subr.mxu0 0.0
    %1155 = vmatpush1.msra.mxu0 0.0
    %1156 = vmatprep.subr.mxu0 0.0
    %1157 = vmatpush1.msra.mxu0 0.0
    %1158 = vmatprep.subr.mxu0 0.0
    %1159 = vmatpush1.msra.mxu0 0.0
    %1160 = vmatprep.subr.mxu0 0.0
    %1161 = vmatpush1.msra.mxu0 0.0
    %1162 = vmatprep.subr.mxu0 0.0
    %1163 = vmatpush1.msra.mxu0 0.0
    %1164 = vmatprep.subr.mxu0 0.0
    %1165 = vmatpush1.msra.mxu0 0.0
    %1166 = vmatprep.mubr.f32.mxu0 0.0
    %1167 = vmatmul.mubr.f32.gmra.mrb[0].mxu0 %v904
    %v1168 = vpop.f32.mrb[0].mxu0
    %v1169 = vadd.f32 %v1101, %v1168
    %v1170 = vpop.f32.mrb[0].mxu0
    %1171 = vdwg.mxu0
    %s1172 = scalar_lea.vmem [#allocation2], %s899
    %v1173 = vld [vmem:[%s1172] sm:$0x1]
    %v1174 = vadd.f32 %v1173, %v991
    %v1175 = vxor.u32 %v1174, 2147483648
    %v1176 = vmul.f32 %v1175, 1.442695
    %v1177 = vpow.pop %v1176
    %v1178 = vadd.f32 %v1177, 1.0
    %v1179 = vrcp.pop %v1178
    %v1180 = vmul.f32 1.0, %v1179
    %s1181 = scalar_lea.vmem [#allocation3], %s899
    %v1182 = vld [vmem:[%s1181] sm:$0x1]
    %v1183 = vadd.f32 %v1182, %v1080
    %v1184 = vxor.u32 %v1183, 2147483648
    %v1185 = vmul.f32 %v1184, 1.442695
    %v1186 = vpow.pop %v1185
    %v1187 = vadd.f32 %v1186, 1.0
    %v1188 = vrcp.pop %v1187
    %v1189 = vmul.f32 1.0, %v1188
    %s1190 = scalar_lea.vmem [#allocation4], %s899
    %v1191 = vld [vmem:[%s1190] sm:$0x1]
    %v1192 = vmul.f32 %v1180, %v1169
    %v1193 = vadd.f32 %v1191, %v1192
    %v1194 = vtanh.pop %v1193
    %v1195 = vsub.f32 1.0, %v1189
    %v1196 = vmul.f32 %v1195, %v1194
    %v1197 = vmul.f32 %v1189, %v904
    %v1198 = vadd.f32 %v1196, %v1197
    %v1199 = vmul.f32 %v1198, 0.999995
    %s1200 = scalar_lea.vmem %s0, %s899
    %v1201 = vld [vmem:[%s1200] sm:$0x1]
    %v1202 = vadd.f32 %v1199, %v1201
    %s1203 = scalar_lea.vmem %s5, %s899
    %1204 = vst [vmem:[%s1203] sm:$0x1] %v1202
  $region33: #{generator_forward.15} parent=0 // loop_footer
    %s903 = sadd.s32 1, %s899
  $region34: #{generator_forward.15} parent=0 // loop_footer_branch
    %898 = sbr.rel target = $region30
  $region35: #{generator_forward.15} parent=0 // loop_exit
    _
  // Predicated region
  $region36: #{generator_forward.15} parent=0 // pred_check
    _
  $region37: #{generator_forward.15} parent=0 // pred_check_branch
    %1206 = sbr.rel (0) target = $region39
  $region38: #{generator_forward.15} parent=0 // pred_region
    _
  $region39: #{generator_forward.15} parent=0 // pred_fallthru
    _
  // Predicated region
  $region40: #{generator_forward.15} parent=0 // pred_check
    _
  $region41: #{generator_forward.15} parent=0 // pred_check_branch
    %1208 = sbr.rel (0) target = $region43
  $region42: #{generator_forward.15} parent=0 // pred_region
    _
  $region43: #{generator_forward.15} parent=0 // pred_fallthru
    _

// kernel: generator_forward.19
$region0: #{generator_forward.19}
  #allocation0 [shape = 'u32[]', space=smem, size = 0x4, offset = 0x4, fixed_abs, tag = 'smem constant byte address 0x4 - core index']
  #allocation1 [shape = 'u32[144,128]{1,0:T(1,128)}', space=vmem, size = 0x12000, scoped, tag = 'internal scratch']
  %s0 = inlined_call_operand.vmem [shape: bf16[3,16,128], index: 0, kind: input, shape index: {}]
  %s1 = inlined_call_operand.vmem [shape: bf16[3,128,896], index: 1, kind: input, shape index: {}]
  %s2 = inlined_call_operand.vmem [shape: f32[1,896], index: 2, kind: input, shape index: {}]
  %s3 = inlined_call_operand.vmem [shape: f32[16,896], index: 3, kind: input, shape index: {}]
  %s4 = inlined_call_operand.vmem [shape: f32[6], index: 4, kind: input, shape index: {}]
  %s5 = inlined_call_operand.vmem [shape: f32[16,896], index: 5, kind: output, shape index: {}]
  %s6 = sld [smem:[#allocation0]]
  $region34: #{generator_forward.19} parent=0
    _
  %s8 = ssub.s32 1, %s6
  %s9 = scalar_select 0, %s8, %s6
  $region1: #{generator_forward.19} parent=0
    #allocation2 [shape = 'u8[512]{0}', space=smem, size = 0x200, scoped, tag = 'input window, operand 4, single buffered']
    #allocation3 [shape = 's32[1]{0}', space=sflag, size = 0x4, scoped, tag = 'scoped memory for generator_forward.19']
    %10 = vsyncpa [#allocation3], 0
    // Predicated region
    $region2: #{generator_forward.19} parent=1 // pred_check
      _
    $region3: #{generator_forward.19} parent=1 // pred_check_branch
      %12 = sbr.rel (0) target = $region5
    $region4: #{generator_forward.19} parent=1 // pred_region
      _
    $region5: #{generator_forward.19} parent=1 // pred_fallthru
      _
    // Predicated region
    $region6: #{generator_forward.19} parent=1 // pred_check
      _
    $region7: #{generator_forward.19} parent=1 // pred_check_branch
      %14 = sbr.rel (0) target = $region9
    $region8: #{generator_forward.19} parent=1 // pred_region
      _
    $region9: #{generator_forward.19} parent=1 // pred_fallthru
      _
    // Predicated region
    $region10: #{generator_forward.19} parent=1 // pred_check
      _
    $region11: #{generator_forward.19} parent=1 // pred_check_branch
      %16 = sbr.rel (0) target = $region13
    $region12: #{generator_forward.19} parent=1 // pred_region
      _
    $region13: #{generator_forward.19} parent=1 // pred_fallthru
      _
    // Predicated region
    $region14: #{generator_forward.19} parent=1 // pred_check
      _
    $region15: #{generator_forward.19} parent=1 // pred_check_branch
      %18 = sbr.rel (0) target = $region17
    $region16: #{generator_forward.19} parent=1 // pred_region
      _
    $region17: #{generator_forward.19} parent=1 // pred_fallthru
      _
    // Predicated region
    $region18: #{generator_forward.19} parent=1 // pred_check
      _
    $region19: #{generator_forward.19} parent=1 // pred_check_branch
      %20 = sbr.rel (0) target = $region21
    $region20: #{generator_forward.19} parent=1 // pred_region
      %s22 = ssub.s32 16, 16
      %23 = vsyncadd [#allocation3], %s22
      %s25 = sshll.u32 %s4, 4
      %s26 = int_to_ptr.vmem [resolvable:$true] %s25
      %28 = dma.vmem_to_smem %s26, 16, [#allocation2], [#allocation3]
    $region21: #{generator_forward.19} parent=1 // pred_fallthru
      _
    // Predicated region
    $region22: #{generator_forward.19} parent=1 // pred_check
      _
    $region23: #{generator_forward.19} parent=1 // pred_check_branch
      %30 = sbr.rel (0) target = $region25
    $region24: #{generator_forward.19} parent=1 // pred_region
      %31 = dma.done [#allocation3], 16
    $region25: #{generator_forward.19} parent=1 // pred_fallthru
      _
    %32 = sfence
    %v34 = vld [vmem:[%s2] sm:$0xff]
    %v35 = vld [vmem:[%s0] sm:$0xf]
    %v36 = vld [vmem:[%s0 + $0x4] sm:$0xf]
    %v37 = vld [vmem:[%s1] sm:$0xff]
    %v38 = vld [vmem:[%s1 + $0x8] sm:$0xff]
    %v39 = vld [vmem:[%s1 + $0x10] sm:$0xff]
    %v40 = vld [vmem:[%s1 + $0x18] sm:$0xf]
    %v41 = vld [vmem:[%s1 + $0x1c] sm:$0xff]
    %v42 = vld [vmem:[%s1 + $0x24] sm:$0xff]
    %v43 = vld [vmem:[%s1 + $0x2c] sm:$0xff]
    %v44 = vld [vmem:[%s1 + $0x34] sm:$0xf]
    %v45 = vld [vmem:[%s1 + $0x38] sm:$0xff]
    %v46 = vld [vmem:[%s1 + $0x40] sm:$0xff]
    %v47 = vld [vmem:[%s1 + $0x48] sm:$0xff]
    %v48 = vld [vmem:[%s1 + $0x50] sm:$0xf]
    %v49 = vld [vmem:[%s1 + $0x54] sm:$0xff]
    %v50 = vld [vmem:[%s1 + $0x5c] sm:$0xff]
    %v51 = vld [vmem:[%s1 + $0x64] sm:$0xff]
    %v52 = vld [vmem:[%s1 + $0x6c] sm:$0xf]
    %v53 = vld [vmem:[%s1 + $0x70] sm:$0xff]
    %v54 = vld [vmem:[%s1 + $0x78] sm:$0xff]
    %v55 = vld [vmem:[%s1 + $0x80] sm:$0xff]
    %v56 = vld [vmem:[%s1 + $0x88] sm:$0xf]
    %v57 = vld [vmem:[%s1 + $0x8c] sm:$0xff]
    %v58 = vld [vmem:[%s1 + $0x94] sm:$0xff]
    %v59 = vld [vmem:[%s1 + $0x9c] sm:$0xff]
    %v60 = vld [vmem:[%s1 + $0xa4] sm:$0xf]
    %v61 = vld [vmem:[%s1 + $0xa8] sm:$0xff]
    %v62 = vld [vmem:[%s1 + $0xb0] sm:$0xff]
    %v63 = vld [vmem:[%s1 + $0xb8] sm:$0xff]
    %v64 = vld [vmem:[%s1 + $0xc0] sm:$0xf]
    %v65 = vld [vmem:[%s1 + $0xc4] sm:$0xff]
    %v66 = vld [vmem:[%s1 + $0xcc] sm:$0xff]
    %v67 = vld [vmem:[%s1 + $0xd4] sm:$0xff]
    %v68 = vld [vmem:[%s1 + $0xdc] sm:$0xf]
    %v69 = vld [vmem:[%s1 + $0xe0] sm:$0xff]
    %v70 = vld [vmem:[%s1 + $0xe8] sm:$0xff]
    %v71 = vld [vmem:[%s1 + $0xf0] sm:$0xff]
    %v72 = vld [vmem:[%s1 + $0xf8] sm:$0xf]
    %v73 = vld [vmem:[%s1 + $0xfc] sm:$0xff]
    %v74 = vld [vmem:[%s1 + $0x104] sm:$0xff]
    %v75 = vld [vmem:[%s1 + $0x10c] sm:$0xff]
    %v76 = vld [vmem:[%s1 + $0x114] sm:$0xf]
    %v77 = vld [vmem:[%s1 + $0x118] sm:$0xff]
    %v78 = vld [vmem:[%s1 + $0x120] sm:$0xff]
    %v79 = vld [vmem:[%s1 + $0x128] sm:$0xff]
    %v80 = vld [vmem:[%s1 + $0x130] sm:$0xf]
    %v81 = vld [vmem:[%s1 + $0x134] sm:$0xff]
    %v82 = vld [vmem:[%s1 + $0x13c] sm:$0xff]
    %v83 = vld [vmem:[%s1 + $0x144] sm:$0xff]
    %v84 = vld [vmem:[%s1 + $0x14c] sm:$0xf]
    %v85 = vld [vmem:[%s1 + $0x150] sm:$0xff]
    %v86 = vld [vmem:[%s1 + $0x158] sm:$0xff]
    %v87 = vld [vmem:[%s1 + $0x160] sm:$0xff]
    %v88 = vld [vmem:[%s1 + $0x168] sm:$0xf]
    %v89 = vld [vmem:[%s1 + $0x16c] sm:$0xff]
    %v90 = vld [vmem:[%s1 + $0x174] sm:$0xff]
    %v91 = vld [vmem:[%s1 + $0x17c] sm:$0xff]
    %v92 = vld [vmem:[%s1 + $0x184] sm:$0xf]
    %v93 = vld [vmem:[%s1 + $0x188] sm:$0xff]
    %v94 = vld [vmem:[%s1 + $0x190] sm:$0xff]
    %v95 = vld [vmem:[%s1 + $0x198] sm:$0xff]
    %v96 = vld [vmem:[%s1 + $0x1a0] sm:$0xf]
    %v97 = vld [vmem:[%s1 + $0x1a4] sm:$0xff]
    %v98 = vld [vmem:[%s1 + $0x1ac] sm:$0xff]
    %v99 = vld [vmem:[%s1 + $0x1b4] sm:$0xff]
    %v100 = vld [vmem:[%s1 + $0x1bc] sm:$0xf]
    %v103 = vunpack.c.l.b16 %v35
    %v104 = vunpack.c.l.b16 %v36
    %v105 = vpack.c.b16 %v104, %v103
    %v171 = vunpack.c.l.b16 %v37
    %v172 = vunpack.c.h.b16 %v37
    %v173 = vunpack.c.l.b16 %v38
    %v174 = vunpack.c.h.b16 %v38
    %v175 = vunpack.c.l.b16 %v39
    %v176 = vunpack.c.h.b16 %v39
    %v177 = vunpack.c.l.b16 %v40
    %v178 = vunpack.c.l.b16 %v41
    %v179 = vunpack.c.h.b16 %v41
    %v180 = vunpack.c.l.b16 %v42
    %v181 = vunpack.c.h.b16 %v42
    %v182 = vunpack.c.l.b16 %v43
    %v183 = vunpack.c.h.b16 %v43
    %v184 = vunpack.c.l.b16 %v44
    %v185 = vunpack.c.l.b16 %v45
    %v186 = vunpack.c.h.b16 %v45
    %v187 = vunpack.c.l.b16 %v46
    %v188 = vunpack.c.h.b16 %v46
    %v189 = vunpack.c.l.b16 %v47
    %v190 = vunpack.c.h.b16 %v47
    %v191 = vunpack.c.l.b16 %v48
    %v192 = vunpack.c.l.b16 %v49
    %v193 = vunpack.c.h.b16 %v49
    %v194 = vunpack.c.l.b16 %v50
    %v195 = vunpack.c.h.b16 %v50
    %v196 = vunpack.c.l.b16 %v51
    %v197 = vunpack.c.h.b16 %v51
    %v198 = vunpack.c.l.b16 %v52
    %v199 = vunpack.c.l.b16 %v53
    %v200 = vunpack.c.h.b16 %v53
    %v201 = vunpack.c.l.b16 %v54
    %v202 = vunpack.c.h.b16 %v54
    %v203 = vunpack.c.l.b16 %v55
    %v204 = vunpack.c.h.b16 %v55
    %v205 = vunpack.c.l.b16 %v56
    %v206 = vunpack.c.l.b16 %v57
    %v207 = vunpack.c.h.b16 %v57
    %v208 = vunpack.c.l.b16 %v58
    %v209 = vunpack.c.h.b16 %v58
    %v210 = vunpack.c.l.b16 %v59
    %v211 = vunpack.c.h.b16 %v59
    %v212 = vunpack.c.l.b16 %v60
    %v213 = vunpack.c.l.b16 %v61
    %v214 = vunpack.c.h.b16 %v61
    %v215 = vunpack.c.l.b16 %v62
    %v216 = vunpack.c.h.b16 %v62
    %v217 = vunpack.c.l.b16 %v63
    %v218 = vunpack.c.h.b16 %v63
    %v219 = vunpack.c.l.b16 %v64
    %v220 = vunpack.c.l.b16 %v65
    %v221 = vunpack.c.h.b16 %v65
    %v222 = vunpack.c.l.b16 %v66
    %v223 = vunpack.c.h.b16 %v66
    %v224 = vunpack.c.l.b16 %v67
    %v225 = vunpack.c.h.b16 %v67
    %v226 = vunpack.c.l.b16 %v68
    %v227 = vunpack.c.l.b16 %v69
    %v228 = vunpack.c.h.b16 %v69
    %v229 = vunpack.c.l.b16 %v70
    %v230 = vunpack.c.h.b16 %v70
    %v231 = vunpack.c.l.b16 %v71
    %v232 = vunpack.c.h.b16 %v71
    %v233 = vunpack.c.l.b16 %v72
    %v234 = vunpack.c.l.b16 %v73
    %v235 = vunpack.c.h.b16 %v73
    %v236 = vunpack.c.l.b16 %v74
    %v237 = vunpack.c.h.b16 %v74
    %v238 = vunpack.c.l.b16 %v75
    %v239 = vunpack.c.h.b16 %v75
    %v240 = vunpack.c.l.b16 %v76
    %v241 = vunpack.c.l.b16 %v77
    %v242 = vunpack.c.h.b16 %v77
    %v243 = vunpack.c.l.b16 %v78
    %v244 = vunpack.c.h.b16 %v78
    %v245 = vunpack.c.l.b16 %v79
    %v246 = vunpack.c.h.b16 %v79
    %v247 = vunpack.c.l.b16 %v80
    %v248 = vunpack.c.l.b16 %v81
    %v249 = vunpack.c.h.b16 %v81
    %v250 = vunpack.c.l.b16 %v82
    %v251 = vunpack.c.h.b16 %v82
    %v252 = vunpack.c.l.b16 %v83
    %v253 = vunpack.c.h.b16 %v83
    %v254 = vunpack.c.l.b16 %v84
    %v255 = vunpack.c.l.b16 %v85
    %v256 = vunpack.c.h.b16 %v85
    %v257 = vunpack.c.l.b16 %v86
    %v258 = vunpack.c.h.b16 %v86
    %v259 = vunpack.c.l.b16 %v87
    %v260 = vunpack.c.h.b16 %v87
    %v261 = vunpack.c.l.b16 %v88
    %v262 = vunpack.c.l.b16 %v89
    %v263 = vunpack.c.h.b16 %v89
    %v264 = vunpack.c.l.b16 %v90
    %v265 = vunpack.c.h.b16 %v90
    %v266 = vunpack.c.l.b16 %v91
    %v267 = vunpack.c.h.b16 %v91
    %v268 = vunpack.c.l.b16 %v92
    %v269 = vunpack.c.l.b16 %v93
    %v270 = vunpack.c.h.b16 %v93
    %v271 = vunpack.c.l.b16 %v94
    %v272 = vunpack.c.h.b16 %v94
    %v273 = vunpack.c.l.b16 %v95
    %v274 = vunpack.c.h.b16 %v95
    %v275 = vunpack.c.l.b16 %v96
    %v276 = vunpack.c.l.b16 %v97
    %v277 = vunpack.c.h.b16 %v97
    %v278 = vunpack.c.l.b16 %v98
    %v279 = vunpack.c.h.b16 %v98
    %v280 = vunpack.c.l.b16 %v99
    %v281 = vunpack.c.h.b16 %v99
    %v282 = vunpack.c.l.b16 %v100
    %v283 = vpack.c.b16 %v178, %v171
    %v284 = vpack.c.b16 %v179, %v172
    %v285 = vpack.c.b16 %v180, %v173
    %v286 = vpack.c.b16 %v181, %v174
    %v287 = vpack.c.b16 %v182, %v175
    %v288 = vpack.c.b16 %v183, %v176
    %v289 = vpack.c.b16 %v184, %v177
    %v290 = vpack.c.b16 %v192, %v185
    %v291 = vpack.c.b16 %v193, %v186
    %v292 = vpack.c.b16 %v194, %v187
    %v293 = vpack.c.b16 %v195, %v188
    %v294 = vpack.c.b16 %v196, %v189
    %v295 = vpack.c.b16 %v197, %v190
    %v296 = vpack.c.b16 %v198, %v191
    %v297 = vpack.c.b16 %v206, %v199
    %v298 = vpack.c.b16 %v207, %v200
    %v299 = vpack.c.b16 %v208, %v201
    %v300 = vpack.c.b16 %v209, %v202
    %v301 = vpack.c.b16 %v210, %v203
    %v302 = vpack.c.b16 %v211, %v204
    %v303 = vpack.c.b16 %v212, %v205
    %v304 = vpack.c.b16 %v220, %v213
    %v305 = vpack.c.b16 %v221, %v214
    %v306 = vpack.c.b16 %v222, %v215
    %v307 = vpack.c.b16 %v223, %v216
    %v308 = vpack.c.b16 %v224, %v217
    %v309 = vpack.c.b16 %v225, %v218
    %v310 = vpack.c.b16 %v226, %v219
    %v311 = vpack.c.b16 %v234, %v227
    %v312 = vpack.c.b16 %v235, %v228
    %v313 = vpack.c.b16 %v236, %v229
    %v314 = vpack.c.b16 %v237, %v230
    %v315 = vpack.c.b16 %v238, %v231
    %v316 = vpack.c.b16 %v239, %v232
    %v317 = vpack.c.b16 %v240, %v233
    %v318 = vpack.c.b16 %v248, %v241
    %v319 = vpack.c.b16 %v249, %v242
    %v320 = vpack.c.b16 %v250, %v243
    %v321 = vpack.c.b16 %v251, %v244
    %v322 = vpack.c.b16 %v252, %v245
    %v323 = vpack.c.b16 %v253, %v246
    %v324 = vpack.c.b16 %v254, %v247
    %v325 = vpack.c.b16 %v262, %v255
    %v326 = vpack.c.b16 %v263, %v256
    %v327 = vpack.c.b16 %v264, %v257
    %v328 = vpack.c.b16 %v265, %v258
    %v329 = vpack.c.b16 %v266, %v259
    %v330 = vpack.c.b16 %v267, %v260
    %v331 = vpack.c.b16 %v268, %v261
    %v332 = vpack.c.b16 %v276, %v269
    %v333 = vpack.c.b16 %v277, %v270
    %v334 = vpack.c.b16 %v278, %v271
    %v335 = vpack.c.b16 %v279, %v272
    %v336 = vpack.c.b16 %v280, %v273
    %v337 = vpack.c.b16 %v281, %v274
    %v338 = vpack.c.b16 %v282, %v275
    %395 = vmatprep.subr.bf16.mxu0 %v284
    %396 = vmatpush1.bf16.msra.mxu0 %v283
    %397 = vmatprep.subr.bf16.mxu0 %v291
    %398 = vmatpush1.bf16.msra.mxu0 %v290
    %399 = vmatprep.subr.bf16.mxu0 %v298
    %400 = vmatpush1.bf16.msra.mxu0 %v297
    %401 = vmatprep.subr.bf16.mxu0 %v305
    %402 = vmatpush1.bf16.msra.mxu0 %v304
    %403 = vmatprep.subr.bf16.mxu0 %v312
    %404 = vmatpush1.bf16.msra.mxu0 %v311
    %405 = vmatprep.subr.bf16.mxu0 %v319
    %406 = vmatpush1.bf16.msra.mxu0 %v318
    %407 = vmatprep.subr.bf16.mxu0 %v326
    %408 = vmatpush1.bf16.msra.mxu0 %v325
    %409 = vmatprep.subr.bf16.mxu0 %v333
    %410 = vmatpush1.bf16.msra.mxu0 %v332
    %411 = vmatprep.subr.bf16.mxu0 0
    %412 = vmatpush1.bf16.msra.mxu0 0
    %413 = vmatprep.subr.bf16.mxu0 0
    %414 = vmatpush1.bf16.msra.mxu0 0
    %415 = vmatprep.subr.bf16.mxu0 0
    %416 = vmatpush1.bf16.msra.mxu0 0
    %417 = vmatprep.subr.bf16.mxu0 0
    %418 = vmatpush1.bf16.msra.mxu0 0
    %419 = vmatprep.subr.bf16.mxu0 0
    %420 = vmatpush1.bf16.msra.mxu0 0
    %421 = vmatprep.subr.bf16.mxu0 0
    %422 = vmatpush1.bf16.msra.mxu0 0
    %423 = vmatprep.subr.bf16.mxu0 0
    %424 = vmatpush1.bf16.msra.mxu0 0
    %425 = vmatprep.subr.bf16.mxu0 0
    %426 = vmatpush1.bf16.msra.mxu0 0
    %427 = vmatprep.mubr.bf16.mxu0 0
    %428 = vmatmul.mubr.bf16.gmra.mrb[0].mxu0 %v105
    %v429 = vpop.f32.mrb[0].mxu0
    %v430 = vadd.f32 0.0, %v429
    %v431 = vpop.f32.mrb[0].mxu0
    %v432 = vadd.f32 0.0, %v431
    %v433 = vpop.f32.mrb[0].mxu0
    %v434 = vadd.f32 0.0, %v433
    %v435 = vpop.f32.mrb[0].mxu0
    %v436 = vadd.f32 0.0, %v435
    %437 = vdwg.mxu0
    %438 = vmatprep.subr.bf16.mxu0 %v286
    %439 = vmatpush1.bf16.msra.mxu0 %v285
    %440 = vmatprep.subr.bf16.mxu0 %v293
    %441 = vmatpush1.bf16.msra.mxu0 %v292
    %442 = vmatprep.subr.bf16.mxu0 %v300
    %443 = vmatpush1.bf16.msra.mxu0 %v299
    %444 = vmatprep.subr.bf16.mxu0 %v307
    %445 = vmatpush1.bf16.msra.mxu0 %v306
    %446 = vmatprep.subr.bf16.mxu0 %v314
    %447 = vmatpush1.bf16.msra.mxu0 %v313
    %448 = vmatprep.subr.bf16.mxu0 %v321
    %449 = vmatpush1.bf16.msra.mxu0 %v320
    %450 = vmatprep.subr.bf16.mxu0 %v328
    %451 = vmatpush1.bf16.msra.mxu0 %v327
    %452 = vmatprep.subr.bf16.mxu0 %v335
    %453 = vmatpush1.bf16.msra.mxu0 %v334
    %454 = vmatprep.subr.bf16.mxu0 0
    %455 = vmatpush1.bf16.msra.mxu0 0
    %456 = vmatprep.subr.bf16.mxu0 0
    %457 = vmatpush1.bf16.msra.mxu0 0
    %458 = vmatprep.subr.bf16.mxu0 0
    %459 = vmatpush1.bf16.msra.mxu0 0
    %460 = vmatprep.subr.bf16.mxu0 0
    %461 = vmatpush1.bf16.msra.mxu0 0
    %462 = vmatprep.subr.bf16.mxu0 0
    %463 = vmatpush1.bf16.msra.mxu0 0
    %464 = vmatprep.subr.bf16.mxu0 0
    %465 = vmatpush1.bf16.msra.mxu0 0
    %466 = vmatprep.subr.bf16.mxu0 0
    %467 = vmatpush1.bf16.msra.mxu0 0
    %468 = vmatprep.subr.bf16.mxu0 0
    %469 = vmatpush1.bf16.msra.mxu0 0
    %470 = vmatprep.mubr.bf16.mxu0 0
    %471 = vmatmul.mubr.bf16.gmra.mrb[0].mxu0 %v105
    %v472 = vpop.f32.mrb[0].mxu0
    %v473 = vadd.f32 0.0, %v472
    %v474 = vpop.f32.mrb[0].mxu0
    %v475 = vadd.f32 0.0, %v474
    %v476 = vpop.f32.mrb[0].mxu0
    %v477 = vadd.f32 0.0, %v476
    %v478 = vpop.f32.mrb[0].mxu0
    %v479 = vadd.f32 0.0, %v478
    %480 = vdwg.mxu0
    %481 = vmatprep.subr.bf16.mxu0 %v288
    %482 = vmatpush1.bf16.msra.mxu0 %v287
    %483 = vmatprep.subr.bf16.mxu0 %v295
    %484 = vmatpush1.bf16.msra.mxu0 %v294
    %485 = vmatprep.subr.bf16.mxu0 %v302
    %486 = vmatpush1.bf16.msra.mxu0 %v301
    %487 = vmatprep.subr.bf16.mxu0 %v309
    %488 = vmatpush1.bf16.msra.mxu0 %v308
    %489 = vmatprep.subr.bf16.mxu0 %v316
    %490 = vmatpush1.bf16.msra.mxu0 %v315
    %491 = vmatprep.subr.bf16.mxu0 %v323
    %492 = vmatpush1.bf16.msra.mxu0 %v322
    %493 = vmatprep.subr.bf16.mxu0 %v330
    %494 = vmatpush1.bf16.msra.mxu0 %v329
    %495 = vmatprep.subr.bf16.mxu0 %v337
    %496 = vmatpush1.bf16.msra.mxu0 %v336
    %497 = vmatprep.subr.bf16.mxu0 0
    %498 = vmatpush1.bf16.msra.mxu0 0
    %499 = vmatprep.subr.bf16.mxu0 0
    %500 = vmatpush1.bf16.msra.mxu0 0
    %501 = vmatprep.subr.bf16.mxu0 0
    %502 = vmatpush1.bf16.msra.mxu0 0
    %503 = vmatprep.subr.bf16.mxu0 0
    %504 = vmatpush1.bf16.msra.mxu0 0
    %505 = vmatprep.subr.bf16.mxu0 0
    %506 = vmatpush1.bf16.msra.mxu0 0
    %507 = vmatprep.subr.bf16.mxu0 0
    %508 = vmatpush1.bf16.msra.mxu0 0
    %509 = vmatprep.subr.bf16.mxu0 0
    %510 = vmatpush1.bf16.msra.mxu0 0
    %511 = vmatprep.subr.bf16.mxu0 0
    %512 = vmatpush1.bf16.msra.mxu0 0
    %513 = vmatprep.mubr.bf16.mxu0 0
    %514 = vmatmul.mubr.bf16.gmra.mrb[0].mxu0 %v105
    %v515 = vpop.f32.mrb[0].mxu0
    %v516 = vadd.f32 0.0, %v515
    %v517 = vpop.f32.mrb[0].mxu0
    %v518 = vadd.f32 0.0, %v517
    %v519 = vpop.f32.mrb[0].mxu0
    %v520 = vadd.f32 0.0, %v519
    %v521 = vpop.f32.mrb[0].mxu0
    %v522 = vadd.f32 0.0, %v521
    %523 = vdwg.mxu0
    %524 = vmatprep.subr.bf16.mxu0 0
    %525 = vmatpush1.bf16.msra.mxu0 %v289
    %526 = vmatprep.subr.bf16.mxu0 0
    %527 = vmatpush1.bf16.msra.mxu0 %v296
    %528 = vmatprep.subr.bf16.mxu0 0
    %529 = vmatpush1.bf16.msra.mxu0 %v303
    %530 = vmatprep.subr.bf16.mxu0 0
    %531 = vmatpush1.bf16.msra.mxu0 %v310
    %532 = vmatprep.subr.bf16.mxu0 0
    %533 = vmatpush1.bf16.msra.mxu0 %v317
    %534 = vmatprep.subr.bf16.mxu0 0
    %535 = vmatpush1.bf16.msra.mxu0 %v324
    %536 = vmatprep.subr.bf16.mxu0 0
    %537 = vmatpush1.bf16.msra.mxu0 %v331
    %538 = vmatprep.subr.bf16.mxu0 0
    %539 = vmatpush1.bf16.msra.mxu0 %v338
    %540 = vmatprep.subr.bf16.mxu0 0
    %541 = vmatpush1.bf16.msra.mxu0 0
    %542 = vmatprep.subr.bf16.mxu0 0
    %543 = vmatpush1.bf16.msra.mxu0 0
    %544 = vmatprep.subr.bf16.mxu0 0
    %545 = vmatpush1.bf16.msra.mxu0 0
    %546 = vmatprep.subr.bf16.mxu0 0
    %547 = vmatpush1.bf16.msra.mxu0 0
    %548 = vmatprep.subr.bf16.mxu0 0
    %549 = vmatpush1.bf16.msra.mxu0 0
    %550 = vmatprep.subr.bf16.mxu0 0
    %551 = vmatpush1.bf16.msra.mxu0 0
    %552 = vmatprep.subr.bf16.mxu0 0
    %553 = vmatpush1.bf16.msra.mxu0 0
    %554 = vmatprep.subr.bf16.mxu0 0
    %555 = vmatpush1.bf16.msra.mxu0 0
    %556 = vmatprep.mubr.bf16.mxu0 0
    %557 = vmatmul.mubr.bf16.gmra.mrb[0].mxu0 %v105
    %v558 = vpop.f32.mrb[0].mxu0
    %v559 = vadd.f32 0.0, %v558
    %v560 = vpop.f32.mrb[0].mxu0
    %v561 = vpop.f32.mrb[0].mxu0
    %v562 = vadd.f32 0.0, %v561
    %v563 = vpop.f32.mrb[0].mxu0
    %564 = vdwg.mxu0
    %v566 = vlaneseq
    %v567 = vshrl.u32 %v566, 7
    %v568 = vsub.s32 0, %v567
    %v569 = vrot.slane %v34, %v568
    %v570 = vlaneseq
    %v571 = vshrl.u32 %v570, 7
    %v572 = vsub.s32 1, %v571
    %v573 = vrot.slane %v34, %v572
    %v574 = vlaneseq
    %v575 = vshrl.u32 %v574, 7
    %v576 = vsub.s32 2, %v575
    %v577 = vrot.slane %v34, %v576
    %v578 = vlaneseq
    %v579 = vshrl.u32 %v578, 7
    %v580 = vsub.s32 3, %v579
    %v581 = vrot.slane %v34, %v580
    %v582 = vlaneseq
    %v583 = vshrl.u32 %v582, 7
    %v584 = vsub.s32 4, %v583
    %v585 = vrot.slane %v34, %v584
    %v586 = vlaneseq
    %v587 = vshrl.u32 %v586, 7
    %v588 = vsub.s32 5, %v587
    %v589 = vrot.slane %v34, %v588
    %v590 = vlaneseq
    %v591 = vshrl.u32 %v590, 7
    %v592 = vsub.s32 6, %v591
    %v593 = vrot.slane %v34, %v592
    %v601 = vadd.f32 %v569, %v430
    %v602 = vadd.f32 %v573, %v432
    %v603 = vadd.f32 %v577, %v473
    %v604 = vadd.f32 %v581, %v475
    %v605 = vadd.f32 %v585, %v516
    %v606 = vadd.f32 %v589, %v518
    %v607 = vadd.f32 %v593, %v559
    %v608 = vadd.f32 %v569, %v434
    %v609 = vadd.f32 %v573, %v436
    %v610 = vadd.f32 %v577, %v477
    %v611 = vadd.f32 %v581, %v479
    %v612 = vadd.f32 %v585, %v520
    %v613 = vadd.f32 %v589, %v522
    %v614 = vadd.f32 %v593, %v562
    %s615 = scalar_lea.vmem %s0, 8
    %v616 = vld [vmem:[%s615] sm:$0xf]
    %v617 = vld [vmem:[%s615 + $0x4] sm:$0xf]
    %s618 = scalar_lea.vmem %s1, 448
    %v619 = vld [vmem:[%s618] sm:$0xff]
    %v620 = vld [vmem:[%s618 + $0x8] sm:$0xff]
    %v621 = vld [vmem:[%s618 + $0x10] sm:$0xff]
    %v622 = vld [vmem:[%s618 + $0x18] sm:$0xf]
    %v623 = vld [vmem:[%s618 + $0x1c] sm:$0xff]
    %v624 = vld [vmem:[%s618 + $0x24] sm:$0xff]
    %v625 = vld [vmem:[%s618 + $0x2c] sm:$0xff]
    %v626 = vld [vmem:[%s618 + $0x34] sm:$0xf]
    %v627 = vld [vmem:[%s618 + $0x38] sm:$0xff]
    %v628 = vld [vmem:[%s618 + $0x40] sm:$0xff]
    %v629 = vld [vmem:[%s618 + $0x48] sm:$0xff]
    %v630 = vld [vmem:[%s618 + $0x50] sm:$0xf]
    %v631 = vld [vmem:[%s618 + $0x54] sm:$0xff]
    %v632 = vld [vmem:[%s618 + $0x5c] sm:$0xff]
    %v633 = vld [vmem:[%s618 + $0x64] sm:$0xff]
    %v634 = vld [vmem:[%s618 + $0x6c] sm:$0xf]
    %v635 = vld [vmem:[%s618 + $0x70] sm:$0xff]
    %v636 = vld [vmem:[%s618 + $0x78] sm:$0xff]
    %v637 = vld [vmem:[%s618 + $0x80] sm:$0xff]
    %v638 = vld [vmem:[%s618 + $0x88] sm:$0xf]
    %v639 = vld [vmem:[%s618 + $0x8c] sm:$0xff]
    %v640 = vld [vmem:[%s618 + $0x94] sm:$0xff]
    %v641 = vld [vmem:[%s618 + $0x9c] sm:$0xff]
    %v642 = vld [vmem:[%s618 + $0xa4] sm:$0xf]
    %v643 = vld [vmem:[%s618 + $0xa8] sm:$0xff]
    %v644 = vld [vmem:[%s618 + $0xb0] sm:$0xff]
    %v645 = vld [vmem:[%s618 + $0xb8] sm:$0xff]
    %v646 = vld [vmem:[%s618 + $0xc0] sm:$0xf]
    %v647 = vld [vmem:[%s618 + $0xc4] sm:$0xff]
    %v648 = vld [vmem:[%s618 + $0xcc] sm:$0xff]
    %v649 = vld [vmem:[%s618 + $0xd4] sm:$0xff]
    %v650 = vld [vmem:[%s618 + $0xdc] sm:$0xf]
    %v651 = vld [vmem:[%s618 + $0xe0] sm:$0xff]
    %v652 = vld [vmem:[%s618 + $0xe8] sm:$0xff]
    %v653 = vld [vmem:[%s618 + $0xf0] sm:$0xff]
    %v654 = vld [vmem:[%s618 + $0xf8] sm:$0xf]
    %v655 = vld [vmem:[%s618 + $0xfc] sm:$0xff]
    %v656 = vld [vmem:[%s618 + $0x104] sm:$0xff]
    %v657 = vld [vmem:[%s618 + $0x10c] sm:$0xff]
    %v658 = vld [vmem:[%s618 + $0x114] sm:$0xf]
    %v659 = vld [vmem:[%s618 + $0x118] sm:$0xff]
    %v660 = vld [vmem:[%s618 + $0x120] sm:$0xff]
    %v661 = vld [vmem:[%s618 + $0x128] sm:$0xff]
    %v662 = vld [vmem:[%s618 + $0x130] sm:$0xf]
    %v663 = vld [vmem:[%s618 + $0x134] sm:$0xff]
    %v664 = vld [vmem:[%s618 + $0x13c] sm:$0xff]
    %v665 = vld [vmem:[%s618 + $0x144] sm:$0xff]
    %v666 = vld [vmem:[%s618 + $0x14c] sm:$0xf]
    %v667 = vld [vmem:[%s618 + $0x150] sm:$0xff]
    %v668 = vld [vmem:[%s618 + $0x158] sm:$0xff]
    %v669 = vld [vmem:[%s618 + $0x160] sm:$0xff]
    %v670 = vld [vmem:[%s618 + $0x168] sm:$0xf]
    %v671 = vld [vmem:[%s618 + $0x16c] sm:$0xff]
    %v672 = vld [vmem:[%s618 + $0x174] sm:$0xff]
    %v673 = vld [vmem:[%s618 + $0x17c] sm:$0xff]
    %v674 = vld [vmem:[%s618 + $0x184] sm:$0xf]
    %v675 = vld [vmem:[%s618 + $0x188] sm:$0xff]
    %v676 = vld [vmem:[%s618 + $0x190] sm:$0xff]
    %v677 = vld [vmem:[%s618 + $0x198] sm:$0xff]
    %v678 = vld [vmem:[%s618 + $0x1a0] sm:$0xf]
    %v679 = vld [vmem:[%s618 + $0x1a4] sm:$0xff]
    %v680 = vld [vmem:[%s618 + $0x1ac] sm:$0xff]
    %v681 = vld [vmem:[%s618 + $0x1b4] sm:$0xff]
    %v682 = vld [vmem:[%s618 + $0x1bc] sm:$0xf]
    %v685 = vunpack.c.l.b16 %v616
    %v686 = vunpack.c.l.b16 %v617
    %v687 = vpack.c.b16 %v686, %v685
    %v753 = vunpack.c.l.b16 %v619
    %v754 = vunpack.c.h.b16 %v619
    %v755 = vunpack.c.l.b16 %v620
    %v756 = vunpack.c.h.b16 %v620
    %v757 = vunpack.c.l.b16 %v621
    %v758 = vunpack.c.h.b16 %v621
    %v759 = vunpack.c.l.b16 %v622
    %v760 = vunpack.c.l.b16 %v623
    %v761 = vunpack.c.h.b16 %v623
    %v762 = vunpack.c.l.b16 %v624
    %v763 = vunpack.c.h.b16 %v624
    %v764 = vunpack.c.l.b16 %v625
    %v765 = vunpack.c.h.b16 %v625
    %v766 = vunpack.c.l.b16 %v626
    %v767 = vunpack.c.l.b16 %v627
    %v768 = vunpack.c.h.b16 %v627
    %v769 = vunpack.c.l.b16 %v628
    %v770 = vunpack.c.h.b16 %v628
    %v771 = vunpack.c.l.b16 %v629
    %v772 = vunpack.c.h.b16 %v629
    %v773 = vunpack.c.l.b16 %v630
    %v774 = vunpack.c.l.b16 %v631
    %v775 = vunpack.c.h.b16 %v631
    %v776 = vunpack.c.l.b16 %v632
    %v777 = vunpack.c.h.b16 %v632
    %v778 = vunpack.c.l.b16 %v633
    %v779 = vunpack.c.h.b16 %v633
    %v780 = vunpack.c.l.b16 %v634
    %v781 = vunpack.c.l.b16 %v635
    %v782 = vunpack.c.h.b16 %v635
    %v783 = vunpack.c.l.b16 %v636
    %v784 = vunpack.c.h.b16 %v636
    %v785 = vunpack.c.l.b16 %v637
    %v786 = vunpack.c.h.b16 %v637
    %v787 = vunpack.c.l.b16 %v638
    %v788 = vunpack.c.l.b16 %v639
    %v789 = vunpack.c.h.b16 %v639
    %v790 = vunpack.c.l.b16 %v640
    %v791 = vunpack.c.h.b16 %v640
    %v792 = vunpack.c.l.b16 %v641
    %v793 = vunpack.c.h.b16 %v641
    %v794 = vunpack.c.l.b16 %v642
    %v795 = vunpack.c.l.b16 %v643
    %v796 = vunpack.c.h.b16 %v643
    %v797 = vunpack.c.l.b16 %v644
    %v798 = vunpack.c.h.b16 %v644
    %v799 = vunpack.c.l.b16 %v645
    %v800 = vunpack.c.h.b16 %v645
    %v801 = vunpack.c.l.b16 %v646
    %v802 = vunpack.c.l.b16 %v647
    %v803 = vunpack.c.h.b16 %v647
    %v804 = vunpack.c.l.b16 %v648
    %v805 = vunpack.c.h.b16 %v648
    %v806 = vunpack.c.l.b16 %v649
    %v807 = vunpack.c.h.b16 %v649
    %v808 = vunpack.c.l.b16 %v650
    %v809 = vunpack.c.l.b16 %v651
    %v810 = vunpack.c.h.b16 %v651
    %v811 = vunpack.c.l.b16 %v652
    %v812 = vunpack.c.h.b16 %v652
    %v813 = vunpack.c.l.b16 %v653
    %v814 = vunpack.c.h.b16 %v653
    %v815 = vunpack.c.l.b16 %v654
    %v816 = vunpack.c.l.b16 %v655
    %v817 = vunpack.c.h.b16 %v655
    %v818 = vunpack.c.l.b16 %v656
    %v819 = vunpack.c.h.b16 %v656
    %v820 = vunpack.c.l.b16 %v657
    %v821 = vunpack.c.h.b16 %v657
    %v822 = vunpack.c.l.b16 %v658
    %v823 = vunpack.c.l.b16 %v659
    %v824 = vunpack.c.h.b16 %v659
    %v825 = vunpack.c.l.b16 %v660
    %v826 = vunpack.c.h.b16 %v660
    %v827 = vunpack.c.l.b16 %v661
    %v828 = vunpack.c.h.b16 %v661
    %v829 = vunpack.c.l.b16 %v662
    %v830 = vunpack.c.l.b16 %v663
    %v831 = vunpack.c.h.b16 %v663
    %v832 = vunpack.c.l.b16 %v664
    %v833 = vunpack.c.h.b16 %v664
    %v834 = vunpack.c.l.b16 %v665
    %v835 = vunpack.c.h.b16 %v665
    %v836 = vunpack.c.l.b16 %v666
    %v837 = vunpack.c.l.b16 %v667
    %v838 = vunpack.c.h.b16 %v667
    %v839 = vunpack.c.l.b16 %v668
    %v840 = vunpack.c.h.b16 %v668
    %v841 = vunpack.c.l.b16 %v669
    %v842 = vunpack.c.h.b16 %v669
    %v843 = vunpack.c.l.b16 %v670
    %v844 = vunpack.c.l.b16 %v671
    %v845 = vunpack.c.h.b16 %v671
    %v846 = vunpack.c.l.b16 %v672
    %v847 = vunpack.c.h.b16 %v672
    %v848 = vunpack.c.l.b16 %v673
    %v849 = vunpack.c.h.b16 %v673
    %v850 = vunpack.c.l.b16 %v674
    %v851 = vunpack.c.l.b16 %v675
    %v852 = vunpack.c.h.b16 %v675
    %v853 = vunpack.c.l.b16 %v676
    %v854 = vunpack.c.h.b16 %v676
    %v855 = vunpack.c.l.b16 %v677
    %v856 = vunpack.c.h.b16 %v677
    %v857 = vunpack.c.l.b16 %v678
    %v858 = vunpack.c.l.b16 %v679
    %v859 = vunpack.c.h.b16 %v679
    %v860 = vunpack.c.l.b16 %v680
    %v861 = vunpack.c.h.b16 %v680
    %v862 = vunpack.c.l.b16 %v681
    %v863 = vunpack.c.h.b16 %v681
    %v864 = vunpack.c.l.b16 %v682
    %v865 = vpack.c.b16 %v760, %v753
    %v866 = vpack.c.b16 %v761, %v754
    %v867 = vpack.c.b16 %v762, %v755
    %v868 = vpack.c.b16 %v763, %v756
    %v869 = vpack.c.b16 %v764, %v757
    %v870 = vpack.c.b16 %v765, %v758
    %v871 = vpack.c.b16 %v766, %v759
    %v872 = vpack.c.b16 %v774, %v767
    %v873 = vpack.c.b16 %v775, %v768
    %v874 = vpack.c.b16 %v776, %v769
    %v875 = vpack.c.b16 %v777, %v770
    %v876 = vpack.c.b16 %v778, %v771
    %v877 = vpack.c.b16 %v779, %v772
    %v878 = vpack.c.b16 %v780, %v773
    %v879 = vpack.c.b16 %v788, %v781
    %v880 = vpack.c.b16 %v789, %v782
    %v881 = vpack.c.b16 %v790, %v783
    %v882 = vpack.c.b16 %v791, %v784
    %v883 = vpack.c.b16 %v792, %v785
    %v884 = vpack.c.b16 %v793, %v786
    %v885 = vpack.c.b16 %v794, %v787
    %v886 = vpack.c.b16 %v802, %v795
    %v887 = vpack.c.b16 %v803, %v796
    %v888 = vpack.c.b16 %v804, %v797
    %v889 = vpack.c.b16 %v805, %v798
    %v890 = vpack.c.b16 %v806, %v799
    %v891 = vpack.c.b16 %v807, %v800
    %v892 = vpack.c.b16 %v808, %v801
    %v893 = vpack.c.b16 %v816, %v809
    %v894 = vpack.c.b16 %v817, %v810
    %v895 = vpack.c.b16 %v818, %v811
    %v896 = vpack.c.b16 %v819, %v812
    %v897 = vpack.c.b16 %v820, %v813
    %v898 = vpack.c.b16 %v821, %v814
    %v899 = vpack.c.b16 %v822, %v815
    %v900 = vpack.c.b16 %v830, %v823
    %v901 = vpack.c.b16 %v831, %v824
    %v902 = vpack.c.b16 %v832, %v825
    %v903 = vpack.c.b16 %v833, %v826
    %v904 = vpack.c.b16 %v834, %v827
    %v905 = vpack.c.b16 %v835, %v828
    %v906 = vpack.c.b16 %v836, %v829
    %v907 = vpack.c.b16 %v844, %v837
    %v908 = vpack.c.b16 %v845, %v838
    %v909 = vpack.c.b16 %v846, %v839
    %v910 = vpack.c.b16 %v847, %v840
    %v911 = vpack.c.b16 %v848, %v841
    %v912 = vpack.c.b16 %v849, %v842
    %v913 = vpack.c.b16 %v850, %v843
    %v914 = vpack.c.b16 %v858, %v851
    %v915 = vpack.c.b16 %v859, %v852
    %v916 = vpack.c.b16 %v860, %v853
    %v917 = vpack.c.b16 %v861, %v854
    %v918 = vpack.c.b16 %v862, %v855
    %v919 = vpack.c.b16 %v863, %v856
    %v920 = vpack.c.b16 %v864, %v857
    %977 = vmatprep.subr.bf16.mxu0 %v866
    %978 = vmatpush1.bf16.msra.mxu0 %v865
    %979 = vmatprep.subr.bf16.mxu0 %v873
    %980 = vmatpush1.bf16.msra.mxu0 %v872
    %981 = vmatprep.subr.bf16.mxu0 %v880
    %982 = vmatpush1.bf16.msra.mxu0 %v879
    %983 = vmatprep.subr.bf16.mxu0 %v887
    %984 = vmatpush1.bf16.msra.mxu0 %v886
    %985 = vmatprep.subr.bf16.mxu0 %v894
    %986 = vmatpush1.bf16.msra.mxu0 %v893
    %987 = vmatprep.subr.bf16.mxu0 %v901
    %988 = vmatpush1.bf16.msra.mxu0 %v900
    %989 = vmatprep.subr.bf16.mxu0 %v908
    %990 = vmatpush1.bf16.msra.mxu0 %v907
    %991 = vmatprep.subr.bf16.mxu0 %v915
    %992 = vmatpush1.bf16.msra.mxu0 %v914
    %993 = vmatprep.subr.bf16.mxu0 0
    %994 = vmatpush1.bf16.msra.mxu0 0
    %995 = vmatprep.subr.bf16.mxu0 0
    %996 = vmatpush1.bf16.msra.mxu0 0
    %997 = vmatprep.subr.bf16.mxu0 0
    %998 = vmatpush1.bf16.msra.mxu0 0
    %999 = vmatprep.subr.bf16.mxu0 0
    %1000 = vmatpush1.bf16.msra.mxu0 0
    %1001 = vmatprep.subr.bf16.mxu0 0
    %1002 = vmatpush1.bf16.msra.mxu0 0
    %1003 = vmatprep.subr.bf16.mxu0 0
    %1004 = vmatpush1.bf16.msra.mxu0 0
    %1005 = vmatprep.subr.bf16.mxu0 0
    %1006 = vmatpush1.bf16.msra.mxu0 0
    %1007 = vmatprep.subr.bf16.mxu0 0
    %1008 = vmatpush1.bf16.msra.mxu0 0
    %1009 = vmatprep.mubr.bf16.mxu0 0
    %1010 = vmatmul.mubr.bf16.gmra.mrb[0].mxu0 %v687
    %v1011 = vpop.f32.mrb[0].mxu0
    %v1012 = vadd.f32 0.0, %v1011
    %v1013 = vpop.f32.mrb[0].mxu0
    %v1014 = vadd.f32 0.0, %v1013
    %v1015 = vpop.f32.mrb[0].mxu0
    %v1016 = vadd.f32 0.0, %v1015
    %v1017 = vpop.f32.mrb[0].mxu0
    %v1018 = vadd.f32 0.0, %v1017
    %1019 = vdwg.mxu0
    %1020 = vmatprep.subr.bf16.mxu0 %v868
    %1021 = vmatpush1.bf16.msra.mxu0 %v867
    %1022 = vmatprep.subr.bf16.mxu0 %v875
    %1023 = vmatpush1.bf16.msra.mxu0 %v874
    %1024 = vmatprep.subr.bf16.mxu0 %v882
    %1025 = vmatpush1.bf16.msra.mxu0 %v881
    %1026 = vmatprep.subr.bf16.mxu0 %v889
    %1027 = vmatpush1.bf16.msra.mxu0 %v888
    %1028 = vmatprep.subr.bf16.mxu0 %v896
    %1029 = vmatpush1.bf16.msra.mxu0 %v895
    %1030 = vmatprep.subr.bf16.mxu0 %v903
    %1031 = vmatpush1.bf16.msra.mxu0 %v902
    %1032 = vmatprep.subr.bf16.mxu0 %v910
    %1033 = vmatpush1.bf16.msra.mxu0 %v909
    %1034 = vmatprep.subr.bf16.mxu0 %v917
    %1035 = vmatpush1.bf16.msra.mxu0 %v916
    %1036 = vmatprep.subr.bf16.mxu0 0
    %1037 = vmatpush1.bf16.msra.mxu0 0
    %1038 = vmatprep.subr.bf16.mxu0 0
    %1039 = vmatpush1.bf16.msra.mxu0 0
    %1040 = vmatprep.subr.bf16.mxu0 0
    %1041 = vmatpush1.bf16.msra.mxu0 0
    %1042 = vmatprep.subr.bf16.mxu0 0
    %1043 = vmatpush1.bf16.msra.mxu0 0
    %1044 = vmatprep.subr.bf16.mxu0 0
    %1045 = vmatpush1.bf16.msra.mxu0 0
    %1046 = vmatprep.subr.bf16.mxu0 0
    %1047 = vmatpush1.bf16.msra.mxu0 0
    %1048 = vmatprep.subr.bf16.mxu0 0
    %1049 = vmatpush1.bf16.msra.mxu0 0
    %1050 = vmatprep.subr.bf16.mxu0 0
    %1051 = vmatpush1.bf16.msra.mxu0 0
    %1052 = vmatprep.mubr.bf16.mxu0 0
    %1053 = vmatmul.mubr.bf16.gmra.mrb[0].mxu0 %v687
    %v1054 = vpop.f32.mrb[0].mxu0
    %v1055 = vadd.f32 0.0, %v1054
    %v1056 = vpop.f32.mrb[0].mxu0
    %v1057 = vadd.f32 0.0, %v1056
    %v1058 = vpop.f32.mrb[0].mxu0
    %v1059 = vadd.f32 0.0, %v1058
    %v1060 = vpop.f32.mrb[0].mxu0
    %v1061 = vadd.f32 0.0, %v1060
    %1062 = vdwg.mxu0
    %1063 = vmatprep.subr.bf16.mxu0 %v870
    %1064 = vmatpush1.bf16.msra.mxu0 %v869
    %1065 = vmatprep.subr.bf16.mxu0 %v877
    %1066 = vmatpush1.bf16.msra.mxu0 %v876
    %1067 = vmatprep.subr.bf16.mxu0 %v884
    %1068 = vmatpush1.bf16.msra.mxu0 %v883
    %1069 = vmatprep.subr.bf16.mxu0 %v891
    %1070 = vmatpush1.bf16.msra.mxu0 %v890
    %1071 = vmatprep.subr.bf16.mxu0 %v898
    %1072 = vmatpush1.bf16.msra.mxu0 %v897
    %1073 = vmatprep.subr.bf16.mxu0 %v905
    %1074 = vmatpush1.bf16.msra.mxu0 %v904
    %1075 = vmatprep.subr.bf16.mxu0 %v912
    %1076 = vmatpush1.bf16.msra.mxu0 %v911
    %1077 = vmatprep.subr.bf16.mxu0 %v919
    %1078 = vmatpush1.bf16.msra.mxu0 %v918
    %1079 = vmatprep.subr.bf16.mxu0 0
    %1080 = vmatpush1.bf16.msra.mxu0 0
    %1081 = vmatprep.subr.bf16.mxu0 0
    %1082 = vmatpush1.bf16.msra.mxu0 0
    %1083 = vmatprep.subr.bf16.mxu0 0
    %1084 = vmatpush1.bf16.msra.mxu0 0
    %1085 = vmatprep.subr.bf16.mxu0 0
    %1086 = vmatpush1.bf16.msra.mxu0 0
    %1087 = vmatprep.subr.bf16.mxu0 0
    %1088 = vmatpush1.bf16.msra.mxu0 0
    %1089 = vmatprep.subr.bf16.mxu0 0
    %1090 = vmatpush1.bf16.msra.mxu0 0
    %1091 = vmatprep.subr.bf16.mxu0 0
    %1092 = vmatpush1.bf16.msra.mxu0 0
    %1093 = vmatprep.subr.bf16.mxu0 0
    %1094 = vmatpush1.bf16.msra.mxu0 0
    %1095 = vmatprep.mubr.bf16.mxu0 0
    %1096 = vmatmul.mubr.bf16.gmra.mrb[0].mxu0 %v687
    %v1097 = vpop.f32.mrb[0].mxu0
    %v1098 = vadd.f32 0.0, %v1097
    %v1099 = vpop.f32.mrb[0].mxu0
    %v1100 = vadd.f32 0.0, %v1099
    %v1101 = vpop.f32.mrb[0].mxu0
    %v1102 = vadd.f32 0.0, %v1101
    %v1103 = vpop.f32.mrb[0].mxu0
    %v1104 = vadd.f32 0.0, %v1103
    %1105 = vdwg.mxu0
    %1106 = vmatprep.subr.bf16.mxu0 0
    %1107 = vmatpush1.bf16.msra.mxu0 %v871
    %1108 = vmatprep.subr.bf16.mxu0 0
    %1109 = vmatpush1.bf16.msra.mxu0 %v878
    %1110 = vmatprep.subr.bf16.mxu0 0
    %1111 = vmatpush1.bf16.msra.mxu0 %v885
    %1112 = vmatprep.subr.bf16.mxu0 0
    %1113 = vmatpush1.bf16.msra.mxu0 %v892
    %1114 = vmatprep.subr.bf16.mxu0 0
    %1115 = vmatpush1.bf16.msra.mxu0 %v899
    %1116 = vmatprep.subr.bf16.mxu0 0
    %1117 = vmatpush1.bf16.msra.mxu0 %v906
    %1118 = vmatprep.subr.bf16.mxu0 0
    %1119 = vmatpush1.bf16.msra.mxu0 %v913
    %1120 = vmatprep.subr.bf16.mxu0 0
    %1121 = vmatpush1.bf16.msra.mxu0 %v920
    %1122 = vmatprep.subr.bf16.mxu0 0
    %1123 = vmatpush1.bf16.msra.mxu0 0
    %1124 = vmatprep.subr.bf16.mxu0 0
    %1125 = vmatpush1.bf16.msra.mxu0 0
    %1126 = vmatprep.subr.bf16.mxu0 0
    %1127 = vmatpush1.bf16.msra.mxu0 0
    %1128 = vmatprep.subr.bf16.mxu0 0
    %1129 = vmatpush1.bf16.msra.mxu0 0
    %1130 = vmatprep.subr.bf16.mxu0 0
    %1131 = vmatpush1.bf16.msra.mxu0 0
    %1132 = vmatprep.subr.bf16.mxu0 0
    %1133 = vmatpush1.bf16.msra.mxu0 0
    %1134 = vmatprep.subr.bf16.mxu0 0
    %1135 = vmatpush1.bf16.msra.mxu0 0
    %1136 = vmatprep.subr.bf16.mxu0 0
    %1137 = vmatpush1.bf16.msra.mxu0 0
    %1138 = vmatprep.mubr.bf16.mxu0 0
    %1139 = vmatmul.mubr.bf16.gmra.mrb[0].mxu0 %v687
    %v1140 = vpop.f32.mrb[0].mxu0
    %v1141 = vadd.f32 0.0, %v1140
    %v1142 = vpop.f32.mrb[0].mxu0
    %v1143 = vpop.f32.mrb[0].mxu0
    %v1144 = vadd.f32 0.0, %v1143
    %v1145 = vpop.f32.mrb[0].mxu0
    %1146 = vdwg.mxu0
    %v1147 = vadd.f32 %v601, %v1012
    %v1148 = vadd.f32 %v602, %v1014
    %v1149 = vadd.f32 %v603, %v1055
    %v1150 = vadd.f32 %v604, %v1057
    %v1151 = vadd.f32 %v605, %v1098
    %v1152 = vadd.f32 %v606, %v1100
    %v1153 = vadd.f32 %v607, %v1141
    %v1154 = vadd.f32 %v608, %v1016
    %v1155 = vadd.f32 %v609, %v1018
    %v1156 = vadd.f32 %v610, %v1059
    %v1157 = vadd.f32 %v611, %v1061
    %v1158 = vadd.f32 %v612, %v1102
    %v1159 = vadd.f32 %v613, %v1104
    %v1160 = vadd.f32 %v614, %v1144
    %s1161 = scalar_lea.vmem %s0, 16
    %v1162 = vld [vmem:[%s1161] sm:$0xf]
    %v1163 = vld [vmem:[%s1161 + $0x4] sm:$0xf]
    %s1164 = scalar_lea.vmem %s1, 896
    %v1165 = vld [vmem:[%s1164] sm:$0xff]
    %v1166 = vld [vmem:[%s1164 + $0x8] sm:$0xff]
    %v1167 = vld [vmem:[%s1164 + $0x10] sm:$0xff]
    %v1168 = vld [vmem:[%s1164 + $0x18] sm:$0xf]
    %v1169 = vld [vmem:[%s1164 + $0x1c] sm:$0xff]
    %v1170 = vld [vmem:[%s1164 + $0x24] sm:$0xff]
    %v1171 = vld [vmem:[%s1164 + $0x2c] sm:$0xff]
    %v1172 = vld [vmem:[%s1164 + $0x34] sm:$0xf]
    %v1173 = vld [vmem:[%s1164 + $0x38] sm:$0xff]
    %v1174 = vld [vmem:[%s1164 + $0x40] sm:$0xff]
    %v1175 = vld [vmem:[%s1164 + $0x48] sm:$0xff]
    %v1176 = vld [vmem:[%s1164 + $0x50] sm:$0xf]
    %v1177 = vld [vmem:[%s1164 + $0x54] sm:$0xff]
    %v1178 = vld [vmem:[%s1164 + $0x5c] sm:$0xff]
    %v1179 = vld [vmem:[%s1164 + $0x64] sm:$0xff]
    %v1180 = vld [vmem:[%s1164 + $0x6c] sm:$0xf]
    %v1181 = vld [vmem:[%s1164 + $0x70] sm:$0xff]
    %v1182 = vld [vmem:[%s1164 + $0x78] sm:$0xff]
    %v1183 = vld [vmem:[%s1164 + $0x80] sm:$0xff]
    %v1184 = vld [vmem:[%s1164 + $0x88] sm:$0xf]
    %v1185 = vld [vmem:[%s1164 + $0x8c] sm:$0xff]
    %v1186 = vld [vmem:[%s1164 + $0x94] sm:$0xff]
    %v1187 = vld [vmem:[%s1164 + $0x9c] sm:$0xff]
    %v1188 = vld [vmem:[%s1164 + $0xa4] sm:$0xf]
    %v1189 = vld [vmem:[%s1164 + $0xa8] sm:$0xff]
    %v1190 = vld [vmem:[%s1164 + $0xb0] sm:$0xff]
    %v1191 = vld [vmem:[%s1164 + $0xb8] sm:$0xff]
    %v1192 = vld [vmem:[%s1164 + $0xc0] sm:$0xf]
    %v1193 = vld [vmem:[%s1164 + $0xc4] sm:$0xff]
    %v1194 = vld [vmem:[%s1164 + $0xcc] sm:$0xff]
    %v1195 = vld [vmem:[%s1164 + $0xd4] sm:$0xff]
    %v1196 = vld [vmem:[%s1164 + $0xdc] sm:$0xf]
    %v1197 = vld [vmem:[%s1164 + $0xe0] sm:$0xff]
    %v1198 = vld [vmem:[%s1164 + $0xe8] sm:$0xff]
    %v1199 = vld [vmem:[%s1164 + $0xf0] sm:$0xff]
    %v1200 = vld [vmem:[%s1164 + $0xf8] sm:$0xf]
    %v1201 = vld [vmem:[%s1164 + $0xfc] sm:$0xff]
    %v1202 = vld [vmem:[%s1164 + $0x104] sm:$0xff]
    %v1203 = vld [vmem:[%s1164 + $0x10c] sm:$0xff]
    %v1204 = vld [vmem:[%s1164 + $0x114] sm:$0xf]
    %v1205 = vld [vmem:[%s1164 + $0x118] sm:$0xff]
    %v1206 = vld [vmem:[%s1164 + $0x120] sm:$0xff]
    %v1207 = vld [vmem:[%s1164 + $0x128] sm:$0xff]
    %v1208 = vld [vmem:[%s1164 + $0x130] sm:$0xf]
    %v1209 = vld [vmem:[%s1164 + $0x134] sm:$0xff]
    %v1210 = vld [vmem:[%s1164 + $0x13c] sm:$0xff]
    %v1211 = vld [vmem:[%s1164 + $0x144] sm:$0xff]
    %v1212 = vld [vmem:[%s1164 + $0x14c] sm:$0xf]
    %v1213 = vld [vmem:[%s1164 + $0x150] sm:$0xff]
    %v1214 = vld [vmem:[%s1164 + $0x158] sm:$0xff]
    %v1215 = vld [vmem:[%s1164 + $0x160] sm:$0xff]
    %v1216 = vld [vmem:[%s1164 + $0x168] sm:$0xf]
    %v1217 = vld [vmem:[%s1164 + $0x16c] sm:$0xff]
    %v1218 = vld [vmem:[%s1164 + $0x174] sm:$0xff]
    %v1219 = vld [vmem:[%s1164 + $0x17c] sm:$0xff]
    %v1220 = vld [vmem:[%s1164 + $0x184] sm:$0xf]
    %v1221 = vld [vmem:[%s1164 + $0x188] sm:$0xff]
    %v1222 = vld [vmem:[%s1164 + $0x190] sm:$0xff]
    %v1223 = vld [vmem:[%s1164 + $0x198] sm:$0xff]
    %v1224 = vld [vmem:[%s1164 + $0x1a0] sm:$0xf]
    %v1225 = vld [vmem:[%s1164 + $0x1a4] sm:$0xff]
    %v1226 = vld [vmem:[%s1164 + $0x1ac] sm:$0xff]
    %v1227 = vld [vmem:[%s1164 + $0x1b4] sm:$0xff]
    %v1228 = vld [vmem:[%s1164 + $0x1bc] sm:$0xf]
    %v1231 = vunpack.c.l.b16 %v1162
    %v1232 = vunpack.c.l.b16 %v1163
    %v1233 = vpack.c.b16 %v1232, %v1231
    %v1299 = vunpack.c.l.b16 %v1165
    %v1300 = vunpack.c.h.b16 %v1165
    %v1301 = vunpack.c.l.b16 %v1166
    %v1302 = vunpack.c.h.b16 %v1166
    %v1303 = vunpack.c.l.b16 %v1167
    %v1304 = vunpack.c.h.b16 %v1167
    %v1305 = vunpack.c.l.b16 %v1168
    %v1306 = vunpack.c.l.b16 %v1169
    %v1307 = vunpack.c.h.b16 %v1169
    %v1308 = vunpack.c.l.b16 %v1170
    %v1309 = vunpack.c.h.b16 %v1170
    %v1310 = vunpack.c.l.b16 %v1171
    %v1311 = vunpack.c.h.b16 %v1171
    %v1312 = vunpack.c.l.b16 %v1172
    %v1313 = vunpack.c.l.b16 %v1173
    %v1314 = vunpack.c.h.b16 %v1173
    %v1315 = vunpack.c.l.b16 %v1174
    %v1316 = vunpack.c.h.b16 %v1174
    %v1317 = vunpack.c.l.b16 %v1175
    %v1318 = vunpack.c.h.b16 %v1175
    %v1319 = vunpack.c.l.b16 %v1176
    %v1320 = vunpack.c.l.b16 %v1177
    %v1321 = vunpack.c.h.b16 %v1177
    %v1322 = vunpack.c.l.b16 %v1178
    %v1323 = vunpack.c.h.b16 %v1178
    %v1324 = vunpack.c.l.b16 %v1179
    %v1325 = vunpack.c.h.b16 %v1179
    %v1326 = vunpack.c.l.b16 %v1180
    %v1327 = vunpack.c.l.b16 %v1181
    %v1328 = vunpack.c.h.b16 %v1181
    %v1329 = vunpack.c.l.b16 %v1182
    %v1330 = vunpack.c.h.b16 %v1182
    %v1331 = vunpack.c.l.b16 %v1183
    %v1332 = vunpack.c.h.b16 %v1183
    %v1333 = vunpack.c.l.b16 %v1184
    %v1334 = vunpack.c.l.b16 %v1185
    %v1335 = vunpack.c.h.b16 %v1185
    %v1336 = vunpack.c.l.b16 %v1186
    %v1337 = vunpack.c.h.b16 %v1186
    %v1338 = vunpack.c.l.b16 %v1187
    %v1339 = vunpack.c.h.b16 %v1187
    %v1340 = vunpack.c.l.b16 %v1188
    %v1341 = vunpack.c.l.b16 %v1189
    %v1342 = vunpack.c.h.b16 %v1189
    %v1343 = vunpack.c.l.b16 %v1190
    %v1344 = vunpack.c.h.b16 %v1190
    %v1345 = vunpack.c.l.b16 %v1191
    %v1346 = vunpack.c.h.b16 %v1191
    %v1347 = vunpack.c.l.b16 %v1192
    %v1348 = vunpack.c.l.b16 %v1193
    %v1349 = vunpack.c.h.b16 %v1193
    %v1350 = vunpack.c.l.b16 %v1194
    %v1351 = vunpack.c.h.b16 %v1194
    %v1352 = vunpack.c.l.b16 %v1195
    %v1353 = vunpack.c.h.b16 %v1195
    %v1354 = vunpack.c.l.b16 %v1196
    %v1355 = vunpack.c.l.b16 %v1197
    %v1356 = vunpack.c.h.b16 %v1197
    %v1357 = vunpack.c.l.b16 %v1198
    %v1358 = vunpack.c.h.b16 %v1198
    %v1359 = vunpack.c.l.b16 %v1199
    %v1360 = vunpack.c.h.b16 %v1199
    %v1361 = vunpack.c.l.b16 %v1200
    %v1362 = vunpack.c.l.b16 %v1201
    %v1363 = vunpack.c.h.b16 %v1201
    %v1364 = vunpack.c.l.b16 %v1202
    %v1365 = vunpack.c.h.b16 %v1202
    %v1366 = vunpack.c.l.b16 %v1203
    %v1367 = vunpack.c.h.b16 %v1203
    %v1368 = vunpack.c.l.b16 %v1204
    %v1369 = vunpack.c.l.b16 %v1205
    %v1370 = vunpack.c.h.b16 %v1205
    %v1371 = vunpack.c.l.b16 %v1206
    %v1372 = vunpack.c.h.b16 %v1206
    %v1373 = vunpack.c.l.b16 %v1207
    %v1374 = vunpack.c.h.b16 %v1207
    %v1375 = vunpack.c.l.b16 %v1208
    %v1376 = vunpack.c.l.b16 %v1209
    %v1377 = vunpack.c.h.b16 %v1209
    %v1378 = vunpack.c.l.b16 %v1210
    %v1379 = vunpack.c.h.b16 %v1210
    %v1380 = vunpack.c.l.b16 %v1211
    %v1381 = vunpack.c.h.b16 %v1211
    %v1382 = vunpack.c.l.b16 %v1212
    %v1383 = vunpack.c.l.b16 %v1213
    %v1384 = vunpack.c.h.b16 %v1213
    %v1385 = vunpack.c.l.b16 %v1214
    %v1386 = vunpack.c.h.b16 %v1214
    %v1387 = vunpack.c.l.b16 %v1215
    %v1388 = vunpack.c.h.b16 %v1215
    %v1389 = vunpack.c.l.b16 %v1216
    %v1390 = vunpack.c.l.b16 %v1217
    %v1391 = vunpack.c.h.b16 %v1217
    %v1392 = vunpack.c.l.b16 %v1218
    %v1393 = vunpack.c.h.b16 %v1218
    %v1394 = vunpack.c.l.b16 %v1219
    %v1395 = vunpack.c.h.b16 %v1219
    %v1396 = vunpack.c.l.b16 %v1220
    %v1397 = vunpack.c.l.b16 %v1221
    %v1398 = vunpack.c.h.b16 %v1221
    %v1399 = vunpack.c.l.b16 %v1222
    %v1400 = vunpack.c.h.b16 %v1222
    %v1401 = vunpack.c.l.b16 %v1223
    %v1402 = vunpack.c.h.b16 %v1223
    %v1403 = vunpack.c.l.b16 %v1224
    %v1404 = vunpack.c.l.b16 %v1225
    %v1405 = vunpack.c.h.b16 %v1225
    %v1406 = vunpack.c.l.b16 %v1226
    %v1407 = vunpack.c.h.b16 %v1226
    %v1408 = vunpack.c.l.b16 %v1227
    %v1409 = vunpack.c.h.b16 %v1227
    %v1410 = vunpack.c.l.b16 %v1228
    %v1411 = vpack.c.b16 %v1306, %v1299
    %v1412 = vpack.c.b16 %v1307, %v1300
    %v1413 = vpack.c.b16 %v1308, %v1301
    %v1414 = vpack.c.b16 %v1309, %v1302
    %v1415 = vpack.c.b16 %v1310, %v1303
    %v1416 = vpack.c.b16 %v1311, %v1304
    %v1417 = vpack.c.b16 %v1312, %v1305
    %v1418 = vpack.c.b16 %v1320, %v1313
    %v1419 = vpack.c.b16 %v1321, %v1314
    %v1420 = vpack.c.b16 %v1322, %v1315
    %v1421 = vpack.c.b16 %v1323, %v1316
    %v1422 = vpack.c.b16 %v1324, %v1317
    %v1423 = vpack.c.b16 %v1325, %v1318
    %v1424 = vpack.c.b16 %v1326, %v1319
    %v1425 = vpack.c.b16 %v1334, %v1327
    %v1426 = vpack.c.b16 %v1335, %v1328
    %v1427 = vpack.c.b16 %v1336, %v1329
    %v1428 = vpack.c.b16 %v1337, %v1330
    %v1429 = vpack.c.b16 %v1338, %v1331
    %v1430 = vpack.c.b16 %v1339, %v1332
    %v1431 = vpack.c.b16 %v1340, %v1333
    %v1432 = vpack.c.b16 %v1348, %v1341
    %v1433 = vpack.c.b16 %v1349, %v1342
    %v1434 = vpack.c.b16 %v1350, %v1343
    %v1435 = vpack.c.b16 %v1351, %v1344
    %v1436 = vpack.c.b16 %v1352, %v1345
    %v1437 = vpack.c.b16 %v1353, %v1346
    %v1438 = vpack.c.b16 %v1354, %v1347
    %v1439 = vpack.c.b16 %v1362, %v1355
    %v1440 = vpack.c.b16 %v1363, %v1356
    %v1441 = vpack.c.b16 %v1364, %v1357
    %v1442 = vpack.c.b16 %v1365, %v1358
    %v1443 = vpack.c.b16 %v1366, %v1359
    %v1444 = vpack.c.b16 %v1367, %v1360
    %v1445 = vpack.c.b16 %v1368, %v1361
    %v1446 = vpack.c.b16 %v1376, %v1369
    %v1447 = vpack.c.b16 %v1377, %v1370
    %v1448 = vpack.c.b16 %v1378, %v1371
    %v1449 = vpack.c.b16 %v1379, %v1372
    %v1450 = vpack.c.b16 %v1380, %v1373
    %v1451 = vpack.c.b16 %v1381, %v1374
    %v1452 = vpack.c.b16 %v1382, %v1375
    %v1453 = vpack.c.b16 %v1390, %v1383
    %v1454 = vpack.c.b16 %v1391, %v1384
    %v1455 = vpack.c.b16 %v1392, %v1385
    %v1456 = vpack.c.b16 %v1393, %v1386
    %v1457 = vpack.c.b16 %v1394, %v1387
    %v1458 = vpack.c.b16 %v1395, %v1388
    %v1459 = vpack.c.b16 %v1396, %v1389
    %v1460 = vpack.c.b16 %v1404, %v1397
    %v1461 = vpack.c.b16 %v1405, %v1398
    %v1462 = vpack.c.b16 %v1406, %v1399
    %v1463 = vpack.c.b16 %v1407, %v1400
    %v1464 = vpack.c.b16 %v1408, %v1401
    %v1465 = vpack.c.b16 %v1409, %v1402
    %v1466 = vpack.c.b16 %v1410, %v1403
    %1523 = vmatprep.subr.bf16.mxu0 %v1412
    %1524 = vmatpush1.bf16.msra.mxu0 %v1411
    %1525 = vmatprep.subr.bf16.mxu0 %v1419
    %1526 = vmatpush1.bf16.msra.mxu0 %v1418
    %1527 = vmatprep.subr.bf16.mxu0 %v1426
    %1528 = vmatpush1.bf16.msra.mxu0 %v1425
    %1529 = vmatprep.subr.bf16.mxu0 %v1433
    %1530 = vmatpush1.bf16.msra.mxu0 %v1432
    %1531 = vmatprep.subr.bf16.mxu0 %v1440
    %1532 = vmatpush1.bf16.msra.mxu0 %v1439
    %1533 = vmatprep.subr.bf16.mxu0 %v1447
    %1534 = vmatpush1.bf16.msra.mxu0 %v1446
    %1535 = vmatprep.subr.bf16.mxu0 %v1454
    %1536 = vmatpush1.bf16.msra.mxu0 %v1453
    %1537 = vmatprep.subr.bf16.mxu0 %v1461
    %1538 = vmatpush1.bf16.msra.mxu0 %v1460
    %1539 = vmatprep.subr.bf16.mxu0 0
    %1540 = vmatpush1.bf16.msra.mxu0 0
    %1541 = vmatprep.subr.bf16.mxu0 0
    %1542 = vmatpush1.bf16.msra.mxu0 0
    %1543 = vmatprep.subr.bf16.mxu0 0
    %1544 = vmatpush1.bf16.msra.mxu0 0
    %1545 = vmatprep.subr.bf16.mxu0 0
    %1546 = vmatpush1.bf16.msra.mxu0 0
    %1547 = vmatprep.subr.bf16.mxu0 0
    %1548 = vmatpush1.bf16.msra.mxu0 0
    %1549 = vmatprep.subr.bf16.mxu0 0
    %1550 = vmatpush1.bf16.msra.mxu0 0
    %1551 = vmatprep.subr.bf16.mxu0 0
    %1552 = vmatpush1.bf16.msra.mxu0 0
    %1553 = vmatprep.subr.bf16.mxu0 0
    %1554 = vmatpush1.bf16.msra.mxu0 0
    %1555 = vmatprep.mubr.bf16.mxu0 0
    %1556 = vmatmul.mubr.bf16.gmra.mrb[0].mxu0 %v1233
    %v1557 = vpop.f32.mrb[0].mxu0
    %v1558 = vadd.f32 0.0, %v1557
    %v1559 = vpop.f32.mrb[0].mxu0
    %v1560 = vadd.f32 0.0, %v1559
    %v1561 = vpop.f32.mrb[0].mxu0
    %v1562 = vadd.f32 0.0, %v1561
    %v1563 = vpop.f32.mrb[0].mxu0
    %v1564 = vadd.f32 0.0, %v1563
    %1565 = vdwg.mxu0
    %1566 = vmatprep.subr.bf16.mxu0 %v1414
    %1567 = vmatpush1.bf16.msra.mxu0 %v1413
    %1568 = vmatprep.subr.bf16.mxu0 %v1421
    %1569 = vmatpush1.bf16.msra.mxu0 %v1420
    %1570 = vmatprep.subr.bf16.mxu0 %v1428
    %1571 = vmatpush1.bf16.msra.mxu0 %v1427
    %1572 = vmatprep.subr.bf16.mxu0 %v1435
    %1573 = vmatpush1.bf16.msra.mxu0 %v1434
    %1574 = vmatprep.subr.bf16.mxu0 %v1442
    %1575 = vmatpush1.bf16.msra.mxu0 %v1441
    %1576 = vmatprep.subr.bf16.mxu0 %v1449
    %1577 = vmatpush1.bf16.msra.mxu0 %v1448
    %1578 = vmatprep.subr.bf16.mxu0 %v1456
    %1579 = vmatpush1.bf16.msra.mxu0 %v1455
    %1580 = vmatprep.subr.bf16.mxu0 %v1463
    %1581 = vmatpush1.bf16.msra.mxu0 %v1462
    %1582 = vmatprep.subr.bf16.mxu0 0
    %1583 = vmatpush1.bf16.msra.mxu0 0
    %1584 = vmatprep.subr.bf16.mxu0 0
    %1585 = vmatpush1.bf16.msra.mxu0 0
    %1586 = vmatprep.subr.bf16.mxu0 0
    %1587 = vmatpush1.bf16.msra.mxu0 0
    %1588 = vmatprep.subr.bf16.mxu0 0
    %1589 = vmatpush1.bf16.msra.mxu0 0
    %1590 = vmatprep.subr.bf16.mxu0 0
    %1591 = vmatpush1.bf16.msra.mxu0 0
    %1592 = vmatprep.subr.bf16.mxu0 0
    %1593 = vmatpush1.bf16.msra.mxu0 0
    %1594 = vmatprep.subr.bf16.mxu0 0
    %1595 = vmatpush1.bf16.msra.mxu0 0
    %1596 = vmatprep.subr.bf16.mxu0 0
    %1597 = vmatpush1.bf16.msra.mxu0 0
    %1598 = vmatprep.mubr.bf16.mxu0 0
    %1599 = vmatmul.mubr.bf16.gmra.mrb[0].mxu0 %v1233
    %v1600 = vpop.f32.mrb[0].mxu0
    %v1601 = vadd.f32 0.0, %v1600
    %v1602 = vpop.f32.mrb[0].mxu0
    %v1603 = vadd.f32 0.0, %v1602
    %v1604 = vpop.f32.mrb[0].mxu0
    %v1605 = vadd.f32 0.0, %v1604
    %v1606 = vpop.f32.mrb[0].mxu0
    %v1607 = vadd.f32 0.0, %v1606
    %1608 = vdwg.mxu0
    %1609 = vmatprep.subr.bf16.mxu0 %v1416
    %1610 = vmatpush1.bf16.msra.mxu0 %v1415
    %1611 = vmatprep.subr.bf16.mxu0 %v1423
    %1612 = vmatpush1.bf16.msra.mxu0 %v1422
    %1613 = vmatprep.subr.bf16.mxu0 %v1430
    %1614 = vmatpush1.bf16.msra.mxu0 %v1429
    %1615 = vmatprep.subr.bf16.mxu0 %v1437
    %1616 = vmatpush1.bf16.msra.mxu0 %v1436
    %1617 = vmatprep.subr.bf16.mxu0 %v1444
    %1618 = vmatpush1.bf16.msra.mxu0 %v1443
    %1619 = vmatprep.subr.bf16.mxu0 %v1451
    %1620 = vmatpush1.bf16.msra.mxu0 %v1450
    %1621 = vmatprep.subr.bf16.mxu0 %v1458
    %1622 = vmatpush1.bf16.msra.mxu0 %v1457
    %1623 = vmatprep.subr.bf16.mxu0 %v1465
    %1624 = vmatpush1.bf16.msra.mxu0 %v1464
    %1625 = vmatprep.subr.bf16.mxu0 0
    %1626 = vmatpush1.bf16.msra.mxu0 0
    %1627 = vmatprep.subr.bf16.mxu0 0
    %1628 = vmatpush1.bf16.msra.mxu0 0
    %1629 = vmatprep.subr.bf16.mxu0 0
    %1630 = vmatpush1.bf16.msra.mxu0 0
    %1631 = vmatprep.subr.bf16.mxu0 0
    %1632 = vmatpush1.bf16.msra.mxu0 0
    %1633 = vmatprep.subr.bf16.mxu0 0
    %1634 = vmatpush1.bf16.msra.mxu0 0
    %1635 = vmatprep.subr.bf16.mxu0 0
    %1636 = vmatpush1.bf16.msra.mxu0 0
    %1637 = vmatprep.subr.bf16.mxu0 0
    %1638 = vmatpush1.bf16.msra.mxu0 0
    %1639 = vmatprep.subr.bf16.mxu0 0
    %1640 = vmatpush1.bf16.msra.mxu0 0
    %1641 = vmatprep.mubr.bf16.mxu0 0
    %1642 = vmatmul.mubr.bf16.gmra.mrb[0].mxu0 %v1233
    %v1643 = vpop.f32.mrb[0].mxu0
    %v1644 = vadd.f32 0.0, %v1643
    %v1645 = vpop.f32.mrb[0].mxu0
    %v1646 = vadd.f32 0.0, %v1645
    %v1647 = vpop.f32.mrb[0].mxu0
    %v1648 = vadd.f32 0.0, %v1647
    %v1649 = vpop.f32.mrb[0].mxu0
    %v1650 = vadd.f32 0.0, %v1649
    %1651 = vdwg.mxu0
    %1652 = vmatprep.subr.bf16.mxu0 0
    %1653 = vmatpush1.bf16.msra.mxu0 %v1417
    %1654 = vmatprep.subr.bf16.mxu0 0
    %1655 = vmatpush1.bf16.msra.mxu0 %v1424
    %1656 = vmatprep.subr.bf16.mxu0 0
    %1657 = vmatpush1.bf16.msra.mxu0 %v1431
    %1658 = vmatprep.subr.bf16.mxu0 0
    %1659 = vmatpush1.bf16.msra.mxu0 %v1438
    %1660 = vmatprep.subr.bf16.mxu0 0
    %1661 = vmatpush1.bf16.msra.mxu0 %v1445
    %1662 = vmatprep.subr.bf16.mxu0 0
    %1663 = vmatpush1.bf16.msra.mxu0 %v1452
    %1664 = vmatprep.subr.bf16.mxu0 0
    %1665 = vmatpush1.bf16.msra.mxu0 %v1459
    %1666 = vmatprep.subr.bf16.mxu0 0
    %1667 = vmatpush1.bf16.msra.mxu0 %v1466
    %1668 = vmatprep.subr.bf16.mxu0 0
    %1669 = vmatpush1.bf16.msra.mxu0 0
    %1670 = vmatprep.subr.bf16.mxu0 0
    %1671 = vmatpush1.bf16.msra.mxu0 0
    %1672 = vmatprep.subr.bf16.mxu0 0
    %1673 = vmatpush1.bf16.msra.mxu0 0
    %1674 = vmatprep.subr.bf16.mxu0 0
    %1675 = vmatpush1.bf16.msra.mxu0 0
    %1676 = vmatprep.subr.bf16.mxu0 0
    %1677 = vmatpush1.bf16.msra.mxu0 0
    %1678 = vmatprep.subr.bf16.mxu0 0
    %1679 = vmatpush1.bf16.msra.mxu0 0
    %1680 = vmatprep.subr.bf16.mxu0 0
    %1681 = vmatpush1.bf16.msra.mxu0 0
    %1682 = vmatprep.subr.bf16.mxu0 0
    %1683 = vmatpush1.bf16.msra.mxu0 0
    %1684 = vmatprep.mubr.bf16.mxu0 0
    %1685 = vmatmul.mubr.bf16.gmra.mrb[0].mxu0 %v1233
    %v1686 = vpop.f32.mrb[0].mxu0
    %v1687 = vadd.f32 0.0, %v1686
    %v1688 = vpop.f32.mrb[0].mxu0
    %v1689 = vpop.f32.mrb[0].mxu0
    %v1690 = vadd.f32 0.0, %v1689
    %v1691 = vpop.f32.mrb[0].mxu0
    %1692 = vdwg.mxu0
    %v1693 = vadd.f32 %v1147, %v1558
    %v1694 = vadd.f32 %v1148, %v1560
    %v1695 = vadd.f32 %v1149, %v1601
    %v1696 = vadd.f32 %v1150, %v1603
    %v1697 = vadd.f32 %v1151, %v1644
    %v1698 = vadd.f32 %v1152, %v1646
    %v1699 = vadd.f32 %v1153, %v1687
    %v1700 = vadd.f32 %v1154, %v1562
    %v1701 = vadd.f32 %v1155, %v1564
    %v1702 = vadd.f32 %v1156, %v1605
    %v1703 = vadd.f32 %v1157, %v1607
    %v1704 = vadd.f32 %v1158, %v1648
    %v1705 = vadd.f32 %v1159, %v1650
    %v1706 = vadd.f32 %v1160, %v1690
    %v1707 = vld [vmem:[%s3] sm:$0xff]
    %v1708 = vld [vmem:[%s3 + $0x8] sm:$0xff]
    %v1709 = vld [vmem:[%s3 + $0x10] sm:$0xff]
    %v1710 = vld [vmem:[%s3 + $0x18] sm:$0xff]
    %v1711 = vld [vmem:[%s3 + $0x20] sm:$0xff]
    %v1712 = vld [vmem:[%s3 + $0x28] sm:$0xff]
    %v1713 = vld [vmem:[%s3 + $0x30] sm:$0xff]
    %v1714 = vld [vmem:[%s3 + $0x38] sm:$0xff]
    %v1715 = vld [vmem:[%s3 + $0x40] sm:$0xff]
    %v1716 = vld [vmem:[%s3 + $0x48] sm:$0xff]
    %v1717 = vld [vmem:[%s3 + $0x50] sm:$0xff]
    %v1718 = vld [vmem:[%s3 + $0x58] sm:$0xff]
    %v1719 = vld [vmem:[%s3 + $0x60] sm:$0xff]
    %v1720 = vld [vmem:[%s3 + $0x68] sm:$0xff]
    %v1721 = vadd.f32 %v1693, %v1707
    %v1722 = vadd.f32 %v1694, %v1708
    %v1723 = vadd.f32 %v1695, %v1709
    %v1724 = vadd.f32 %v1696, %v1710
    %v1725 = vadd.f32 %v1697, %v1711
    %v1726 = vadd.f32 %v1698, %v1712
    %v1727 = vadd.f32 %v1699, %v1713
    %v1728 = vadd.f32 %v1700, %v1714
    %v1729 = vadd.f32 %v1701, %v1715
    %v1730 = vadd.f32 %v1702, %v1716
    %v1731 = vadd.f32 %v1703, %v1717
    %v1732 = vadd.f32 %v1704, %v1718
    %v1733 = vadd.f32 %v1705, %v1719
    %v1734 = vadd.f32 %v1706, %v1720
    %s1735 = sld [smem:[#allocation2]]
    %v1736 = vstv %s1735
    %v1737 = vmul.f32 %v1736, %v1721
    %v1738 = vmul.f32 %v1736, %v1722
    %v1739 = vmul.f32 %v1736, %v1723
    %v1740 = vmul.f32 %v1736, %v1724
    %v1741 = vmul.f32 %v1736, %v1725
    %v1742 = vmul.f32 %v1736, %v1726
    %v1743 = vmul.f32 %v1736, %v1727
    %v1744 = vmul.f32 %v1736, %v1728
    %v1745 = vmul.f32 %v1736, %v1729
    %v1746 = vmul.f32 %v1736, %v1730
    %v1747 = vmul.f32 %v1736, %v1731
    %v1748 = vmul.f32 %v1736, %v1732
    %v1749 = vmul.f32 %v1736, %v1733
    %v1750 = vmul.f32 %v1736, %v1734
    %s1751 = sld [smem:[#allocation2 + $0x1]]
    %v1752 = vstv %s1751
    %v1753 = vadd.f32 %v1737, %v1752
    %v1754 = vadd.f32 %v1738, %v1752
    %v1755 = vadd.f32 %v1739, %v1752
    %v1756 = vadd.f32 %v1740, %v1752
    %v1757 = vadd.f32 %v1741, %v1752
    %v1758 = vadd.f32 %v1742, %v1752
    %v1759 = vadd.f32 %v1743, %v1752
    %v1760 = vadd.f32 %v1744, %v1752
    %v1761 = vadd.f32 %v1745, %v1752
    %v1762 = vadd.f32 %v1746, %v1752
    %v1763 = vadd.f32 %v1747, %v1752
    %v1764 = vadd.f32 %v1748, %v1752
    %v1765 = vadd.f32 %v1749, %v1752
    %v1766 = vadd.f32 %v1750, %v1752
    %v1767 = vxor.u32 %v1753, 2147483648
    %v1768 = vxor.u32 %v1754, 2147483648
    %v1769 = vxor.u32 %v1755, 2147483648
    %v1770 = vxor.u32 %v1756, 2147483648
    %v1771 = vxor.u32 %v1757, 2147483648
    %v1772 = vxor.u32 %v1758, 2147483648
    %v1773 = vxor.u32 %v1759, 2147483648
    %v1774 = vxor.u32 %v1760, 2147483648
    %v1775 = vxor.u32 %v1761, 2147483648
    %v1776 = vxor.u32 %v1762, 2147483648
    %v1777 = vxor.u32 %v1763, 2147483648
    %v1778 = vxor.u32 %v1764, 2147483648
    %v1779 = vxor.u32 %v1765, 2147483648
    %v1780 = vxor.u32 %v1766, 2147483648
    %v1781 = vmul.f32 %v1767, 1.442695
    %v1782 = vpow.pop %v1781
    %v1783 = vmul.f32 %v1768, 1.442695
    %v1784 = vpow.pop %v1783
    %v1785 = vmul.f32 %v1769, 1.442695
    %v1786 = vpow.pop %v1785
    %v1787 = vmul.f32 %v1770, 1.442695
    %v1788 = vpow.pop %v1787
    %v1789 = vmul.f32 %v1771, 1.442695
    %v1790 = vpow.pop %v1789
    %v1791 = vmul.f32 %v1772, 1.442695
    %v1792 = vpow.pop %v1791
    %v1793 = vmul.f32 %v1773, 1.442695
    %v1794 = vpow.pop %v1793
    %v1795 = vmul.f32 %v1774, 1.442695
    %v1796 = vpow.pop %v1795
    %v1797 = vmul.f32 %v1775, 1.442695
    %v1798 = vpow.pop %v1797
    %v1799 = vmul.f32 %v1776, 1.442695
    %v1800 = vpow.pop %v1799
    %v1801 = vmul.f32 %v1777, 1.442695
    %v1802 = vpow.pop %v1801
    %v1803 = vmul.f32 %v1778, 1.442695
    %v1804 = vpow.pop %v1803
    %v1805 = vmul.f32 %v1779, 1.442695
    %v1806 = vpow.pop %v1805
    %v1807 = vmul.f32 %v1780, 1.442695
    %v1808 = vpow.pop %v1807
    %v1809 = vadd.f32 %v1782, 1.0
    %v1810 = vadd.f32 %v1784, 1.0
    %v1811 = vadd.f32 %v1786, 1.0
    %v1812 = vadd.f32 %v1788, 1.0
    %v1813 = vadd.f32 %v1790, 1.0
    %v1814 = vadd.f32 %v1792, 1.0
    %v1815 = vadd.f32 %v1794, 1.0
    %v1816 = vadd.f32 %v1796, 1.0
    %v1817 = vadd.f32 %v1798, 1.0
    %v1818 = vadd.f32 %v1800, 1.0
    %v1819 = vadd.f32 %v1802, 1.0
    %v1820 = vadd.f32 %v1804, 1.0
    %v1821 = vadd.f32 %v1806, 1.0
    %v1822 = vadd.f32 %v1808, 1.0
    %v1823 = vrcp.pop %v1809
    %v1824 = vmul.f32 1.0, %v1823
    %v1825 = vrcp.pop %v1810
    %v1826 = vmul.f32 1.0, %v1825
    %v1827 = vrcp.pop %v1811
    %v1828 = vmul.f32 1.0, %v1827
    %v1829 = vrcp.pop %v1812
    %v1830 = vmul.f32 1.0, %v1829
    %v1831 = vrcp.pop %v1813
    %v1832 = vmul.f32 1.0, %v1831
    %v1833 = vrcp.pop %v1814
    %v1834 = vmul.f32 1.0, %v1833
    %v1835 = vrcp.pop %v1815
    %v1836 = vmul.f32 1.0, %v1835
    %v1837 = vrcp.pop %v1816
    %v1838 = vmul.f32 1.0, %v1837
    %v1839 = vrcp.pop %v1817
    %v1840 = vmul.f32 1.0, %v1839
    %v1841 = vrcp.pop %v1818
    %v1842 = vmul.f32 1.0, %v1841
    %v1843 = vrcp.pop %v1819
    %v1844 = vmul.f32 1.0, %v1843
    %v1845 = vrcp.pop %v1820
    %v1846 = vmul.f32 1.0, %v1845
    %v1847 = vrcp.pop %v1821
    %v1848 = vmul.f32 1.0, %v1847
    %v1849 = vrcp.pop %v1822
    %v1850 = vmul.f32 1.0, %v1849
    %s1851 = sld [smem:[#allocation2 + $0x2]]
    %v1852 = vstv %s1851
    %v1853 = vmul.f32 %v1852, %v1721
    %v1854 = vmul.f32 %v1852, %v1722
    %v1855 = vmul.f32 %v1852, %v1723
    %v1856 = vmul.f32 %v1852, %v1724
    %v1857 = vmul.f32 %v1852, %v1725
    %v1858 = vmul.f32 %v1852, %v1726
    %v1859 = vmul.f32 %v1852, %v1727
    %v1860 = vmul.f32 %v1852, %v1728
    %v1861 = vmul.f32 %v1852, %v1729
    %v1862 = vmul.f32 %v1852, %v1730
    %v1863 = vmul.f32 %v1852, %v1731
    %v1864 = vmul.f32 %v1852, %v1732
    %v1865 = vmul.f32 %v1852, %v1733
    %v1866 = vmul.f32 %v1852, %v1734
    %s1867 = sld [smem:[#allocation2 + $0x3]]
    %v1868 = vstv %s1867
    %v1869 = vadd.f32 %v1853, %v1868
    %v1870 = vadd.f32 %v1854, %v1868
    %v1871 = vadd.f32 %v1855, %v1868
    %v1872 = vadd.f32 %v1856, %v1868
    %v1873 = vadd.f32 %v1857, %v1868
    %v1874 = vadd.f32 %v1858, %v1868
    %v1875 = vadd.f32 %v1859, %v1868
    %v1876 = vadd.f32 %v1860, %v1868
    %v1877 = vadd.f32 %v1861, %v1868
    %v1878 = vadd.f32 %v1862, %v1868
    %v1879 = vadd.f32 %v1863, %v1868
    %v1880 = vadd.f32 %v1864, %v1868
    %v1881 = vadd.f32 %v1865, %v1868
    %v1882 = vadd.f32 %v1866, %v1868
    %v1883 = vtanh.pop %v1869
    %v1884 = vtanh.pop %v1870
    %v1885 = vtanh.pop %v1871
    %v1886 = vtanh.pop %v1872
    %v1887 = vtanh.pop %v1873
    %v1888 = vtanh.pop %v1874
    %v1889 = vtanh.pop %v1875
    %v1890 = vtanh.pop %v1876
    %v1891 = vtanh.pop %v1877
    %v1892 = vtanh.pop %v1878
    %v1893 = vtanh.pop %v1879
    %v1894 = vtanh.pop %v1880
    %v1895 = vtanh.pop %v1881
    %v1896 = vtanh.pop %v1882
    %s1897 = sld [smem:[#allocation2 + $0x4]]
    %v1898 = vmul.f32 %v1824, %v1883
    %v1899 = vmul.f32 %v1826, %v1884
    %v1900 = vmul.f32 %v1828, %v1885
    %v1901 = vmul.f32 %v1830, %v1886
    %v1902 = vmul.f32 %v1832, %v1887
    %v1903 = vmul.f32 %v1834, %v1888
    %v1904 = vmul.f32 %v1836, %v1889
    %v1905 = vmul.f32 %v1838, %v1890
    %v1906 = vmul.f32 %v1840, %v1891
    %v1907 = vmul.f32 %v1842, %v1892
    %v1908 = vmul.f32 %v1844, %v1893
    %v1909 = vmul.f32 %v1846, %v1894
    %v1910 = vmul.f32 %v1848, %v1895
    %v1911 = vmul.f32 %v1850, %v1896
    %v1912 = vstv %s1897
    %v1913 = vmul.f32 %v1912, %v1898
    %v1914 = vmul.f32 %v1912, %v1899
    %v1915 = vmul.f32 %v1912, %v1900
    %v1916 = vmul.f32 %v1912, %v1901
    %v1917 = vmul.f32 %v1912, %v1902
    %v1918 = vmul.f32 %v1912, %v1903
    %v1919 = vmul.f32 %v1912, %v1904
    %v1920 = vmul.f32 %v1912, %v1905
    %v1921 = vmul.f32 %v1912, %v1906
    %v1922 = vmul.f32 %v1912, %v1907
    %v1923 = vmul.f32 %v1912, %v1908
    %v1924 = vmul.f32 %v1912, %v1909
    %v1925 = vmul.f32 %v1912, %v1910
    %v1926 = vmul.f32 %v1912, %v1911
    %s1927 = sld [smem:[#allocation2 + $0x5]]
    %v1928 = vstv %s1927
    %v1929 = vadd.f32 %v1913, %v1928
    %v1930 = vadd.f32 %v1914, %v1928
    %v1931 = vadd.f32 %v1915, %v1928
    %v1932 = vadd.f32 %v1916, %v1928
    %v1933 = vadd.f32 %v1917, %v1928
    %v1934 = vadd.f32 %v1918, %v1928
    %v1935 = vadd.f32 %v1919, %v1928
    %v1936 = vadd.f32 %v1920, %v1928
    %v1937 = vadd.f32 %v1921, %v1928
    %v1938 = vadd.f32 %v1922, %v1928
    %v1939 = vadd.f32 %v1923, %v1928
    %v1940 = vadd.f32 %v1924, %v1928
    %v1941 = vadd.f32 %v1925, %v1928
    %v1942 = vadd.f32 %v1926, %v1928
    %v1943 = vxor.u32 %v1929, 2147483648
    %v1944 = vxor.u32 %v1930, 2147483648
    %v1945 = vxor.u32 %v1931, 2147483648
    %v1946 = vxor.u32 %v1932, 2147483648
    %v1947 = vxor.u32 %v1933, 2147483648
    %v1948 = vxor.u32 %v1934, 2147483648
    %v1949 = vxor.u32 %v1935, 2147483648
    %v1950 = vxor.u32 %v1936, 2147483648
    %v1951 = vxor.u32 %v1937, 2147483648
    %v1952 = vxor.u32 %v1938, 2147483648
    %v1953 = vxor.u32 %v1939, 2147483648
    %v1954 = vxor.u32 %v1940, 2147483648
    %v1955 = vxor.u32 %v1941, 2147483648
    %v1956 = vxor.u32 %v1942, 2147483648
    %v1957 = vmul.f32 %v1943, 1.442695
    %v1958 = vpow.pop %v1957
    %v1959 = vmul.f32 %v1944, 1.442695
    %v1960 = vpow.pop %v1959
    %v1961 = vmul.f32 %v1945, 1.442695
    %v1962 = vpow.pop %v1961
    %v1963 = vmul.f32 %v1946, 1.442695
    %v1964 = vpow.pop %v1963
    %v1965 = vmul.f32 %v1947, 1.442695
    %v1966 = vpow.pop %v1965
    %v1967 = vmul.f32 %v1948, 1.442695
    %v1968 = vpow.pop %v1967
    %v1969 = vmul.f32 %v1949, 1.442695
    %v1970 = vpow.pop %v1969
    %v1971 = vmul.f32 %v1950, 1.442695
    %v1972 = vpow.pop %v1971
    %v1973 = vmul.f32 %v1951, 1.442695
    %v1974 = vpow.pop %v1973
    %v1975 = vmul.f32 %v1952, 1.442695
    %v1976 = vpow.pop %v1975
    %v1977 = vmul.f32 %v1953, 1.442695
    %v1978 = vpow.pop %v1977
    %v1979 = vmul.f32 %v1954, 1.442695
    %v1980 = vpow.pop %v1979
    %v1981 = vmul.f32 %v1955, 1.442695
    %v1982 = vpow.pop %v1981
    %v1983 = vmul.f32 %v1956, 1.442695
    %v1984 = vpow.pop %v1983
    %v1985 = vadd.f32 %v1958, 1.0
    %v1986 = vadd.f32 %v1960, 1.0
    %v1987 = vadd.f32 %v1962, 1.0
    %v1988 = vadd.f32 %v1964, 1.0
    %v1989 = vadd.f32 %v1966, 1.0
    %v1990 = vadd.f32 %v1968, 1.0
    %v1991 = vadd.f32 %v1970, 1.0
    %v1992 = vadd.f32 %v1972, 1.0
    %v1993 = vadd.f32 %v1974, 1.0
    %v1994 = vadd.f32 %v1976, 1.0
    %v1995 = vadd.f32 %v1978, 1.0
    %v1996 = vadd.f32 %v1980, 1.0
    %v1997 = vadd.f32 %v1982, 1.0
    %v1998 = vadd.f32 %v1984, 1.0
    %v1999 = vrcp.pop %v1985
    %v2000 = vmul.f32 1.0, %v1999
    %v2001 = vrcp.pop %v1986
    %v2002 = vmul.f32 1.0, %v2001
    %v2003 = vrcp.pop %v1987
    %v2004 = vmul.f32 1.0, %v2003
    %v2005 = vrcp.pop %v1988
    %v2006 = vmul.f32 1.0, %v2005
    %v2007 = vrcp.pop %v1989
    %v2008 = vmul.f32 1.0, %v2007
    %v2009 = vrcp.pop %v1990
    %v2010 = vmul.f32 1.0, %v2009
    %v2011 = vrcp.pop %v1991
    %v2012 = vmul.f32 1.0, %v2011
    %v2013 = vrcp.pop %v1992
    %v2014 = vmul.f32 1.0, %v2013
    %v2015 = vrcp.pop %v1993
    %v2016 = vmul.f32 1.0, %v2015
    %v2017 = vrcp.pop %v1994
    %v2018 = vmul.f32 1.0, %v2017
    %v2019 = vrcp.pop %v1995
    %v2020 = vmul.f32 1.0, %v2019
    %v2021 = vrcp.pop %v1996
    %v2022 = vmul.f32 1.0, %v2021
    %v2023 = vrcp.pop %v1997
    %v2024 = vmul.f32 1.0, %v2023
    %v2025 = vrcp.pop %v1998
    %v2026 = vmul.f32 1.0, %v2025
    %v2027 = vmul.f32 %v1693, %v2000
    %v2028 = vmul.f32 %v1694, %v2002
    %v2029 = vmul.f32 %v1695, %v2004
    %v2030 = vmul.f32 %v1696, %v2006
    %v2031 = vmul.f32 %v1697, %v2008
    %v2032 = vmul.f32 %v1698, %v2010
    %v2033 = vmul.f32 %v1699, %v2012
    %v2034 = vmul.f32 %v1700, %v2014
    %v2035 = vmul.f32 %v1701, %v2016
    %v2036 = vmul.f32 %v1702, %v2018
    %v2037 = vmul.f32 %v1703, %v2020
    %v2038 = vmul.f32 %v1704, %v2022
    %v2039 = vmul.f32 %v1705, %v2024
    %v2040 = vmul.f32 %v1706, %v2026
    %v2041 = vadd.f32 %v2027, %v1707
    %v2042 = vadd.f32 %v2028, %v1708
    %v2043 = vadd.f32 %v2029, %v1709
    %v2044 = vadd.f32 %v2030, %v1710
    %v2045 = vadd.f32 %v2031, %v1711
    %v2046 = vadd.f32 %v2032, %v1712
    %v2047 = vadd.f32 %v2033, %v1713
    %v2048 = vadd.f32 %v2034, %v1714
    %v2049 = vadd.f32 %v2035, %v1715
    %v2050 = vadd.f32 %v2036, %v1716
    %v2051 = vadd.f32 %v2037, %v1717
    %v2052 = vadd.f32 %v2038, %v1718
    %v2053 = vadd.f32 %v2039, %v1719
    %v2054 = vadd.f32 %v2040, %v1720
    %2055 = vst [vmem:[%s5] sm:$0xff] %v2041
    %2056 = vst [vmem:[%s5 + $0x8] sm:$0xff] %v2042
    %2057 = vst [vmem:[%s5 + $0x10] sm:$0xff] %v2043
    %2058 = vst [vmem:[%s5 + $0x18] sm:$0xff] %v2044
    %2059 = vst [vmem:[%s5 + $0x20] sm:$0xff] %v2045
    %2060 = vst [vmem:[%s5 + $0x28] sm:$0xff] %v2046
    %2061 = vst [vmem:[%s5 + $0x30] sm:$0xff] %v2047
    %2062 = vst [vmem:[%s5 + $0x38] sm:$0xff] %v2048
    %2063 = vst [vmem:[%s5 + $0x40] sm:$0xff] %v2049
    %2064 = vst [vmem:[%s5 + $0x48] sm:$0xff] %v2050
    %2065 = vst [vmem:[%s5 + $0x50] sm:$0xff] %v2051
    %2066 = vst [vmem:[%s5 + $0x58] sm:$0xff] %v2052
    %2067 = vst [vmem:[%s5 + $0x60] sm:$0xff] %v2053
    %2068 = vst [vmem:[%s5 + $0x68] sm:$0xff] %v2054
    // Predicated region
    $region26: #{generator_forward.19} parent=1 // pred_check
      _
    $region27: #{generator_forward.19} parent=1 // pred_check_branch
      %2070 = sbr.rel (0) target = $region29
    $region28: #{generator_forward.19} parent=1 // pred_region
      _
    $region29: #{generator_forward.19} parent=1 // pred_fallthru
      _
    // Predicated region
    $region30: #{generator_forward.19} parent=1 // pred_check
      _
    $region31: #{generator_forward.19} parent=1 // pred_check_branch
      %2072 = sbr.rel (0) target = $region33
    $region32: #{generator_forward.19} parent=1 // pred_region
      _
    $region33: #{generator_forward.19} parent=1 // pred_fallthru
      _
    %2073 = vsyncpa [#allocation3], 1

</llo_original>
